<compile_context>
chip_gen: v7x
topology: tpu7x:2x2x1
jax: 0.10.0
libtpu: 0.0.40
codegen_flags: <defaults>
</compile_context>

<pallas_src>
import collections
import functools

import numpy as np
import jax
import jax.numpy as jnp
from jax.experimental import pallas as pl
from jax.experimental.pallas import tpu as pltpu

Scene = collections.namedtuple("Scene", ["position", "number", "type", "size", "color"])

# operand panel indices per answer position (x panels first, then ctx panels)
_OPERAND_IDX = [[0, 1, 3, 4, 5, 6, 7],
                [3, 4, 0, 1, 2, 6, 7],
                [6, 7, 0, 1, 2, 3, 4]]


# ---------------------------------------------------------------------------
# Pallas kernel: one single step does all attributes / rules / positions / terms
# ---------------------------------------------------------------------------
def _reasoner_kernel(prob_ref, dictcat_ref, wblk_ref, idft_ref,
                     vsa_ref, rules_ref, four_ref, sel_ref,
                     *, d, num_terms, term_rows, m_rows):
    # prob_ref:    (A*B*P, V)           stacked attribute probabilities
    # dictcat_ref: (V, 3*d)             [dict | dict@C | dict@(-S)]  (time + Fourier re/im)
    # wblk_ref:    (T*A*B*G, A*B*P+8)   selection weights, block-diag over (A,B); the
    #                                   identity-operand weight sits in the first of the
    #                                   8 extra columns (rest are zero).
    # idft_ref:    (2*d, d)             vstack([cos/L, -sin/L])  fused inverse block DFT
    # vsa_ref:     (A*B*P, d)           VSA scene (output)
    # rules_ref:   (A*B*G, d)           rule outputs, rows = ((a*B + b)*G) + (r*3 + pos)
    # four_ref:    (A*B*P+8, 2*d)       scratch: Fourier re|im + identity-operand rows
    # sel_ref:     (T*A*B*G, 2*d)       scratch: selected operands per term

    # 1) dictionary mixture + forward blockwise DFT in a single matmul.
    mixed = jnp.dot(prob_ref[...], dictcat_ref[...],
                    preferred_element_type=jnp.float32)          # (M, 3d)
    vsa_ref[...] = mixed[:, :d]

    # 2) stage the Fourier slab in VMEM scratch with appended identity rows
    #    (DFT(binding identity) == ones + 0i) so the bias-add happens inside the matmul.
    pad_rows = four_ref.shape[0] - m_rows
    four_ref[0:m_rows, :] = mixed[:, d:3 * d]
    four_ref[m_rows:, :] = jnp.concatenate(
        [jnp.ones((pad_rows, d), jnp.float32),
         jnp.zeros((pad_rows, d), jnp.float32)], axis=-1)

    # 3) soft operand selection for all rules x positions x terms x attrs x batch at
    #    once, staged through a VMEM scratch to bound vreg liveness in the bind tree.
    sel_ref[...] = jnp.dot(wblk_ref[...], four_ref[...],
                           preferred_element_type=jnp.float32)   # (T*rows, 2d)

    def term(t):
        r0 = t * term_rows
        return (sel_ref[r0:r0 + term_rows, 0:d],
                sel_ref[r0:r0 + term_rows, d:2 * d])

    def tree_bind(parts):
        # balanced tree of blockwise circular convolutions (complex products).
        while len(parts) > 1:
            nxt = []
            for i in range(0, len(parts) - 1, 2):
                ar, ai = parts[i]
                br, bi = parts[i + 1]
                nxt.append((ar * br - ai * bi, ar * bi + ai * br))
            if len(parts) % 2:
                nxt.append(parts[-1])
            parts = nxt
        return parts[0]

    half = num_terms // 2
    nr, ni = tree_bind([term(t) for t in range(half)])            # numerator chain
    dr, di = tree_bind([term(t) for t in range(half, num_terms)]) # denominator chain

    # unbind numerator by denominator (blockwise circular correlation).
    rr = nr * dr + ni * di
    ri = ni * dr - nr * di

    # fused inverse blockwise DFT (one MXU matmul; sign and 1/L folded into constants).
    rules_ref[...] = jnp.dot(jnp.concatenate([rr, ri], axis=-1), idft_ref[...],
                             preferred_element_type=jnp.float32)


# ---------------------------------------------------------------------------
# Wrapper-side precomputation (tiny, XLA / numpy constants)
# ---------------------------------------------------------------------------
def _dft_blockdiag(k, L):
    n = np.arange(L, dtype=np.float64)
    ang = 2.0 * np.pi * np.outer(n, n) / L
    cos_bd = np.kron(np.eye(k), np.cos(ang)).astype(np.float32)   # (d, d)
    sin_bd = np.kron(np.eye(k), np.sin(ang)).astype(np.float32)   # (d, d)
    return jnp.asarray(cos_bd), jnp.asarray(sin_bd)


def _selection_weights(logits, num_attr, batch, num_panels, group, n_extra_cols):
    """Fold softmax, per-position operand gather, identity operand and the
    (attribute, batch) block structure into one (T*A*B*G, A*B*P + extra) matrix."""
    R, T, n_ops = logits.shape
    assert n_ops == 8, "ExtendedGeneralLearnableFormula: 2 x + 5 ctx + 1 identity"
    w = jax.nn.softmax(logits, axis=-1)                           # (R, T, 8)

    sel = np.zeros((3, 7, num_panels), np.float32)                # operand -> panel
    for p, row in enumerate(_OPERAND_IDX):
        for o, q in enumerate(row):
            sel[p, o, q] = 1.0
    wp = jnp.einsum("rto,poq->trpq", w[..., :7], jnp.asarray(sel))  # (T, R, 3, P)
    wg = wp.reshape(T, R * 3, num_panels)
    wg = jnp.pad(wg, ((0, 0), (0, group - R * 3), (0, 0)))          # (T, G, P)

    ab = num_attr * batch
    eye_ab = jnp.eye(ab, dtype=jnp.float32)
    wblk = jnp.einsum("tgp,mn->tmgnp", wg, eye_ab)                  # block-diag over (A,B)
    wblk = wblk.reshape(T * ab * group, ab * num_panels)

    # identity-operand weight -> first extra column (matches the ones-row in four_ref)
    bias_tg = jnp.broadcast_to(w[..., 7].T[:, :, None], (T, R, 3)).reshape(T, R * 3)
    bias_tg = jnp.pad(bias_tg, ((0, 0), (0, group - R * 3)))        # (T, G)
    bias_col = jnp.broadcast_to(bias_tg[:, None, :], (T, ab, group))
    bias_col = bias_col.reshape(T * ab * group, 1)
    zero_cols = jnp.zeros((T * ab * group, n_extra_cols - 1), jnp.float32)
    return jnp.concatenate([wblk, bias_col, zero_cols], axis=1)


def rule_level_reasoner_forward(scene_prob, dictionary, logits, distribute=False):
    """Mirrors RuleLevelReasoner.forward (num_panels=3 -> test_indeces=[2, 5])."""
    V, k, L = dictionary.shape
    d = k * L
    R, T, _ = logits.shape

    active = [a for a in Scene._fields
              if not (a in ("position", "number") and not distribute)]
    probs = [getattr(scene_prob, a) for a in active]
    A = len(active)
    B, P, _ = probs[0].shape

    prob_stack = jnp.stack(probs, axis=0).reshape(A * B * P, V).astype(jnp.float32)

    dict_flat = dictionary.reshape(V, d).astype(jnp.float32)
    cos_bd, sin_bd = _dft_blockdiag(k, L)
    dict_cat = jnp.concatenate(
        [dict_flat, dict_flat @ cos_bd, dict_flat @ (-sin_bd)], axis=1)   # (V, 3d)
    idft = jnp.concatenate([cos_bd / L, -sin_bd / L], axis=0)             # (2d, d)

    G = -(-(3 * R) // 8) * 8          # pad rules*positions rows to a sublane multiple
    M = A * B * P                     # stacked matmul M dimension
    PAD = 8                           # identity-operand rows appended to the Fourier slab
    ROWS = A * B * G                  # rows per term / of the rules output

    wblk = _selection_weights(logits, A, B, P, G, PAD)

    kernel = functools.partial(_reasoner_kernel, d=d, num_terms=T,
                               term_rows=ROWS, m_rows=M)
    vsa_flat, rules_flat = pl.pallas_call(
        kernel,
        out_shape=(jax.ShapeDtypeStruct((M, d), jnp.float32),
                   jax.ShapeDtypeStruct((ROWS, d), jnp.float32)),
        grid=(1,),                     # single step: no per-step overhead, no core imbalance
        in_specs=[
            pl.BlockSpec((M, V), lambda i: (0, 0)),
            pl.BlockSpec((V, 3 * d), lambda i: (0, 0)),
            pl.BlockSpec((T * ROWS, M + PAD), lambda i: (0, 0)),
            pl.BlockSpec((2 * d, d), lambda i: (0, 0)),
        ],
        out_specs=(
            pl.BlockSpec((M, d), lambda i: (0, 0)),
            pl.BlockSpec((ROWS, d), lambda i: (0, 0)),
        ),
        scratch_shapes=[
            pltpu.VMEM((M + PAD, 2 * d), jnp.float32),    # Fourier slab + identity rows
            pltpu.VMEM((T * ROWS, 2 * d), jnp.float32),   # per-term selected operands
        ],
    )(prob_stack, dict_cat, wblk, idft)

    # free XLA reshapes / slices: no extra memory pass of consequence
    vsa = vsa_flat.reshape(A, B, P, d)
    rules = rules_flat.reshape(A, B, G, d)[:, :, :3 * R, :].reshape(A, B, R, 3, d)

    test_idx = jnp.array([2, 5], dtype=jnp.int32)     # num_panels == 3
    output, tests, candidates = {}, {}, {}
    i = 0
    for attr in Scene._fields:
        if attr in active:
            output[attr] = rules[i]
            tests[attr] = vsa[i][:, test_idx]
            candidates[attr] = vsa[i][:, -8:]
            i += 1
        else:
            output[attr] = tests[attr] = candidates[attr] = None
    return Scene(**output), Scene(**candidates), Scene(**tests)


# ---------------------------------------------------------------------------
if __name__ == "__main__":
    B, P, V = 2, 16, 8          # batch, panels (8 context + 8 candidates), dict size
    K, L = 4, 32                # k blocks of length L -> d = 128
    NUM_RULES, NUM_TERMS = 5, 12
    N_OPS = 2 + 5 + 1           # examples_len + context_len + identity

    key = jax.random.PRNGKey(0)
    k_dict, k_w, k_scene = jax.random.split(key, 3)

    dictionary = jax.random.normal(k_dict, (V, K, L), dtype=jnp.float32)
    rule_logits = jax.random.normal(k_w, (NUM_RULES, NUM_TERMS, N_OPS), dtype=jnp.float32)

    attr_keys = jax.random.split(k_scene, len(Scene._fields))
    scene_prob = Scene(**{
        name: jax.nn.softmax(jax.random.normal(ak, (B, P, V), dtype=jnp.float32), axis=-1)
        for name, ak in zip(Scene._fields, attr_keys)
    })

    output, candidates, tests = rule_level_reasoner_forward(
        scene_prob, dictionary, rule_logits, distribute=False)

    d = K * L
    for attr in ("type", "size", "color"):
        assert getattr(output, attr).shape == (B, NUM_RULES, 3, d)
        assert getattr(candidates, attr).shape == (B, 8, d)
        assert getattr(tests, attr).shape == (B, 2, d)
    assert output.position is None and output.number is None

    jax.block_until_ready(jax.tree_util.tree_leaves((output, candidates, tests)))
    print("KERNEL_OK")
</pallas_src>

<mosaic_0001>
module attributes {stable_mosaic.version = 11 : i64} {
  func.func @_reasoner_kernel(%arg0: i32, %arg1: memref<96x8xf32, #tpu.memory_space<vmem>>, %arg2: memref<8x384xf32, #tpu.memory_space<vmem>>, %arg3: memref<1152x104xf32, #tpu.memory_space<vmem>>, %arg4: memref<256x128xf32, #tpu.memory_space<vmem>>, %arg5: memref<96x128xf32, #tpu.memory_space<vmem>>, %arg6: memref<96x128xf32, #tpu.memory_space<vmem>>, %arg7: memref<104x256xf32, #tpu.memory_space<vmem>>, %arg8: memref<1152x256xf32, #tpu.memory_space<vmem>>) attributes {dimension_semantics = [#tpu.dimension_semantics<arbitrary>], iteration_bounds = array<i64: 1>, scalar_prefetch = 0 : i64, scratch_operands = 2 : i64, tpu.core_type = #tpu.core_type<tc>, window_params = [{pipeline_mode = #tpu.pipeline_mode<synchronous>, transform_indices = @transform_0, window_bounds = array<i64: 96, 8>}, {pipeline_mode = #tpu.pipeline_mode<synchronous>, transform_indices = @transform_1, window_bounds = array<i64: 8, 384>}, {pipeline_mode = #tpu.pipeline_mode<synchronous>, transform_indices = @transform_2, window_bounds = array<i64: 1152, 104>}, {pipeline_mode = #tpu.pipeline_mode<synchronous>, transform_indices = @transform_3, window_bounds = array<i64: 256, 128>}, {pipeline_mode = #tpu.pipeline_mode<synchronous>, transform_indices = @transform_4, window_bounds = array<i64: 96, 128>}, {pipeline_mode = #tpu.pipeline_mode<synchronous>, transform_indices = @transform_5, window_bounds = array<i64: 96, 128>}]} {
    %c0 = arith.constant 0 : index
    %c0_0 = arith.constant 0 : index
    %0 = vector.load %arg1[%c0, %c0_0] : memref<96x8xf32, #tpu.memory_space<vmem>>, vector<96x8xf32>
    %c0_1 = arith.constant 0 : index
    %c0_2 = arith.constant 0 : index
    %1 = vector.load %arg2[%c0_1, %c0_2] : memref<8x384xf32, #tpu.memory_space<vmem>>, vector<8x384xf32>
    %cst = arith.constant dense<0.000000e+00> : vector<96x384xf32>
    %2 = tpu.matmul %0, %1, %cst {dimension_numbers = #tpu.dot_dimension_numbers<[1], [0], [0], [1], [0, 0, 1, 1], [], []>} : vector<96x8xf32>, vector<8x384xf32>, vector<96x384xf32> -> vector<96x384xf32>
    %3 = vector.extract_strided_slice %2 {offsets = [0, 0], sizes = [96, 128], strides = [1, 1]} : vector<96x384xf32> to vector<96x128xf32>
    %c0_3 = arith.constant 0 : index
    %c0_4 = arith.constant 0 : index
    %4 = vector.load %arg5[%c0_3, %c0_4] : memref<96x128xf32, #tpu.memory_space<vmem>>, vector<96x128xf32>
    tpu.vector_store %arg5[%c0_3, %c0_4], %3 {strides = array<i32>} : memref<96x128xf32, #tpu.memory_space<vmem>>, vector<96x128xf32>,
    %5 = vector.extract_strided_slice %2 {offsets = [0, 128], sizes = [96, 256], strides = [1, 1]} : vector<96x384xf32> to vector<96x256xf32>
    %c0_5 = arith.constant 0 : index
    %c0_6 = arith.constant 0 : index
    %6 = vector.load %arg7[%c0_5, %c0_6] : memref<104x256xf32, #tpu.memory_space<vmem>>, vector<96x256xf32>
    tpu.vector_store %arg7[%c0_5, %c0_6], %5 {strides = array<i32>} : memref<104x256xf32, #tpu.memory_space<vmem>>, vector<96x256xf32>,
    %cst_7 = arith.constant 1.000000e+00 : f32
    %7 = vector.broadcast %cst_7 : f32 to vector<8x128xf32>
    %cst_8 = arith.constant 0.000000e+00 : f32
    %8 = vector.broadcast %cst_8 : f32 to vector<8x128xf32>
    %9 = tpu.concatenate %7, %8 in 1 : vector<8x128xf32>, vector<8x128xf32> -> vector<8x256xf32>
    %c96 = arith.constant 96 : index
    %c0_9 = arith.constant 0 : index
    %10 = vector.load %arg7[%c96, %c0_9] : memref<104x256xf32, #tpu.memory_space<vmem>>, vector<8x256xf32>
    tpu.vector_store %arg7[%c96, %c0_9], %9 {strides = array<i32>} : memref<104x256xf32, #tpu.memory_space<vmem>>, vector<8x256xf32>,
    %c0_10 = arith.constant 0 : index
    %c0_11 = arith.constant 0 : index
    %11 = vector.load %arg3[%c0_10, %c0_11] : memref<1152x104xf32, #tpu.memory_space<vmem>>, vector<1152x104xf32>
    %c0_12 = arith.constant 0 : index
    %c0_13 = arith.constant 0 : index
    %12 = vector.load %arg7[%c0_12, %c0_13] : memref<104x256xf32, #tpu.memory_space<vmem>>, vector<104x256xf32>
    %cst_14 = arith.constant dense<0.000000e+00> : vector<1152x256xf32>
    %13 = tpu.matmul %11, %12, %cst_14 {dimension_numbers = #tpu.dot_dimension_numbers<[1], [0], [0], [1], [0, 0, 1, 1], [], []>} : vector<1152x104xf32>, vector<104x256xf32>, vector<1152x256xf32> -> vector<1152x256xf32>
    %c0_15 = arith.constant 0 : index
    %c0_16 = arith.constant 0 : index
    %14 = vector.load %arg8[%c0_15, %c0_16] : memref<1152x256xf32, #tpu.memory_space<vmem>>, vector<1152x256xf32>
    tpu.vector_store %arg8[%c0_15, %c0_16], %13 {strides = array<i32>} : memref<1152x256xf32, #tpu.memory_space<vmem>>, vector<1152x256xf32>,
    %c0_17 = arith.constant 0 : index
    %c0_18 = arith.constant 0 : index
    %15 = vector.load %arg8[%c0_17, %c0_18] : memref<1152x256xf32, #tpu.memory_space<vmem>>, vector<96x128xf32>
    %c0_19 = arith.constant 0 : index
    %c128 = arith.constant 128 : index
    %16 = vector.load %arg8[%c0_19, %c128] : memref<1152x256xf32, #tpu.memory_space<vmem>>, vector<96x128xf32>
    %c96_20 = arith.constant 96 : index
    %c0_21 = arith.constant 0 : index
    %17 = vector.load %arg8[%c96_20, %c0_21] : memref<1152x256xf32, #tpu.memory_space<vmem>>, vector<96x128xf32>
    %c96_22 = arith.constant 96 : index
    %c128_23 = arith.constant 128 : index
    %18 = vector.load %arg8[%c96_22, %c128_23] : memref<1152x256xf32, #tpu.memory_space<vmem>>, vector<96x128xf32>
    %c192 = arith.constant 192 : index
    %c0_24 = arith.constant 0 : index
    %19 = vector.load %arg8[%c192, %c0_24] : memref<1152x256xf32, #tpu.memory_space<vmem>>, vector<96x128xf32>
    %c192_25 = arith.constant 192 : index
    %c128_26 = arith.constant 128 : index
    %20 = vector.load %arg8[%c192_25, %c128_26] : memref<1152x256xf32, #tpu.memory_space<vmem>>, vector<96x128xf32>
    %c288 = arith.constant 288 : index
    %c0_27 = arith.constant 0 : index
    %21 = vector.load %arg8[%c288, %c0_27] : memref<1152x256xf32, #tpu.memory_space<vmem>>, vector<96x128xf32>
    %c288_28 = arith.constant 288 : index
    %c128_29 = arith.constant 128 : index
    %22 = vector.load %arg8[%c288_28, %c128_29] : memref<1152x256xf32, #tpu.memory_space<vmem>>, vector<96x128xf32>
    %c384 = arith.constant 384 : index
    %c0_30 = arith.constant 0 : index
    %23 = vector.load %arg8[%c384, %c0_30] : memref<1152x256xf32, #tpu.memory_space<vmem>>, vector<96x128xf32>
    %c384_31 = arith.constant 384 : index
    %c128_32 = arith.constant 128 : index
    %24 = vector.load %arg8[%c384_31, %c128_32] : memref<1152x256xf32, #tpu.memory_space<vmem>>, vector<96x128xf32>
    %c480 = arith.constant 480 : index
    %c0_33 = arith.constant 0 : index
    %25 = vector.load %arg8[%c480, %c0_33] : memref<1152x256xf32, #tpu.memory_space<vmem>>, vector<96x128xf32>
    %c480_34 = arith.constant 480 : index
    %c128_35 = arith.constant 128 : index
    %26 = vector.load %arg8[%c480_34, %c128_35] : memref<1152x256xf32, #tpu.memory_space<vmem>>, vector<96x128xf32>
    %27 = arith.mulf %15, %17 : vector<96x128xf32>
    %28 = arith.mulf %16, %18 : vector<96x128xf32>
    %29 = arith.subf %27, %28 : vector<96x128xf32>
    %30 = arith.mulf %15, %18 : vector<96x128xf32>
    %31 = arith.mulf %16, %17 : vector<96x128xf32>
    %32 = arith.addf %30, %31 : vector<96x128xf32>
    %33 = arith.mulf %19, %21 : vector<96x128xf32>
    %34 = arith.mulf %20, %22 : vector<96x128xf32>
    %35 = arith.subf %33, %34 : vector<96x128xf32>
    %36 = arith.mulf %19, %22 : vector<96x128xf32>
    %37 = arith.mulf %20, %21 : vector<96x128xf32>
    %38 = arith.addf %36, %37 : vector<96x128xf32>
    %39 = arith.mulf %23, %25 : vector<96x128xf32>
    %40 = arith.mulf %24, %26 : vector<96x128xf32>
    %41 = arith.subf %39, %40 : vector<96x128xf32>
    %42 = arith.mulf %23, %26 : vector<96x128xf32>
    %43 = arith.mulf %24, %25 : vector<96x128xf32>
    %44 = arith.addf %42, %43 : vector<96x128xf32>
    %45 = arith.mulf %29, %35 : vector<96x128xf32>
    %46 = arith.mulf %32, %38 : vector<96x128xf32>
    %47 = arith.subf %45, %46 : vector<96x128xf32>
    %48 = arith.mulf %29, %38 : vector<96x128xf32>
    %49 = arith.mulf %32, %35 : vector<96x128xf32>
    %50 = arith.addf %48, %49 : vector<96x128xf32>
    %51 = arith.mulf %47, %41 : vector<96x128xf32>
    %52 = arith.mulf %50, %44 : vector<96x128xf32>
    %53 = arith.subf %51, %52 : vector<96x128xf32>
    %54 = arith.mulf %47, %44 : vector<96x128xf32>
    %55 = arith.mulf %50, %41 : vector<96x128xf32>
    %56 = arith.addf %54, %55 : vector<96x128xf32>
    %c576 = arith.constant 576 : index
    %c0_36 = arith.constant 0 : index
    %57 = vector.load %arg8[%c576, %c0_36] : memref<1152x256xf32, #tpu.memory_space<vmem>>, vector<96x128xf32>
    %c576_37 = arith.constant 576 : index
    %c128_38 = arith.constant 128 : index
    %58 = vector.load %arg8[%c576_37, %c128_38] : memref<1152x256xf32, #tpu.memory_space<vmem>>, vector<96x128xf32>
    %c672 = arith.constant 672 : index
    %c0_39 = arith.constant 0 : index
    %59 = vector.load %arg8[%c672, %c0_39] : memref<1152x256xf32, #tpu.memory_space<vmem>>, vector<96x128xf32>
    %c672_40 = arith.constant 672 : index
    %c128_41 = arith.constant 128 : index
    %60 = vector.load %arg8[%c672_40, %c128_41] : memref<1152x256xf32, #tpu.memory_space<vmem>>, vector<96x128xf32>
    %c768 = arith.constant 768 : index
    %c0_42 = arith.constant 0 : index
    %61 = vector.load %arg8[%c768, %c0_42] : memref<1152x256xf32, #tpu.memory_space<vmem>>, vector<96x128xf32>
    %c768_43 = arith.constant 768 : index
    %c128_44 = arith.constant 128 : index
    %62 = vector.load %arg8[%c768_43, %c128_44] : memref<1152x256xf32, #tpu.memory_space<vmem>>, vector<96x128xf32>
    %c864 = arith.constant 864 : index
    %c0_45 = arith.constant 0 : index
    %63 = vector.load %arg8[%c864, %c0_45] : memref<1152x256xf32, #tpu.memory_space<vmem>>, vector<96x128xf32>
    %c864_46 = arith.constant 864 : index
    %c128_47 = arith.constant 128 : index
    %64 = vector.load %arg8[%c864_46, %c128_47] : memref<1152x256xf32, #tpu.memory_space<vmem>>, vector<96x128xf32>
    %c960 = arith.constant 960 : index
    %c0_48 = arith.constant 0 : index
    %65 = vector.load %arg8[%c960, %c0_48] : memref<1152x256xf32, #tpu.memory_space<vmem>>, vector<96x128xf32>
    %c960_49 = arith.constant 960 : index
    %c128_50 = arith.constant 128 : index
    %66 = vector.load %arg8[%c960_49, %c128_50] : memref<1152x256xf32, #tpu.memory_space<vmem>>, vector<96x128xf32>
    %c1056 = arith.constant 1056 : index
    %c0_51 = arith.constant 0 : index
    %67 = vector.load %arg8[%c1056, %c0_51] : memref<1152x256xf32, #tpu.memory_space<vmem>>, vector<96x128xf32>
    %c1056_52 = arith.constant 1056 : index
    %c128_53 = arith.constant 128 : index
    %68 = vector.load %arg8[%c1056_52, %c128_53] : memref<1152x256xf32, #tpu.memory_space<vmem>>, vector<96x128xf32>
    %69 = arith.mulf %57, %59 : vector<96x128xf32>
    %70 = arith.mulf %58, %60 : vector<96x128xf32>
    %71 = arith.subf %69, %70 : vector<96x128xf32>
    %72 = arith.mulf %57, %60 : vector<96x128xf32>
    %73 = arith.mulf %58, %59 : vector<96x128xf32>
    %74 = arith.addf %72, %73 : vector<96x128xf32>
    %75 = arith.mulf %61, %63 : vector<96x128xf32>
    %76 = arith.mulf %62, %64 : vector<96x128xf32>
    %77 = arith.subf %75, %76 : vector<96x128xf32>
    %78 = arith.mulf %61, %64 : vector<96x128xf32>
    %79 = arith.mulf %62, %63 : vector<96x128xf32>
    %80 = arith.addf %78, %79 : vector<96x128xf32>
    %81 = arith.mulf %65, %67 : vector<96x128xf32>
    %82 = arith.mulf %66, %68 : vector<96x128xf32>
    %83 = arith.subf %81, %82 : vector<96x128xf32>
    %84 = arith.mulf %65, %68 : vector<96x128xf32>
    %85 = arith.mulf %66, %67 : vector<96x128xf32>
    %86 = arith.addf %84, %85 : vector<96x128xf32>
    %87 = arith.mulf %71, %77 : vector<96x128xf32>
    %88 = arith.mulf %74, %80 : vector<96x128xf32>
    %89 = arith.subf %87, %88 : vector<96x128xf32>
    %90 = arith.mulf %71, %80 : vector<96x128xf32>
    %91 = arith.mulf %74, %77 : vector<96x128xf32>
    %92 = arith.addf %90, %91 : vector<96x128xf32>
    %93 = arith.mulf %89, %83 : vector<96x128xf32>
    %94 = arith.mulf %92, %86 : vector<96x128xf32>
    %95 = arith.subf %93, %94 : vector<96x128xf32>
    %96 = arith.mulf %89, %86 : vector<96x128xf32>
    %97 = arith.mulf %92, %83 : vector<96x128xf32>
    %98 = arith.addf %96, %97 : vector<96x128xf32>
    %99 = arith.mulf %53, %95 : vector<96x128xf32>
    %100 = arith.mulf %56, %98 : vector<96x128xf32>
    %101 = arith.addf %99, %100 : vector<96x128xf32>
    %102 = arith.mulf %56, %95 : vector<96x128xf32>
    %103 = arith.mulf %53, %98 : vector<96x128xf32>
    %104 = arith.subf %102, %103 : vector<96x128xf32>
    %105 = tpu.concatenate %101, %104 in 1 : vector<96x128xf32>, vector<96x128xf32> -> vector<96x256xf32>
    %c0_54 = arith.constant 0 : index
    %c0_55 = arith.constant 0 : index
    %106 = vector.load %arg4[%c0_54, %c0_55] : memref<256x128xf32, #tpu.memory_space<vmem>>, vector<256x128xf32>
    %cst_56 = arith.constant dense<0.000000e+00> : vector<96x128xf32>
    %107 = tpu.matmul %105, %106, %cst_56 {dimension_numbers = #tpu.dot_dimension_numbers<[1], [0], [0], [1], [0, 0, 1, 1], [], []>} : vector<96x256xf32>, vector<256x128xf32>, vector<96x128xf32> -> vector<96x128xf32>
    %c0_57 = arith.constant 0 : index
    %c0_58 = arith.constant 0 : index
    %108 = vector.load %arg6[%c0_57, %c0_58] : memref<96x128xf32, #tpu.memory_space<vmem>>, vector<96x128xf32>
    tpu.vector_store %arg6[%c0_57, %c0_58], %107 {strides = array<i32>} : memref<96x128xf32, #tpu.memory_space<vmem>>, vector<96x128xf32>,
    return
  }
  func.func @transform_0(%arg0: i32) -> (i32, i32) {
    %c0_i32 = arith.constant 0 : i32
    %c0_i32_0 = arith.constant 0 : i32
    %c0_i32_1 = arith.constant 0 : i32
    return %c0_i32, %c0_i32_0 : i32, i32
  }
  func.func @transform_1(%arg0: i32) -> (i32, i32) {
    %c0_i32 = arith.constant 0 : i32
    %c0_i32_0 = arith.constant 0 : i32
    %c0_i32_1 = arith.constant 0 : i32
    return %c0_i32, %c0_i32_0 : i32, i32
  }
  func.func @transform_2(%arg0: i32) -> (i32, i32) {
    %c0_i32 = arith.constant 0 : i32
    %c0_i32_0 = arith.constant 0 : i32
    %c0_i32_1 = arith.constant 0 : i32
    return %c0_i32, %c0_i32_0 : i32, i32
  }
  func.func @transform_3(%arg0: i32) -> (i32, i32) {
    %c0_i32 = arith.constant 0 : i32
    %c0_i32_0 = arith.constant 0 : i32
    %c0_i32_1 = arith.constant 0 : i32
    return %c0_i32, %c0_i32_0 : i32, i32
  }
  func.func @transform_4(%arg0: i32) -> (i32, i32) {
    %c0_i32 = arith.constant 0 : i32
    %c0_i32_0 = arith.constant 0 : i32
    %c0_i32_1 = arith.constant 0 : i32
    return %c0_i32, %c0_i32_0 : i32, i32
  }
  func.func @transform_5(%arg0: i32) -> (i32, i32) {
    %c0_i32 = arith.constant 0 : i32
    %c0_i32_0 = arith.constant 0 : i32
    %c0_i32_1 = arith.constant 0 : i32
    return %c0_i32, %c0_i32_0 : i32, i32
  }
}

</mosaic_0001>

<llo_original>
// kernel: tpu_custom_call.1
$region0: #{tpu_custom_call.1}
  #allocation0 [shape = 'u32[]', space=smem, size = 0x4, offset = 0x4, fixed_abs, tag = 'smem constant byte address 0x4 - core index']
  #allocation1 [shape = 'u32[144,128]{1,0:T(1,128)}', space=vmem, size = 0x12000, scoped, tag = 'internal scratch']
  #allocation2 [shape = 'f32[104,256]{1,0:T(8,128)}', space=vmem, size = 0x1a000, scoped, tag = 'scratch operand']
  #allocation3 [shape = 'f32[1152,256]{1,0:T(8,128)}', space=vmem, size = 0x120000, scoped, tag = 'scratch operand']
  %s0 = inlined_call_operand.vmem [shape: f32[96,8], index: 0, kind: input, shape index: {}]
  %s1 = inlined_call_operand.vmem [shape: f32[8,384], index: 1, kind: input, shape index: {}]
  %s2 = inlined_call_operand.vmem [shape: f32[1152,104], index: 2, kind: input, shape index: {}]
  %s3 = inlined_call_operand.vmem [shape: f32[256,128], index: 3, kind: input, shape index: {}]
  %s4 = inlined_call_operand.hbm [shape: f32[96,128], index: 4, kind: output, shape index: {0}]
  %s5 = inlined_call_operand.hbm [shape: f32[96,128], index: 5, kind: output, shape index: {1}]
  %6 = xla_tuple %s4, %s5
  %s7 = sld [smem:[#allocation0]]
  $region34: #{tpu_custom_call.1} parent=0
    _
  %s9 = ssub.s32 1, %s7
  %s10 = scalar_select 0, %s9, %s7
  $region1: #{tpu_custom_call.1} parent=0
    #allocation4 [shape = 'u8[49152]{0}', space=vmem, size = 0xc000, scoped, tag = 'output window, operand 0, single buffered']
    #allocation5 [shape = 's32[1]{0}', space=sflag, size = 0x4, scoped, tag = 'scoped memory for tpu_custom_call.1']
    #allocation6 [shape = 'u8[49152]{0}', space=vmem, size = 0xc000, scoped, tag = 'output window, operand 1, single buffered']
    #allocation7 [shape = 's32[1]{0}', space=sflag, size = 0x4, scoped, tag = 'scoped memory for tpu_custom_call.1']
    %11 = vsyncpa [#allocation5], 0
    %12 = vsyncpa [#allocation7], 0
    // Predicated region
    $region2: #{tpu_custom_call.1} parent=1 // pred_check
      _
    $region3: #{tpu_custom_call.1} parent=1 // pred_check_branch
      %14 = sbr.rel (0) target = $region5
    $region4: #{tpu_custom_call.1} parent=1 // pred_region
      _
    $region5: #{tpu_custom_call.1} parent=1 // pred_fallthru
      _
    // Predicated region
    $region6: #{tpu_custom_call.1} parent=1 // pred_check
      _
    $region7: #{tpu_custom_call.1} parent=1 // pred_check_branch
      %16 = sbr.rel (0) target = $region9
    $region8: #{tpu_custom_call.1} parent=1 // pred_region
      _
    $region9: #{tpu_custom_call.1} parent=1 // pred_fallthru
      _
    // Predicated region
    $region10: #{tpu_custom_call.1} parent=1 // pred_check
      _
    $region11: #{tpu_custom_call.1} parent=1 // pred_check_branch
      %18 = sbr.rel (0) target = $region13
    $region12: #{tpu_custom_call.1} parent=1 // pred_region
      _
    $region13: #{tpu_custom_call.1} parent=1 // pred_fallthru
      _
    // Predicated region
    $region14: #{tpu_custom_call.1} parent=1 // pred_check
      _
    $region15: #{tpu_custom_call.1} parent=1 // pred_check_branch
      %20 = sbr.rel (0) target = $region17
    $region16: #{tpu_custom_call.1} parent=1 // pred_region
      _
    $region17: #{tpu_custom_call.1} parent=1 // pred_fallthru
      _
    %v21 = vld [vmem:[%s0] sm:$0xff]
    %v22 = vld [vmem:[%s0 + $0x8] sm:$0xff]
    %v23 = vld [vmem:[%s0 + $0x10] sm:$0xff]
    %v24 = vld [vmem:[%s0 + $0x18] sm:$0xff]
    %v25 = vld [vmem:[%s0 + $0x20] sm:$0xff]
    %v26 = vld [vmem:[%s0 + $0x28] sm:$0xff]
    %v27 = vld [vmem:[%s0 + $0x30] sm:$0xff]
    %v28 = vld [vmem:[%s0 + $0x38] sm:$0xff]
    %v29 = vld [vmem:[%s0 + $0x40] sm:$0xff]
    %v30 = vld [vmem:[%s0 + $0x48] sm:$0xff]
    %v31 = vld [vmem:[%s0 + $0x50] sm:$0xff]
    %v32 = vld [vmem:[%s0 + $0x58] sm:$0xff]
    %v33 = vld [vmem:[%s1] sm:$0xff]
    %v34 = vld [vmem:[%s1 + $0x8] sm:$0xff]
    %v35 = vld [vmem:[%s1 + $0x10] sm:$0xff]
    %vm36 = vcmask 64512
    %v38 = vsel %vm36, %v21, 0
    %v41 = vsel %vm36, %v22, 0
    %v44 = vsel %vm36, %v23, 0
    %v47 = vsel %vm36, %v24, 0
    %v50 = vsel %vm36, %v25, 0
    %v53 = vsel %vm36, %v26, 0
    %v56 = vsel %vm36, %v27, 0
    %v59 = vsel %vm36, %v28, 0
    %v62 = vsel %vm36, %v29, 0
    %v65 = vsel %vm36, %v30, 0
    %v68 = vsel %vm36, %v31, 0
    %v71 = vsel %vm36, %v32, 0
    %73 = vmatprep.subr.mxu0 %v34
    %74 = vmatpush1.msra.mxu0 %v33
    %75 = vmatprep.subr.mxu0 0.0
    %76 = vmatpush1.msra.mxu0 0.0
    %77 = vmatprep.subr.mxu0 0.0
    %78 = vmatpush1.msra.mxu0 0.0
    %79 = vmatprep.subr.mxu0 0.0
    %80 = vmatpush1.msra.mxu0 0.0
    %81 = vmatprep.subr.mxu0 0.0
    %82 = vmatpush1.msra.mxu0 0.0
    %83 = vmatprep.subr.mxu0 0.0
    %84 = vmatpush1.msra.mxu0 0.0
    %85 = vmatprep.subr.mxu0 0.0
    %86 = vmatpush1.msra.mxu0 0.0
    %87 = vmatprep.subr.mxu0 0.0
    %88 = vmatpush1.msra.mxu0 0.0
    %89 = vmatprep.subr.mxu0 0.0
    %90 = vmatpush1.msra.mxu0 0.0
    %91 = vmatprep.subr.mxu0 0.0
    %92 = vmatpush1.msra.mxu0 0.0
    %93 = vmatprep.subr.mxu0 0.0
    %94 = vmatpush1.msra.mxu0 0.0
    %95 = vmatprep.subr.mxu0 0.0
    %96 = vmatpush1.msra.mxu0 0.0
    %97 = vmatprep.subr.mxu0 0.0
    %98 = vmatpush1.msra.mxu0 0.0
    %99 = vmatprep.subr.mxu0 0.0
    %100 = vmatpush1.msra.mxu0 0.0
    %101 = vmatprep.subr.mxu0 0.0
    %102 = vmatpush1.msra.mxu0 0.0
    %103 = vmatprep.subr.mxu0 0.0
    %104 = vmatpush1.msra.mxu0 0.0
    %105 = vmatprep.subr.mxu0 0.0
    %106 = vmatpush1.msra.mxu0 0.0
    %107 = vmatprep.subr.mxu0 0.0
    %108 = vmatpush1.msra.mxu0 0.0
    %109 = vmatprep.subr.mxu0 0.0
    %110 = vmatpush1.msra.mxu0 0.0
    %111 = vmatprep.subr.mxu0 0.0
    %112 = vmatpush1.msra.mxu0 0.0
    %113 = vmatprep.subr.mxu0 0.0
    %114 = vmatpush1.msra.mxu0 0.0
    %115 = vmatprep.subr.mxu0 0.0
    %116 = vmatpush1.msra.mxu0 0.0
    %117 = vmatprep.subr.mxu0 0.0
    %118 = vmatpush1.msra.mxu0 0.0
    %119 = vmatprep.subr.mxu0 0.0
    %120 = vmatpush1.msra.mxu0 0.0
    %121 = vmatprep.subr.mxu0 0.0
    %122 = vmatpush1.msra.mxu0 0.0
    %123 = vmatprep.subr.mxu0 0.0
    %124 = vmatpush1.msra.mxu0 0.0
    %125 = vmatprep.subr.mxu0 0.0
    %126 = vmatpush1.msra.mxu0 0.0
    %127 = vmatprep.subr.mxu0 0.0
    %128 = vmatpush1.msra.mxu0 0.0
    %129 = vmatprep.subr.mxu0 0.0
    %130 = vmatpush1.msra.mxu0 0.0
    %131 = vmatprep.subr.mxu0 0.0
    %132 = vmatpush1.msra.mxu0 0.0
    %133 = vmatprep.subr.mxu0 0.0
    %134 = vmatpush1.msra.mxu0 0.0
    %135 = vmatprep.subr.mxu0 0.0
    %136 = vmatpush1.msra.mxu0 0.0
    %137 = vmatprep.mubr.f32.mxu0 0.0
    %138 = vmatmul.mubr.f32.gmra.mrb[0].mxu0 %v38
    %v139 = vpop.f32.mrb[0].mxu0
    %v140 = vadd.f32 0.0, %v139
    %v141 = vpop.f32.mrb[0].mxu0
    %v142 = vadd.f32 0.0, %v141
    %143 = vmatprep.mubr.f32.mxu0 0.0
    %144 = vmatmul.mubr.f32.gmra.mrb[0].mxu0 %v41
    %v145 = vpop.f32.mrb[0].mxu0
    %v146 = vadd.f32 0.0, %v145
    %v147 = vpop.f32.mrb[0].mxu0
    %v148 = vadd.f32 0.0, %v147
    %149 = vmatprep.mubr.f32.mxu0 0.0
    %150 = vmatmul.mubr.f32.gmra.mrb[0].mxu0 %v44
    %v151 = vpop.f32.mrb[0].mxu0
    %v152 = vadd.f32 0.0, %v151
    %v153 = vpop.f32.mrb[0].mxu0
    %v154 = vadd.f32 0.0, %v153
    %155 = vmatprep.mubr.f32.mxu0 0.0
    %156 = vmatmul.mubr.f32.gmra.mrb[0].mxu0 %v47
    %v157 = vpop.f32.mrb[0].mxu0
    %v158 = vadd.f32 0.0, %v157
    %v159 = vpop.f32.mrb[0].mxu0
    %v160 = vadd.f32 0.0, %v159
    %161 = vmatprep.mubr.f32.mxu0 0.0
    %162 = vmatmul.mubr.f32.gmra.mrb[0].mxu0 %v50
    %v163 = vpop.f32.mrb[0].mxu0
    %v164 = vadd.f32 0.0, %v163
    %v165 = vpop.f32.mrb[0].mxu0
    %v166 = vadd.f32 0.0, %v165
    %167 = vmatprep.mubr.f32.mxu0 0.0
    %168 = vmatmul.mubr.f32.gmra.mrb[0].mxu0 %v53
    %v169 = vpop.f32.mrb[0].mxu0
    %v170 = vadd.f32 0.0, %v169
    %v171 = vpop.f32.mrb[0].mxu0
    %v172 = vadd.f32 0.0, %v171
    %173 = vmatprep.mubr.f32.mxu0 0.0
    %174 = vmatmul.mubr.f32.gmra.mrb[0].mxu0 %v56
    %v175 = vpop.f32.mrb[0].mxu0
    %v176 = vadd.f32 0.0, %v175
    %v177 = vpop.f32.mrb[0].mxu0
    %v178 = vadd.f32 0.0, %v177
    %179 = vmatprep.mubr.f32.mxu0 0.0
    %180 = vmatmul.mubr.f32.gmra.mrb[0].mxu0 %v59
    %v181 = vpop.f32.mrb[0].mxu0
    %v182 = vadd.f32 0.0, %v181
    %v183 = vpop.f32.mrb[0].mxu0
    %v184 = vadd.f32 0.0, %v183
    %185 = vmatprep.mubr.f32.mxu0 0.0
    %186 = vmatmul.mubr.f32.gmra.mrb[0].mxu0 %v62
    %v187 = vpop.f32.mrb[0].mxu0
    %v188 = vadd.f32 0.0, %v187
    %v189 = vpop.f32.mrb[0].mxu0
    %v190 = vadd.f32 0.0, %v189
    %191 = vmatprep.mubr.f32.mxu0 0.0
    %192 = vmatmul.mubr.f32.gmra.mrb[0].mxu0 %v65
    %v193 = vpop.f32.mrb[0].mxu0
    %v194 = vadd.f32 0.0, %v193
    %v195 = vpop.f32.mrb[0].mxu0
    %v196 = vadd.f32 0.0, %v195
    %197 = vmatprep.mubr.f32.mxu0 0.0
    %198 = vmatmul.mubr.f32.gmra.mrb[0].mxu0 %v68
    %v199 = vpop.f32.mrb[0].mxu0
    %v200 = vadd.f32 0.0, %v199
    %v201 = vpop.f32.mrb[0].mxu0
    %v202 = vadd.f32 0.0, %v201
    %203 = vmatprep.mubr.f32.mxu0 0.0
    %204 = vmatmul.mubr.f32.gmra.mrb[0].mxu0 %v71
    %v205 = vpop.f32.mrb[0].mxu0
    %v206 = vadd.f32 0.0, %v205
    %v207 = vpop.f32.mrb[0].mxu0
    %v208 = vadd.f32 0.0, %v207
    %209 = vdwg.mxu0
    %210 = vmatprep.subr.mxu0 0.0
    %211 = vmatpush1.msra.mxu0 %v35
    %212 = vmatprep.subr.mxu0 0.0
    %213 = vmatpush1.msra.mxu0 0.0
    %214 = vmatprep.subr.mxu0 0.0
    %215 = vmatpush1.msra.mxu0 0.0
    %216 = vmatprep.subr.mxu0 0.0
    %217 = vmatpush1.msra.mxu0 0.0
    %218 = vmatprep.subr.mxu0 0.0
    %219 = vmatpush1.msra.mxu0 0.0
    %220 = vmatprep.subr.mxu0 0.0
    %221 = vmatpush1.msra.mxu0 0.0
    %222 = vmatprep.subr.mxu0 0.0
    %223 = vmatpush1.msra.mxu0 0.0
    %224 = vmatprep.subr.mxu0 0.0
    %225 = vmatpush1.msra.mxu0 0.0
    %226 = vmatprep.subr.mxu0 0.0
    %227 = vmatpush1.msra.mxu0 0.0
    %228 = vmatprep.subr.mxu0 0.0
    %229 = vmatpush1.msra.mxu0 0.0
    %230 = vmatprep.subr.mxu0 0.0
    %231 = vmatpush1.msra.mxu0 0.0
    %232 = vmatprep.subr.mxu0 0.0
    %233 = vmatpush1.msra.mxu0 0.0
    %234 = vmatprep.subr.mxu0 0.0
    %235 = vmatpush1.msra.mxu0 0.0
    %236 = vmatprep.subr.mxu0 0.0
    %237 = vmatpush1.msra.mxu0 0.0
    %238 = vmatprep.subr.mxu0 0.0
    %239 = vmatpush1.msra.mxu0 0.0
    %240 = vmatprep.subr.mxu0 0.0
    %241 = vmatpush1.msra.mxu0 0.0
    %242 = vmatprep.subr.mxu0 0.0
    %243 = vmatpush1.msra.mxu0 0.0
    %244 = vmatprep.subr.mxu0 0.0
    %245 = vmatpush1.msra.mxu0 0.0
    %246 = vmatprep.subr.mxu0 0.0
    %247 = vmatpush1.msra.mxu0 0.0
    %248 = vmatprep.subr.mxu0 0.0
    %249 = vmatpush1.msra.mxu0 0.0
    %250 = vmatprep.subr.mxu0 0.0
    %251 = vmatpush1.msra.mxu0 0.0
    %252 = vmatprep.subr.mxu0 0.0
    %253 = vmatpush1.msra.mxu0 0.0
    %254 = vmatprep.subr.mxu0 0.0
    %255 = vmatpush1.msra.mxu0 0.0
    %256 = vmatprep.subr.mxu0 0.0
    %257 = vmatpush1.msra.mxu0 0.0
    %258 = vmatprep.subr.mxu0 0.0
    %259 = vmatpush1.msra.mxu0 0.0
    %260 = vmatprep.subr.mxu0 0.0
    %261 = vmatpush1.msra.mxu0 0.0
    %262 = vmatprep.subr.mxu0 0.0
    %263 = vmatpush1.msra.mxu0 0.0
    %264 = vmatprep.subr.mxu0 0.0
    %265 = vmatpush1.msra.mxu0 0.0
    %266 = vmatprep.subr.mxu0 0.0
    %267 = vmatpush1.msra.mxu0 0.0
    %268 = vmatprep.subr.mxu0 0.0
    %269 = vmatpush1.msra.mxu0 0.0
    %270 = vmatprep.subr.mxu0 0.0
    %271 = vmatpush1.msra.mxu0 0.0
    %272 = vmatprep.subr.mxu0 0.0
    %273 = vmatpush1.msra.mxu0 0.0
    %274 = vmatprep.mubr.f32.mxu0 0.0
    %275 = vmatmul.mubr.f32.gmra.mrb[0].mxu0 %v38
    %v276 = vpop.f32.mrb[0].mxu0
    %v277 = vadd.f32 0.0, %v276
    %v278 = vpop.f32.mrb[0].mxu0
    %279 = vmatprep.mubr.f32.mxu0 0.0
    %280 = vmatmul.mubr.f32.gmra.mrb[0].mxu0 %v41
    %v281 = vpop.f32.mrb[0].mxu0
    %v282 = vadd.f32 0.0, %v281
    %v283 = vpop.f32.mrb[0].mxu0
    %284 = vmatprep.mubr.f32.mxu0 0.0
    %285 = vmatmul.mubr.f32.gmra.mrb[0].mxu0 %v44
    %v286 = vpop.f32.mrb[0].mxu0
    %v287 = vadd.f32 0.0, %v286
    %v288 = vpop.f32.mrb[0].mxu0
    %289 = vmatprep.mubr.f32.mxu0 0.0
    %290 = vmatmul.mubr.f32.gmra.mrb[0].mxu0 %v47
    %v291 = vpop.f32.mrb[0].mxu0
    %v292 = vadd.f32 0.0, %v291
    %v293 = vpop.f32.mrb[0].mxu0
    %294 = vmatprep.mubr.f32.mxu0 0.0
    %295 = vmatmul.mubr.f32.gmra.mrb[0].mxu0 %v50
    %v296 = vpop.f32.mrb[0].mxu0
    %v297 = vadd.f32 0.0, %v296
    %v298 = vpop.f32.mrb[0].mxu0
    %299 = vmatprep.mubr.f32.mxu0 0.0
    %300 = vmatmul.mubr.f32.gmra.mrb[0].mxu0 %v53
    %v301 = vpop.f32.mrb[0].mxu0
    %v302 = vadd.f32 0.0, %v301
    %v303 = vpop.f32.mrb[0].mxu0
    %304 = vmatprep.mubr.f32.mxu0 0.0
    %305 = vmatmul.mubr.f32.gmra.mrb[0].mxu0 %v56
    %v306 = vpop.f32.mrb[0].mxu0
    %v307 = vadd.f32 0.0, %v306
    %v308 = vpop.f32.mrb[0].mxu0
    %309 = vmatprep.mubr.f32.mxu0 0.0
    %310 = vmatmul.mubr.f32.gmra.mrb[0].mxu0 %v59
    %v311 = vpop.f32.mrb[0].mxu0
    %v312 = vadd.f32 0.0, %v311
    %v313 = vpop.f32.mrb[0].mxu0
    %314 = vmatprep.mubr.f32.mxu0 0.0
    %315 = vmatmul.mubr.f32.gmra.mrb[0].mxu0 %v62
    %v316 = vpop.f32.mrb[0].mxu0
    %v317 = vadd.f32 0.0, %v316
    %v318 = vpop.f32.mrb[0].mxu0
    %319 = vmatprep.mubr.f32.mxu0 0.0
    %320 = vmatmul.mubr.f32.gmra.mrb[0].mxu0 %v65
    %v321 = vpop.f32.mrb[0].mxu0
    %v322 = vadd.f32 0.0, %v321
    %v323 = vpop.f32.mrb[0].mxu0
    %324 = vmatprep.mubr.f32.mxu0 0.0
    %325 = vmatmul.mubr.f32.gmra.mrb[0].mxu0 %v68
    %v326 = vpop.f32.mrb[0].mxu0
    %v327 = vadd.f32 0.0, %v326
    %v328 = vpop.f32.mrb[0].mxu0
    %329 = vmatprep.mubr.f32.mxu0 0.0
    %330 = vmatmul.mubr.f32.gmra.mrb[0].mxu0 %v71
    %v331 = vpop.f32.mrb[0].mxu0
    %v332 = vadd.f32 0.0, %v331
    %v333 = vpop.f32.mrb[0].mxu0
    %334 = vdwg.mxu0
    %335 = vst [vmem:[#allocation4] sm:$0xff] %v140
    %336 = vst [vmem:[#allocation4 + $0x8] sm:$0xff] %v146
    %337 = vst [vmem:[#allocation4 + $0x10] sm:$0xff] %v152
    %338 = vst [vmem:[#allocation4 + $0x18] sm:$0xff] %v158
    %339 = vst [vmem:[#allocation4 + $0x20] sm:$0xff] %v164
    %340 = vst [vmem:[#allocation4 + $0x28] sm:$0xff] %v170
    %341 = vst [vmem:[#allocation4 + $0x30] sm:$0xff] %v176
    %342 = vst [vmem:[#allocation4 + $0x38] sm:$0xff] %v182
    %343 = vst [vmem:[#allocation4 + $0x40] sm:$0xff] %v188
    %344 = vst [vmem:[#allocation4 + $0x48] sm:$0xff] %v194
    %345 = vst [vmem:[#allocation4 + $0x50] sm:$0xff] %v200
    %346 = vst [vmem:[#allocation4 + $0x58] sm:$0xff] %v206
    %347 = vst [vmem:[#allocation2] sm:$0xff] %v142
    %348 = vst [vmem:[#allocation2 + $0x8] sm:$0xff] %v277
    %349 = vst [vmem:[#allocation2 + $0x10] sm:$0xff] %v148
    %350 = vst [vmem:[#allocation2 + $0x18] sm:$0xff] %v282
    %351 = vst [vmem:[#allocation2 + $0x20] sm:$0xff] %v154
    %352 = vst [vmem:[#allocation2 + $0x28] sm:$0xff] %v287
    %353 = vst [vmem:[#allocation2 + $0x30] sm:$0xff] %v160
    %354 = vst [vmem:[#allocation2 + $0x38] sm:$0xff] %v292
    %355 = vst [vmem:[#allocation2 + $0x40] sm:$0xff] %v166
    %356 = vst [vmem:[#allocation2 + $0x48] sm:$0xff] %v297
    %357 = vst [vmem:[#allocation2 + $0x50] sm:$0xff] %v172
    %358 = vst [vmem:[#allocation2 + $0x58] sm:$0xff] %v302
    %359 = vst [vmem:[#allocation2 + $0x60] sm:$0xff] %v178
    %360 = vst [vmem:[#allocation2 + $0x68] sm:$0xff] %v307
    %361 = vst [vmem:[#allocation2 + $0x70] sm:$0xff] %v184
    %362 = vst [vmem:[#allocation2 + $0x78] sm:$0xff] %v312
    %363 = vst [vmem:[#allocation2 + $0x80] sm:$0xff] %v190
    %364 = vst [vmem:[#allocation2 + $0x88] sm:$0xff] %v317
    %365 = vst [vmem:[#allocation2 + $0x90] sm:$0xff] %v196
    %366 = vst [vmem:[#allocation2 + $0x98] sm:$0xff] %v322
    %367 = vst [vmem:[#allocation2 + $0xa0] sm:$0xff] %v202
    %368 = vst [vmem:[#allocation2 + $0xa8] sm:$0xff] %v327
    %369 = vst [vmem:[#allocation2 + $0xb0] sm:$0xff] %v208
    %370 = vst [vmem:[#allocation2 + $0xb8] sm:$0xff] %v332
    %371 = vst [vmem:[#allocation2 + $0xc0] sm:$0xff] 1.0
    %372 = vst [vmem:[#allocation2 + $0xc8] sm:$0xff] 0.0
    %v373 = vld [vmem:[%s2] sm:$0xff]
    %v374 = vld [vmem:[%s2 + $0x8] sm:$0xff]
    %v375 = vld [vmem:[%s2 + $0x10] sm:$0xff]
    %v376 = vld [vmem:[%s2 + $0x18] sm:$0xff]
    %v377 = vld [vmem:[%s2 + $0x20] sm:$0xff]
    %v378 = vld [vmem:[%s2 + $0x28] sm:$0xff]
    %v379 = vld [vmem:[%s2 + $0x30] sm:$0xff]
    %v380 = vld [vmem:[%s2 + $0x38] sm:$0xff]
    %v381 = vld [vmem:[%s2 + $0x40] sm:$0xff]
    %v382 = vld [vmem:[%s2 + $0x48] sm:$0xff]
    %v383 = vld [vmem:[%s2 + $0x50] sm:$0xff]
    %v384 = vld [vmem:[%s2 + $0x58] sm:$0xff]
    %v385 = vld [vmem:[%s2 + $0x60] sm:$0xff]
    %v386 = vld [vmem:[%s2 + $0x68] sm:$0xff]
    %v387 = vld [vmem:[%s2 + $0x70] sm:$0xff]
    %v388 = vld [vmem:[%s2 + $0x78] sm:$0xff]
    %v389 = vld [vmem:[%s2 + $0x80] sm:$0xff]
    %v390 = vld [vmem:[%s2 + $0x88] sm:$0xff]
    %v391 = vld [vmem:[%s2 + $0x90] sm:$0xff]
    %v392 = vld [vmem:[%s2 + $0x98] sm:$0xff]
    %v393 = vld [vmem:[%s2 + $0xa0] sm:$0xff]
    %v394 = vld [vmem:[%s2 + $0xa8] sm:$0xff]
    %v395 = vld [vmem:[%s2 + $0xb0] sm:$0xff]
    %v396 = vld [vmem:[%s2 + $0xb8] sm:$0xff]
    %v397 = vld [vmem:[%s2 + $0xc0] sm:$0xff]
    %v398 = vld [vmem:[%s2 + $0xc8] sm:$0xff]
    %v399 = vld [vmem:[%s2 + $0xd0] sm:$0xff]
    %v400 = vld [vmem:[%s2 + $0xd8] sm:$0xff]
    %v401 = vld [vmem:[%s2 + $0xe0] sm:$0xff]
    %v402 = vld [vmem:[%s2 + $0xe8] sm:$0xff]
    %v403 = vld [vmem:[%s2 + $0xf0] sm:$0xff]
    %v404 = vld [vmem:[%s2 + $0xf8] sm:$0xff]
    %v405 = vld [vmem:[%s2 + $0x100] sm:$0xff]
    %v406 = vld [vmem:[%s2 + $0x108] sm:$0xff]
    %v407 = vld [vmem:[%s2 + $0x110] sm:$0xff]
    %v408 = vld [vmem:[%s2 + $0x118] sm:$0xff]
    %v409 = vld [vmem:[%s2 + $0x120] sm:$0xff]
    %v410 = vld [vmem:[%s2 + $0x128] sm:$0xff]
    %v411 = vld [vmem:[%s2 + $0x130] sm:$0xff]
    %v412 = vld [vmem:[%s2 + $0x138] sm:$0xff]
    %v413 = vld [vmem:[%s2 + $0x140] sm:$0xff]
    %v414 = vld [vmem:[%s2 + $0x148] sm:$0xff]
    %v415 = vld [vmem:[%s2 + $0x150] sm:$0xff]
    %v416 = vld [vmem:[%s2 + $0x158] sm:$0xff]
    %v417 = vld [vmem:[%s2 + $0x160] sm:$0xff]
    %v418 = vld [vmem:[%s2 + $0x168] sm:$0xff]
    %v419 = vld [vmem:[%s2 + $0x170] sm:$0xff]
    %v420 = vld [vmem:[%s2 + $0x178] sm:$0xff]
    %v421 = vld [vmem:[%s2 + $0x180] sm:$0xff]
    %v422 = vld [vmem:[%s2 + $0x188] sm:$0xff]
    %v423 = vld [vmem:[%s2 + $0x190] sm:$0xff]
    %v424 = vld [vmem:[%s2 + $0x198] sm:$0xff]
    %v425 = vld [vmem:[%s2 + $0x1a0] sm:$0xff]
    %v426 = vld [vmem:[%s2 + $0x1a8] sm:$0xff]
    %v427 = vld [vmem:[%s2 + $0x1b0] sm:$0xff]
    %v428 = vld [vmem:[%s2 + $0x1b8] sm:$0xff]
    %v429 = vld [vmem:[%s2 + $0x1c0] sm:$0xff]
    %v430 = vld [vmem:[%s2 + $0x1c8] sm:$0xff]
    %v431 = vld [vmem:[%s2 + $0x1d0] sm:$0xff]
    %v432 = vld [vmem:[%s2 + $0x1d8] sm:$0xff]
    %v433 = vld [vmem:[%s2 + $0x1e0] sm:$0xff]
    %v434 = vld [vmem:[%s2 + $0x1e8] sm:$0xff]
    %v435 = vld [vmem:[%s2 + $0x1f0] sm:$0xff]
    %v436 = vld [vmem:[%s2 + $0x1f8] sm:$0xff]
    %v437 = vld [vmem:[%s2 + $0x200] sm:$0xff]
    %v438 = vld [vmem:[%s2 + $0x208] sm:$0xff]
    %v439 = vld [vmem:[%s2 + $0x210] sm:$0xff]
    %v440 = vld [vmem:[%s2 + $0x218] sm:$0xff]
    %v441 = vld [vmem:[%s2 + $0x220] sm:$0xff]
    %v442 = vld [vmem:[%s2 + $0x228] sm:$0xff]
    %v443 = vld [vmem:[%s2 + $0x230] sm:$0xff]
    %v444 = vld [vmem:[%s2 + $0x238] sm:$0xff]
    %v445 = vld [vmem:[%s2 + $0x240] sm:$0xff]
    %v446 = vld [vmem:[%s2 + $0x248] sm:$0xff]
    %v447 = vld [vmem:[%s2 + $0x250] sm:$0xff]
    %v448 = vld [vmem:[%s2 + $0x258] sm:$0xff]
    %v449 = vld [vmem:[%s2 + $0x260] sm:$0xff]
    %v450 = vld [vmem:[%s2 + $0x268] sm:$0xff]
    %v451 = vld [vmem:[%s2 + $0x270] sm:$0xff]
    %v452 = vld [vmem:[%s2 + $0x278] sm:$0xff]
    %v453 = vld [vmem:[%s2 + $0x280] sm:$0xff]
    %v454 = vld [vmem:[%s2 + $0x288] sm:$0xff]
    %v455 = vld [vmem:[%s2 + $0x290] sm:$0xff]
    %v456 = vld [vmem:[%s2 + $0x298] sm:$0xff]
    %v457 = vld [vmem:[%s2 + $0x2a0] sm:$0xff]
    %v458 = vld [vmem:[%s2 + $0x2a8] sm:$0xff]
    %v459 = vld [vmem:[%s2 + $0x2b0] sm:$0xff]
    %v460 = vld [vmem:[%s2 + $0x2b8] sm:$0xff]
    %v461 = vld [vmem:[%s2 + $0x2c0] sm:$0xff]
    %v462 = vld [vmem:[%s2 + $0x2c8] sm:$0xff]
    %v463 = vld [vmem:[%s2 + $0x2d0] sm:$0xff]
    %v464 = vld [vmem:[%s2 + $0x2d8] sm:$0xff]
    %v465 = vld [vmem:[%s2 + $0x2e0] sm:$0xff]
    %v466 = vld [vmem:[%s2 + $0x2e8] sm:$0xff]
    %v467 = vld [vmem:[%s2 + $0x2f0] sm:$0xff]
    %v468 = vld [vmem:[%s2 + $0x2f8] sm:$0xff]
    %v469 = vld [vmem:[%s2 + $0x300] sm:$0xff]
    %v470 = vld [vmem:[%s2 + $0x308] sm:$0xff]
    %v471 = vld [vmem:[%s2 + $0x310] sm:$0xff]
    %v472 = vld [vmem:[%s2 + $0x318] sm:$0xff]
    %v473 = vld [vmem:[%s2 + $0x320] sm:$0xff]
    %v474 = vld [vmem:[%s2 + $0x328] sm:$0xff]
    %v475 = vld [vmem:[%s2 + $0x330] sm:$0xff]
    %v476 = vld [vmem:[%s2 + $0x338] sm:$0xff]
    %v477 = vld [vmem:[%s2 + $0x340] sm:$0xff]
    %v478 = vld [vmem:[%s2 + $0x348] sm:$0xff]
    %v479 = vld [vmem:[%s2 + $0x350] sm:$0xff]
    %v480 = vld [vmem:[%s2 + $0x358] sm:$0xff]
    %v481 = vld [vmem:[%s2 + $0x360] sm:$0xff]
    %v482 = vld [vmem:[%s2 + $0x368] sm:$0xff]
    %v483 = vld [vmem:[%s2 + $0x370] sm:$0xff]
    %v484 = vld [vmem:[%s2 + $0x378] sm:$0xff]
    %v485 = vld [vmem:[%s2 + $0x380] sm:$0xff]
    %v486 = vld [vmem:[%s2 + $0x388] sm:$0xff]
    %v487 = vld [vmem:[%s2 + $0x390] sm:$0xff]
    %v488 = vld [vmem:[%s2 + $0x398] sm:$0xff]
    %v489 = vld [vmem:[%s2 + $0x3a0] sm:$0xff]
    %v490 = vld [vmem:[%s2 + $0x3a8] sm:$0xff]
    %v491 = vld [vmem:[%s2 + $0x3b0] sm:$0xff]
    %v492 = vld [vmem:[%s2 + $0x3b8] sm:$0xff]
    %v493 = vld [vmem:[%s2 + $0x3c0] sm:$0xff]
    %v494 = vld [vmem:[%s2 + $0x3c8] sm:$0xff]
    %v495 = vld [vmem:[%s2 + $0x3d0] sm:$0xff]
    %v496 = vld [vmem:[%s2 + $0x3d8] sm:$0xff]
    %v497 = vld [vmem:[%s2 + $0x3e0] sm:$0xff]
    %v498 = vld [vmem:[%s2 + $0x3e8] sm:$0xff]
    %v499 = vld [vmem:[%s2 + $0x3f0] sm:$0xff]
    %v500 = vld [vmem:[%s2 + $0x3f8] sm:$0xff]
    %v501 = vld [vmem:[%s2 + $0x400] sm:$0xff]
    %v502 = vld [vmem:[%s2 + $0x408] sm:$0xff]
    %v503 = vld [vmem:[%s2 + $0x410] sm:$0xff]
    %v504 = vld [vmem:[%s2 + $0x418] sm:$0xff]
    %v505 = vld [vmem:[%s2 + $0x420] sm:$0xff]
    %v506 = vld [vmem:[%s2 + $0x428] sm:$0xff]
    %v507 = vld [vmem:[%s2 + $0x430] sm:$0xff]
    %v508 = vld [vmem:[%s2 + $0x438] sm:$0xff]
    %v509 = vld [vmem:[%s2 + $0x440] sm:$0xff]
    %v510 = vld [vmem:[%s2 + $0x448] sm:$0xff]
    %v511 = vld [vmem:[%s2 + $0x450] sm:$0xff]
    %v512 = vld [vmem:[%s2 + $0x458] sm:$0xff]
    %v513 = vld [vmem:[%s2 + $0x460] sm:$0xff]
    %v514 = vld [vmem:[%s2 + $0x468] sm:$0xff]
    %v515 = vld [vmem:[%s2 + $0x470] sm:$0xff]
    %v516 = vld [vmem:[%s2 + $0x478] sm:$0xff]
    %v517 = vld [vmem:[#allocation2] sm:$0xff]
    %v518 = vld [vmem:[#allocation2 + $0x8] sm:$0xff]
    %v519 = vld [vmem:[#allocation2 + $0x10] sm:$0xff]
    %v520 = vld [vmem:[#allocation2 + $0x18] sm:$0xff]
    %v521 = vld [vmem:[#allocation2 + $0x20] sm:$0xff]
    %v522 = vld [vmem:[#allocation2 + $0x28] sm:$0xff]
    %v523 = vld [vmem:[#allocation2 + $0x30] sm:$0xff]
    %v524 = vld [vmem:[#allocation2 + $0x38] sm:$0xff]
    %v525 = vld [vmem:[#allocation2 + $0x40] sm:$0xff]
    %v526 = vld [vmem:[#allocation2 + $0x48] sm:$0xff]
    %v527 = vld [vmem:[#allocation2 + $0x50] sm:$0xff]
    %v528 = vld [vmem:[#allocation2 + $0x58] sm:$0xff]
    %v529 = vld [vmem:[#allocation2 + $0x60] sm:$0xff]
    %v530 = vld [vmem:[#allocation2 + $0x68] sm:$0xff]
    %v531 = vld [vmem:[#allocation2 + $0x70] sm:$0xff]
    %v532 = vld [vmem:[#allocation2 + $0x78] sm:$0xff]
    %v533 = vld [vmem:[#allocation2 + $0x80] sm:$0xff]
    %v534 = vld [vmem:[#allocation2 + $0x88] sm:$0xff]
    %v535 = vld [vmem:[#allocation2 + $0x90] sm:$0xff]
    %v536 = vld [vmem:[#allocation2 + $0x98] sm:$0xff]
    %v537 = vld [vmem:[#allocation2 + $0xa0] sm:$0xff]
    %v538 = vld [vmem:[#allocation2 + $0xa8] sm:$0xff]
    %v539 = vld [vmem:[#allocation2 + $0xb0] sm:$0xff]
    %v540 = vld [vmem:[#allocation2 + $0xb8] sm:$0xff]
    %v541 = vld [vmem:[#allocation2 + $0xc0] sm:$0xff]
    %v542 = vld [vmem:[#allocation2 + $0xc8] sm:$0xff]
    %vm543 = vcmask 850944
    %v545 = vsel %vm543, %v373, 0
    %v548 = vsel %vm543, %v374, 0
    %v551 = vsel %vm543, %v375, 0
    %v554 = vsel %vm543, %v376, 0
    %v557 = vsel %vm543, %v377, 0
    %v560 = vsel %vm543, %v378, 0
    %v563 = vsel %vm543, %v379, 0
    %v566 = vsel %vm543, %v380, 0
    %v569 = vsel %vm543, %v381, 0
    %v572 = vsel %vm543, %v382, 0
    %v575 = vsel %vm543, %v383, 0
    %v578 = vsel %vm543, %v384, 0
    %v581 = vsel %vm543, %v385, 0
    %v584 = vsel %vm543, %v386, 0
    %v587 = vsel %vm543, %v387, 0
    %v590 = vsel %vm543, %v388, 0
    %v593 = vsel %vm543, %v389, 0
    %v596 = vsel %vm543, %v390, 0
    %v599 = vsel %vm543, %v391, 0
    %v602 = vsel %vm543, %v392, 0
    %v605 = vsel %vm543, %v393, 0
    %v608 = vsel %vm543, %v394, 0
    %v611 = vsel %vm543, %v395, 0
    %v614 = vsel %vm543, %v396, 0
    %v617 = vsel %vm543, %v397, 0
    %v620 = vsel %vm543, %v398, 0
    %v623 = vsel %vm543, %v399, 0
    %v626 = vsel %vm543, %v400, 0
    %v629 = vsel %vm543, %v401, 0
    %v632 = vsel %vm543, %v402, 0
    %v635 = vsel %vm543, %v403, 0
    %v638 = vsel %vm543, %v404, 0
    %v641 = vsel %vm543, %v405, 0
    %v644 = vsel %vm543, %v406, 0
    %v647 = vsel %vm543, %v407, 0
    %v650 = vsel %vm543, %v408, 0
    %v653 = vsel %vm543, %v409, 0
    %v656 = vsel %vm543, %v410, 0
    %v659 = vsel %vm543, %v411, 0
    %v662 = vsel %vm543, %v412, 0
    %v665 = vsel %vm543, %v413, 0
    %v668 = vsel %vm543, %v414, 0
    %v671 = vsel %vm543, %v415, 0
    %v674 = vsel %vm543, %v416, 0
    %v677 = vsel %vm543, %v417, 0
    %v680 = vsel %vm543, %v418, 0
    %v683 = vsel %vm543, %v419, 0
    %v686 = vsel %vm543, %v420, 0
    %v689 = vsel %vm543, %v421, 0
    %v692 = vsel %vm543, %v422, 0
    %v695 = vsel %vm543, %v423, 0
    %v698 = vsel %vm543, %v424, 0
    %v701 = vsel %vm543, %v425, 0
    %v704 = vsel %vm543, %v426, 0
    %v707 = vsel %vm543, %v427, 0
    %v710 = vsel %vm543, %v428, 0
    %v713 = vsel %vm543, %v429, 0
    %v716 = vsel %vm543, %v430, 0
    %v719 = vsel %vm543, %v431, 0
    %v722 = vsel %vm543, %v432, 0
    %v725 = vsel %vm543, %v433, 0
    %v728 = vsel %vm543, %v434, 0
    %v731 = vsel %vm543, %v435, 0
    %v734 = vsel %vm543, %v436, 0
    %v737 = vsel %vm543, %v437, 0
    %v740 = vsel %vm543, %v438, 0
    %v743 = vsel %vm543, %v439, 0
    %v746 = vsel %vm543, %v440, 0
    %v749 = vsel %vm543, %v441, 0
    %v752 = vsel %vm543, %v442, 0
    %v755 = vsel %vm543, %v443, 0
    %v758 = vsel %vm543, %v444, 0
    %v761 = vsel %vm543, %v445, 0
    %v764 = vsel %vm543, %v446, 0
    %v767 = vsel %vm543, %v447, 0
    %v770 = vsel %vm543, %v448, 0
    %v773 = vsel %vm543, %v449, 0
    %v776 = vsel %vm543, %v450, 0
    %v779 = vsel %vm543, %v451, 0
    %v782 = vsel %vm543, %v452, 0
    %v785 = vsel %vm543, %v453, 0
    %v788 = vsel %vm543, %v454, 0
    %v791 = vsel %vm543, %v455, 0
    %v794 = vsel %vm543, %v456, 0
    %v797 = vsel %vm543, %v457, 0
    %v800 = vsel %vm543, %v458, 0
    %v803 = vsel %vm543, %v459, 0
    %v806 = vsel %vm543, %v460, 0
    %v809 = vsel %vm543, %v461, 0
    %v812 = vsel %vm543, %v462, 0
    %v815 = vsel %vm543, %v463, 0
    %v818 = vsel %vm543, %v464, 0
    %v821 = vsel %vm543, %v465, 0
    %v824 = vsel %vm543, %v466, 0
    %v827 = vsel %vm543, %v467, 0
    %v830 = vsel %vm543, %v468, 0
    %v833 = vsel %vm543, %v469, 0
    %v836 = vsel %vm543, %v470, 0
    %v839 = vsel %vm543, %v471, 0
    %v842 = vsel %vm543, %v472, 0
    %v845 = vsel %vm543, %v473, 0
    %v848 = vsel %vm543, %v474, 0
    %v851 = vsel %vm543, %v475, 0
    %v854 = vsel %vm543, %v476, 0
    %v857 = vsel %vm543, %v477, 0
    %v860 = vsel %vm543, %v478, 0
    %v863 = vsel %vm543, %v479, 0
    %v866 = vsel %vm543, %v480, 0
    %v869 = vsel %vm543, %v481, 0
    %v872 = vsel %vm543, %v482, 0
    %v875 = vsel %vm543, %v483, 0
    %v878 = vsel %vm543, %v484, 0
    %v881 = vsel %vm543, %v485, 0
    %v884 = vsel %vm543, %v486, 0
    %v887 = vsel %vm543, %v487, 0
    %v890 = vsel %vm543, %v488, 0
    %v893 = vsel %vm543, %v489, 0
    %v896 = vsel %vm543, %v490, 0
    %v899 = vsel %vm543, %v491, 0
    %v902 = vsel %vm543, %v492, 0
    %v905 = vsel %vm543, %v493, 0
    %v908 = vsel %vm543, %v494, 0
    %v911 = vsel %vm543, %v495, 0
    %v914 = vsel %vm543, %v496, 0
    %v917 = vsel %vm543, %v497, 0
    %v920 = vsel %vm543, %v498, 0
    %v923 = vsel %vm543, %v499, 0
    %v926 = vsel %vm543, %v500, 0
    %v929 = vsel %vm543, %v501, 0
    %v932 = vsel %vm543, %v502, 0
    %v935 = vsel %vm543, %v503, 0
    %v938 = vsel %vm543, %v504, 0
    %v941 = vsel %vm543, %v505, 0
    %v944 = vsel %vm543, %v506, 0
    %v947 = vsel %vm543, %v507, 0
    %v950 = vsel %vm543, %v508, 0
    %v953 = vsel %vm543, %v509, 0
    %v956 = vsel %vm543, %v510, 0
    %v959 = vsel %vm543, %v511, 0
    %v962 = vsel %vm543, %v512, 0
    %v965 = vsel %vm543, %v513, 0
    %v968 = vsel %vm543, %v514, 0
    %v971 = vsel %vm543, %v515, 0
    %v974 = vsel %vm543, %v516, 0
    %976 = vmatprep.subr.mxu0 %v518
    %977 = vmatpush1.msra.mxu0 %v517
    %978 = vmatprep.subr.mxu0 %v520
    %979 = vmatpush1.msra.mxu0 %v519
    %980 = vmatprep.subr.mxu0 %v522
    %981 = vmatpush1.msra.mxu0 %v521
    %982 = vmatprep.subr.mxu0 %v524
    %983 = vmatpush1.msra.mxu0 %v523
    %984 = vmatprep.subr.mxu0 %v526
    %985 = vmatpush1.msra.mxu0 %v525
    %986 = vmatprep.subr.mxu0 %v528
    %987 = vmatpush1.msra.mxu0 %v527
    %988 = vmatprep.subr.mxu0 %v530
    %989 = vmatpush1.msra.mxu0 %v529
    %990 = vmatprep.subr.mxu0 %v532
    %991 = vmatpush1.msra.mxu0 %v531
    %992 = vmatprep.subr.mxu0 %v534
    %993 = vmatpush1.msra.mxu0 %v533
    %994 = vmatprep.subr.mxu0 %v536
    %995 = vmatpush1.msra.mxu0 %v535
    %996 = vmatprep.subr.mxu0 %v538
    %997 = vmatpush1.msra.mxu0 %v537
    %998 = vmatprep.subr.mxu0 %v540
    %999 = vmatpush1.msra.mxu0 %v539
    %1000 = vmatprep.subr.mxu0 %v542
    %1001 = vmatpush1.msra.mxu0 %v541
    %1002 = vmatprep.subr.mxu0 0.0
    %1003 = vmatpush1.msra.mxu0 0.0
    %1004 = vmatprep.subr.mxu0 0.0
    %1005 = vmatpush1.msra.mxu0 0.0
    %1006 = vmatprep.subr.mxu0 0.0
    %1007 = vmatpush1.msra.mxu0 0.0
    %1008 = vmatprep.subr.mxu0 0.0
    %1009 = vmatpush1.msra.mxu0 0.0
    %1010 = vmatprep.subr.mxu0 0.0
    %1011 = vmatpush1.msra.mxu0 0.0
    %1012 = vmatprep.subr.mxu0 0.0
    %1013 = vmatpush1.msra.mxu0 0.0
    %1014 = vmatprep.subr.mxu0 0.0
    %1015 = vmatpush1.msra.mxu0 0.0
    %1016 = vmatprep.subr.mxu0 0.0
    %1017 = vmatpush1.msra.mxu0 0.0
    %1018 = vmatprep.subr.mxu0 0.0
    %1019 = vmatpush1.msra.mxu0 0.0
    %1020 = vmatprep.subr.mxu0 0.0
    %1021 = vmatpush1.msra.mxu0 0.0
    %1022 = vmatprep.subr.mxu0 0.0
    %1023 = vmatpush1.msra.mxu0 0.0
    %1024 = vmatprep.subr.mxu0 0.0
    %1025 = vmatpush1.msra.mxu0 0.0
    %1026 = vmatprep.subr.mxu0 0.0
    %1027 = vmatpush1.msra.mxu0 0.0
    %1028 = vmatprep.subr.mxu0 0.0
    %1029 = vmatpush1.msra.mxu0 0.0
    %1030 = vmatprep.subr.mxu0 0.0
    %1031 = vmatpush1.msra.mxu0 0.0
    %1032 = vmatprep.subr.mxu0 0.0
    %1033 = vmatpush1.msra.mxu0 0.0
    %1034 = vmatprep.subr.mxu0 0.0
    %1035 = vmatpush1.msra.mxu0 0.0
    %1036 = vmatprep.subr.mxu0 0.0
    %1037 = vmatpush1.msra.mxu0 0.0
    %1038 = vmatprep.subr.mxu0 0.0
    %1039 = vmatpush1.msra.mxu0 0.0
    %1040 = vmatprep.mubr.f32.mxu0 0.0
    %1041 = vmatmul.mubr.f32.gmra.mrb[0].mxu0 %v545
    %v1042 = vpop.f32.mrb[0].mxu0
    %v1043 = vadd.f32 0.0, %v1042
    %v1044 = vpop.f32.mrb[0].mxu0
    %v1045 = vadd.f32 0.0, %v1044
    %1046 = vmatprep.mubr.f32.mxu0 0.0
    %1047 = vmatmul.mubr.f32.gmra.mrb[0].mxu0 %v548
    %v1048 = vpop.f32.mrb[0].mxu0
    %v1049 = vadd.f32 0.0, %v1048
    %v1050 = vpop.f32.mrb[0].mxu0
    %v1051 = vadd.f32 0.0, %v1050
    %1052 = vmatprep.mubr.f32.mxu0 0.0
    %1053 = vmatmul.mubr.f32.gmra.mrb[0].mxu0 %v551
    %v1054 = vpop.f32.mrb[0].mxu0
    %v1055 = vadd.f32 0.0, %v1054
    %v1056 = vpop.f32.mrb[0].mxu0
    %v1057 = vadd.f32 0.0, %v1056
    %1058 = vmatprep.mubr.f32.mxu0 0.0
    %1059 = vmatmul.mubr.f32.gmra.mrb[0].mxu0 %v554
    %v1060 = vpop.f32.mrb[0].mxu0
    %v1061 = vadd.f32 0.0, %v1060
    %v1062 = vpop.f32.mrb[0].mxu0
    %v1063 = vadd.f32 0.0, %v1062
    %1064 = vmatprep.mubr.f32.mxu0 0.0
    %1065 = vmatmul.mubr.f32.gmra.mrb[0].mxu0 %v557
    %v1066 = vpop.f32.mrb[0].mxu0
    %v1067 = vadd.f32 0.0, %v1066
    %v1068 = vpop.f32.mrb[0].mxu0
    %v1069 = vadd.f32 0.0, %v1068
    %1070 = vmatprep.mubr.f32.mxu0 0.0
    %1071 = vmatmul.mubr.f32.gmra.mrb[0].mxu0 %v560
    %v1072 = vpop.f32.mrb[0].mxu0
    %v1073 = vadd.f32 0.0, %v1072
    %v1074 = vpop.f32.mrb[0].mxu0
    %v1075 = vadd.f32 0.0, %v1074
    %1076 = vmatprep.mubr.f32.mxu0 0.0
    %1077 = vmatmul.mubr.f32.gmra.mrb[0].mxu0 %v563
    %v1078 = vpop.f32.mrb[0].mxu0
    %v1079 = vadd.f32 0.0, %v1078
    %v1080 = vpop.f32.mrb[0].mxu0
    %v1081 = vadd.f32 0.0, %v1080
    %1082 = vmatprep.mubr.f32.mxu0 0.0
    %1083 = vmatmul.mubr.f32.gmra.mrb[0].mxu0 %v566
    %v1084 = vpop.f32.mrb[0].mxu0
    %v1085 = vadd.f32 0.0, %v1084
    %v1086 = vpop.f32.mrb[0].mxu0
    %v1087 = vadd.f32 0.0, %v1086
    %1088 = vmatprep.mubr.f32.mxu0 0.0
    %1089 = vmatmul.mubr.f32.gmra.mrb[0].mxu0 %v569
    %v1090 = vpop.f32.mrb[0].mxu0
    %v1091 = vadd.f32 0.0, %v1090
    %v1092 = vpop.f32.mrb[0].mxu0
    %v1093 = vadd.f32 0.0, %v1092
    %1094 = vmatprep.mubr.f32.mxu0 0.0
    %1095 = vmatmul.mubr.f32.gmra.mrb[0].mxu0 %v572
    %v1096 = vpop.f32.mrb[0].mxu0
    %v1097 = vadd.f32 0.0, %v1096
    %v1098 = vpop.f32.mrb[0].mxu0
    %v1099 = vadd.f32 0.0, %v1098
    %1100 = vmatprep.mubr.f32.mxu0 0.0
    %1101 = vmatmul.mubr.f32.gmra.mrb[0].mxu0 %v575
    %v1102 = vpop.f32.mrb[0].mxu0
    %v1103 = vadd.f32 0.0, %v1102
    %v1104 = vpop.f32.mrb[0].mxu0
    %v1105 = vadd.f32 0.0, %v1104
    %1106 = vmatprep.mubr.f32.mxu0 0.0
    %1107 = vmatmul.mubr.f32.gmra.mrb[0].mxu0 %v578
    %v1108 = vpop.f32.mrb[0].mxu0
    %v1109 = vadd.f32 0.0, %v1108
    %v1110 = vpop.f32.mrb[0].mxu0
    %v1111 = vadd.f32 0.0, %v1110
    %1112 = vmatprep.mubr.f32.mxu0 0.0
    %1113 = vmatmul.mubr.f32.gmra.mrb[0].mxu0 %v581
    %v1114 = vpop.f32.mrb[0].mxu0
    %v1115 = vadd.f32 0.0, %v1114
    %v1116 = vpop.f32.mrb[0].mxu0
    %v1117 = vadd.f32 0.0, %v1116
    %1118 = vmatprep.mubr.f32.mxu0 0.0
    %1119 = vmatmul.mubr.f32.gmra.mrb[0].mxu0 %v584
    %v1120 = vpop.f32.mrb[0].mxu0
    %v1121 = vadd.f32 0.0, %v1120
    %v1122 = vpop.f32.mrb[0].mxu0
    %v1123 = vadd.f32 0.0, %v1122
    %1124 = vmatprep.mubr.f32.mxu0 0.0
    %1125 = vmatmul.mubr.f32.gmra.mrb[0].mxu0 %v587
    %v1126 = vpop.f32.mrb[0].mxu0
    %v1127 = vadd.f32 0.0, %v1126
    %v1128 = vpop.f32.mrb[0].mxu0
    %v1129 = vadd.f32 0.0, %v1128
    %1130 = vmatprep.mubr.f32.mxu0 0.0
    %1131 = vmatmul.mubr.f32.gmra.mrb[0].mxu0 %v590
    %v1132 = vpop.f32.mrb[0].mxu0
    %v1133 = vadd.f32 0.0, %v1132
    %v1134 = vpop.f32.mrb[0].mxu0
    %v1135 = vadd.f32 0.0, %v1134
    %1136 = vmatprep.mubr.f32.mxu0 0.0
    %1137 = vmatmul.mubr.f32.gmra.mrb[0].mxu0 %v593
    %v1138 = vpop.f32.mrb[0].mxu0
    %v1139 = vadd.f32 0.0, %v1138
    %v1140 = vpop.f32.mrb[0].mxu0
    %v1141 = vadd.f32 0.0, %v1140
    %1142 = vmatprep.mubr.f32.mxu0 0.0
    %1143 = vmatmul.mubr.f32.gmra.mrb[0].mxu0 %v596
    %v1144 = vpop.f32.mrb[0].mxu0
    %v1145 = vadd.f32 0.0, %v1144
    %v1146 = vpop.f32.mrb[0].mxu0
    %v1147 = vadd.f32 0.0, %v1146
    %1148 = vmatprep.mubr.f32.mxu0 0.0
    %1149 = vmatmul.mubr.f32.gmra.mrb[0].mxu0 %v599
    %v1150 = vpop.f32.mrb[0].mxu0
    %v1151 = vadd.f32 0.0, %v1150
    %v1152 = vpop.f32.mrb[0].mxu0
    %v1153 = vadd.f32 0.0, %v1152
    %1154 = vmatprep.mubr.f32.mxu0 0.0
    %1155 = vmatmul.mubr.f32.gmra.mrb[0].mxu0 %v602
    %v1156 = vpop.f32.mrb[0].mxu0
    %v1157 = vadd.f32 0.0, %v1156
    %v1158 = vpop.f32.mrb[0].mxu0
    %v1159 = vadd.f32 0.0, %v1158
    %1160 = vmatprep.mubr.f32.mxu0 0.0
    %1161 = vmatmul.mubr.f32.gmra.mrb[0].mxu0 %v605
    %v1162 = vpop.f32.mrb[0].mxu0
    %v1163 = vadd.f32 0.0, %v1162
    %v1164 = vpop.f32.mrb[0].mxu0
    %v1165 = vadd.f32 0.0, %v1164
    %1166 = vmatprep.mubr.f32.mxu0 0.0
    %1167 = vmatmul.mubr.f32.gmra.mrb[0].mxu0 %v608
    %v1168 = vpop.f32.mrb[0].mxu0
    %v1169 = vadd.f32 0.0, %v1168
    %v1170 = vpop.f32.mrb[0].mxu0
    %v1171 = vadd.f32 0.0, %v1170
    %1172 = vmatprep.mubr.f32.mxu0 0.0
    %1173 = vmatmul.mubr.f32.gmra.mrb[0].mxu0 %v611
    %v1174 = vpop.f32.mrb[0].mxu0
    %v1175 = vadd.f32 0.0, %v1174
    %v1176 = vpop.f32.mrb[0].mxu0
    %v1177 = vadd.f32 0.0, %v1176
    %1178 = vmatprep.mubr.f32.mxu0 0.0
    %1179 = vmatmul.mubr.f32.gmra.mrb[0].mxu0 %v614
    %v1180 = vpop.f32.mrb[0].mxu0
    %v1181 = vadd.f32 0.0, %v1180
    %v1182 = vpop.f32.mrb[0].mxu0
    %v1183 = vadd.f32 0.0, %v1182
    %1184 = vmatprep.mubr.f32.mxu0 0.0
    %1185 = vmatmul.mubr.f32.gmra.mrb[0].mxu0 %v617
    %v1186 = vpop.f32.mrb[0].mxu0
    %v1187 = vadd.f32 0.0, %v1186
    %v1188 = vpop.f32.mrb[0].mxu0
    %v1189 = vadd.f32 0.0, %v1188
    %1190 = vmatprep.mubr.f32.mxu0 0.0
    %1191 = vmatmul.mubr.f32.gmra.mrb[0].mxu0 %v620
    %v1192 = vpop.f32.mrb[0].mxu0
    %v1193 = vadd.f32 0.0, %v1192
    %v1194 = vpop.f32.mrb[0].mxu0
    %v1195 = vadd.f32 0.0, %v1194
    %1196 = vmatprep.mubr.f32.mxu0 0.0
    %1197 = vmatmul.mubr.f32.gmra.mrb[0].mxu0 %v623
    %v1198 = vpop.f32.mrb[0].mxu0
    %v1199 = vadd.f32 0.0, %v1198
    %v1200 = vpop.f32.mrb[0].mxu0
    %v1201 = vadd.f32 0.0, %v1200
    %1202 = vmatprep.mubr.f32.mxu0 0.0
    %1203 = vmatmul.mubr.f32.gmra.mrb[0].mxu0 %v626
    %v1204 = vpop.f32.mrb[0].mxu0
    %v1205 = vadd.f32 0.0, %v1204
    %v1206 = vpop.f32.mrb[0].mxu0
    %v1207 = vadd.f32 0.0, %v1206
    %1208 = vmatprep.mubr.f32.mxu0 0.0
    %1209 = vmatmul.mubr.f32.gmra.mrb[0].mxu0 %v629
    %v1210 = vpop.f32.mrb[0].mxu0
    %v1211 = vadd.f32 0.0, %v1210
    %v1212 = vpop.f32.mrb[0].mxu0
    %v1213 = vadd.f32 0.0, %v1212
    %1214 = vmatprep.mubr.f32.mxu0 0.0
    %1215 = vmatmul.mubr.f32.gmra.mrb[0].mxu0 %v632
    %v1216 = vpop.f32.mrb[0].mxu0
    %v1217 = vadd.f32 0.0, %v1216
    %v1218 = vpop.f32.mrb[0].mxu0
    %v1219 = vadd.f32 0.0, %v1218
    %1220 = vmatprep.mubr.f32.mxu0 0.0
    %1221 = vmatmul.mubr.f32.gmra.mrb[0].mxu0 %v635
    %v1222 = vpop.f32.mrb[0].mxu0
    %v1223 = vadd.f32 0.0, %v1222
    %v1224 = vpop.f32.mrb[0].mxu0
    %v1225 = vadd.f32 0.0, %v1224
    %1226 = vmatprep.mubr.f32.mxu0 0.0
    %1227 = vmatmul.mubr.f32.gmra.mrb[0].mxu0 %v638
    %v1228 = vpop.f32.mrb[0].mxu0
    %v1229 = vadd.f32 0.0, %v1228
    %v1230 = vpop.f32.mrb[0].mxu0
    %v1231 = vadd.f32 0.0, %v1230
    %1232 = vmatprep.mubr.f32.mxu0 0.0
    %1233 = vmatmul.mubr.f32.gmra.mrb[0].mxu0 %v641
    %v1234 = vpop.f32.mrb[0].mxu0
    %v1235 = vadd.f32 0.0, %v1234
    %v1236 = vpop.f32.mrb[0].mxu0
    %v1237 = vadd.f32 0.0, %v1236
    %1238 = vmatprep.mubr.f32.mxu0 0.0
    %1239 = vmatmul.mubr.f32.gmra.mrb[0].mxu0 %v644
    %v1240 = vpop.f32.mrb[0].mxu0
    %v1241 = vadd.f32 0.0, %v1240
    %v1242 = vpop.f32.mrb[0].mxu0
    %v1243 = vadd.f32 0.0, %v1242
    %1244 = vmatprep.mubr.f32.mxu0 0.0
    %1245 = vmatmul.mubr.f32.gmra.mrb[0].mxu0 %v647
    %v1246 = vpop.f32.mrb[0].mxu0
    %v1247 = vadd.f32 0.0, %v1246
    %v1248 = vpop.f32.mrb[0].mxu0
    %v1249 = vadd.f32 0.0, %v1248
    %1250 = vmatprep.mubr.f32.mxu0 0.0
    %1251 = vmatmul.mubr.f32.gmra.mrb[0].mxu0 %v650
    %v1252 = vpop.f32.mrb[0].mxu0
    %v1253 = vadd.f32 0.0, %v1252
    %v1254 = vpop.f32.mrb[0].mxu0
    %v1255 = vadd.f32 0.0, %v1254
    %1256 = vmatprep.mubr.f32.mxu0 0.0
    %1257 = vmatmul.mubr.f32.gmra.mrb[0].mxu0 %v653
    %v1258 = vpop.f32.mrb[0].mxu0
    %v1259 = vadd.f32 0.0, %v1258
    %v1260 = vpop.f32.mrb[0].mxu0
    %v1261 = vadd.f32 0.0, %v1260
    %1262 = vmatprep.mubr.f32.mxu0 0.0
    %1263 = vmatmul.mubr.f32.gmra.mrb[0].mxu0 %v656
    %v1264 = vpop.f32.mrb[0].mxu0
    %v1265 = vadd.f32 0.0, %v1264
    %v1266 = vpop.f32.mrb[0].mxu0
    %v1267 = vadd.f32 0.0, %v1266
    %1268 = vmatprep.mubr.f32.mxu0 0.0
    %1269 = vmatmul.mubr.f32.gmra.mrb[0].mxu0 %v659
    %v1270 = vpop.f32.mrb[0].mxu0
    %v1271 = vadd.f32 0.0, %v1270
    %v1272 = vpop.f32.mrb[0].mxu0
    %v1273 = vadd.f32 0.0, %v1272
    %1274 = vmatprep.mubr.f32.mxu0 0.0
    %1275 = vmatmul.mubr.f32.gmra.mrb[0].mxu0 %v662
    %v1276 = vpop.f32.mrb[0].mxu0
    %v1277 = vadd.f32 0.0, %v1276
    %v1278 = vpop.f32.mrb[0].mxu0
    %v1279 = vadd.f32 0.0, %v1278
    %1280 = vmatprep.mubr.f32.mxu0 0.0
    %1281 = vmatmul.mubr.f32.gmra.mrb[0].mxu0 %v665
    %v1282 = vpop.f32.mrb[0].mxu0
    %v1283 = vadd.f32 0.0, %v1282
    %v1284 = vpop.f32.mrb[0].mxu0
    %v1285 = vadd.f32 0.0, %v1284
    %1286 = vmatprep.mubr.f32.mxu0 0.0
    %1287 = vmatmul.mubr.f32.gmra.mrb[0].mxu0 %v668
    %v1288 = vpop.f32.mrb[0].mxu0
    %v1289 = vadd.f32 0.0, %v1288
    %v1290 = vpop.f32.mrb[0].mxu0
    %v1291 = vadd.f32 0.0, %v1290
    %1292 = vmatprep.mubr.f32.mxu0 0.0
    %1293 = vmatmul.mubr.f32.gmra.mrb[0].mxu0 %v671
    %v1294 = vpop.f32.mrb[0].mxu0
    %v1295 = vadd.f32 0.0, %v1294
    %v1296 = vpop.f32.mrb[0].mxu0
    %v1297 = vadd.f32 0.0, %v1296
    %1298 = vmatprep.mubr.f32.mxu0 0.0
    %1299 = vmatmul.mubr.f32.gmra.mrb[0].mxu0 %v674
    %v1300 = vpop.f32.mrb[0].mxu0
    %v1301 = vadd.f32 0.0, %v1300
    %v1302 = vpop.f32.mrb[0].mxu0
    %v1303 = vadd.f32 0.0, %v1302
    %1304 = vmatprep.mubr.f32.mxu0 0.0
    %1305 = vmatmul.mubr.f32.gmra.mrb[0].mxu0 %v677
    %v1306 = vpop.f32.mrb[0].mxu0
    %v1307 = vadd.f32 0.0, %v1306
    %v1308 = vpop.f32.mrb[0].mxu0
    %v1309 = vadd.f32 0.0, %v1308
    %1310 = vmatprep.mubr.f32.mxu0 0.0
    %1311 = vmatmul.mubr.f32.gmra.mrb[0].mxu0 %v680
    %v1312 = vpop.f32.mrb[0].mxu0
    %v1313 = vadd.f32 0.0, %v1312
    %v1314 = vpop.f32.mrb[0].mxu0
    %v1315 = vadd.f32 0.0, %v1314
    %1316 = vmatprep.mubr.f32.mxu0 0.0
    %1317 = vmatmul.mubr.f32.gmra.mrb[0].mxu0 %v683
    %v1318 = vpop.f32.mrb[0].mxu0
    %v1319 = vadd.f32 0.0, %v1318
    %v1320 = vpop.f32.mrb[0].mxu0
    %v1321 = vadd.f32 0.0, %v1320
    %1322 = vmatprep.mubr.f32.mxu0 0.0
    %1323 = vmatmul.mubr.f32.gmra.mrb[0].mxu0 %v686
    %v1324 = vpop.f32.mrb[0].mxu0
    %v1325 = vadd.f32 0.0, %v1324
    %v1326 = vpop.f32.mrb[0].mxu0
    %v1327 = vadd.f32 0.0, %v1326
    %1328 = vmatprep.mubr.f32.mxu0 0.0
    %1329 = vmatmul.mubr.f32.gmra.mrb[0].mxu0 %v689
    %v1330 = vpop.f32.mrb[0].mxu0
    %v1331 = vadd.f32 0.0, %v1330
    %v1332 = vpop.f32.mrb[0].mxu0
    %v1333 = vadd.f32 0.0, %v1332
    %1334 = vmatprep.mubr.f32.mxu0 0.0
    %1335 = vmatmul.mubr.f32.gmra.mrb[0].mxu0 %v692
    %v1336 = vpop.f32.mrb[0].mxu0
    %v1337 = vadd.f32 0.0, %v1336
    %v1338 = vpop.f32.mrb[0].mxu0
    %v1339 = vadd.f32 0.0, %v1338
    %1340 = vmatprep.mubr.f32.mxu0 0.0
    %1341 = vmatmul.mubr.f32.gmra.mrb[0].mxu0 %v695
    %v1342 = vpop.f32.mrb[0].mxu0
    %v1343 = vadd.f32 0.0, %v1342
    %v1344 = vpop.f32.mrb[0].mxu0
    %v1345 = vadd.f32 0.0, %v1344
    %1346 = vmatprep.mubr.f32.mxu0 0.0
    %1347 = vmatmul.mubr.f32.gmra.mrb[0].mxu0 %v698
    %v1348 = vpop.f32.mrb[0].mxu0
    %v1349 = vadd.f32 0.0, %v1348
    %v1350 = vpop.f32.mrb[0].mxu0
    %v1351 = vadd.f32 0.0, %v1350
    %1352 = vmatprep.mubr.f32.mxu0 0.0
    %1353 = vmatmul.mubr.f32.gmra.mrb[0].mxu0 %v701
    %v1354 = vpop.f32.mrb[0].mxu0
    %v1355 = vadd.f32 0.0, %v1354
    %v1356 = vpop.f32.mrb[0].mxu0
    %v1357 = vadd.f32 0.0, %v1356
    %1358 = vmatprep.mubr.f32.mxu0 0.0
    %1359 = vmatmul.mubr.f32.gmra.mrb[0].mxu0 %v704
    %v1360 = vpop.f32.mrb[0].mxu0
    %v1361 = vadd.f32 0.0, %v1360
    %v1362 = vpop.f32.mrb[0].mxu0
    %v1363 = vadd.f32 0.0, %v1362
    %1364 = vmatprep.mubr.f32.mxu0 0.0
    %1365 = vmatmul.mubr.f32.gmra.mrb[0].mxu0 %v707
    %v1366 = vpop.f32.mrb[0].mxu0
    %v1367 = vadd.f32 0.0, %v1366
    %v1368 = vpop.f32.mrb[0].mxu0
    %v1369 = vadd.f32 0.0, %v1368
    %1370 = vmatprep.mubr.f32.mxu0 0.0
    %1371 = vmatmul.mubr.f32.gmra.mrb[0].mxu0 %v710
    %v1372 = vpop.f32.mrb[0].mxu0
    %v1373 = vadd.f32 0.0, %v1372
    %v1374 = vpop.f32.mrb[0].mxu0
    %v1375 = vadd.f32 0.0, %v1374
    %1376 = vmatprep.mubr.f32.mxu0 0.0
    %1377 = vmatmul.mubr.f32.gmra.mrb[0].mxu0 %v713
    %v1378 = vpop.f32.mrb[0].mxu0
    %v1379 = vadd.f32 0.0, %v1378
    %v1380 = vpop.f32.mrb[0].mxu0
    %v1381 = vadd.f32 0.0, %v1380
    %1382 = vmatprep.mubr.f32.mxu0 0.0
    %1383 = vmatmul.mubr.f32.gmra.mrb[0].mxu0 %v716
    %v1384 = vpop.f32.mrb[0].mxu0
    %v1385 = vadd.f32 0.0, %v1384
    %v1386 = vpop.f32.mrb[0].mxu0
    %v1387 = vadd.f32 0.0, %v1386
    %1388 = vmatprep.mubr.f32.mxu0 0.0
    %1389 = vmatmul.mubr.f32.gmra.mrb[0].mxu0 %v719
    %v1390 = vpop.f32.mrb[0].mxu0
    %v1391 = vadd.f32 0.0, %v1390
    %v1392 = vpop.f32.mrb[0].mxu0
    %v1393 = vadd.f32 0.0, %v1392
    %1394 = vmatprep.mubr.f32.mxu0 0.0
    %1395 = vmatmul.mubr.f32.gmra.mrb[0].mxu0 %v722
    %v1396 = vpop.f32.mrb[0].mxu0
    %v1397 = vadd.f32 0.0, %v1396
    %v1398 = vpop.f32.mrb[0].mxu0
    %v1399 = vadd.f32 0.0, %v1398
    %1400 = vmatprep.mubr.f32.mxu0 0.0
    %1401 = vmatmul.mubr.f32.gmra.mrb[0].mxu0 %v725
    %v1402 = vpop.f32.mrb[0].mxu0
    %v1403 = vadd.f32 0.0, %v1402
    %v1404 = vpop.f32.mrb[0].mxu0
    %v1405 = vadd.f32 0.0, %v1404
    %1406 = vmatprep.mubr.f32.mxu0 0.0
    %1407 = vmatmul.mubr.f32.gmra.mrb[0].mxu0 %v728
    %v1408 = vpop.f32.mrb[0].mxu0
    %v1409 = vadd.f32 0.0, %v1408
    %v1410 = vpop.f32.mrb[0].mxu0
    %v1411 = vadd.f32 0.0, %v1410
    %1412 = vmatprep.mubr.f32.mxu0 0.0
    %1413 = vmatmul.mubr.f32.gmra.mrb[0].mxu0 %v731
    %v1414 = vpop.f32.mrb[0].mxu0
    %v1415 = vadd.f32 0.0, %v1414
    %v1416 = vpop.f32.mrb[0].mxu0
    %v1417 = vadd.f32 0.0, %v1416
    %1418 = vmatprep.mubr.f32.mxu0 0.0
    %1419 = vmatmul.mubr.f32.gmra.mrb[0].mxu0 %v734
    %v1420 = vpop.f32.mrb[0].mxu0
    %v1421 = vadd.f32 0.0, %v1420
    %v1422 = vpop.f32.mrb[0].mxu0
    %v1423 = vadd.f32 0.0, %v1422
    %1424 = vmatprep.mubr.f32.mxu0 0.0
    %1425 = vmatmul.mubr.f32.gmra.mrb[0].mxu0 %v737
    %v1426 = vpop.f32.mrb[0].mxu0
    %v1427 = vadd.f32 0.0, %v1426
    %v1428 = vpop.f32.mrb[0].mxu0
    %v1429 = vadd.f32 0.0, %v1428
    %1430 = vmatprep.mubr.f32.mxu0 0.0
    %1431 = vmatmul.mubr.f32.gmra.mrb[0].mxu0 %v740
    %v1432 = vpop.f32.mrb[0].mxu0
    %v1433 = vadd.f32 0.0, %v1432
    %v1434 = vpop.f32.mrb[0].mxu0
    %v1435 = vadd.f32 0.0, %v1434
    %1436 = vmatprep.mubr.f32.mxu0 0.0
    %1437 = vmatmul.mubr.f32.gmra.mrb[0].mxu0 %v743
    %v1438 = vpop.f32.mrb[0].mxu0
    %v1439 = vadd.f32 0.0, %v1438
    %v1440 = vpop.f32.mrb[0].mxu0
    %v1441 = vadd.f32 0.0, %v1440
    %1442 = vmatprep.mubr.f32.mxu0 0.0
    %1443 = vmatmul.mubr.f32.gmra.mrb[0].mxu0 %v746
    %v1444 = vpop.f32.mrb[0].mxu0
    %v1445 = vadd.f32 0.0, %v1444
    %v1446 = vpop.f32.mrb[0].mxu0
    %v1447 = vadd.f32 0.0, %v1446
    %1448 = vmatprep.mubr.f32.mxu0 0.0
    %1449 = vmatmul.mubr.f32.gmra.mrb[0].mxu0 %v749
    %v1450 = vpop.f32.mrb[0].mxu0
    %v1451 = vadd.f32 0.0, %v1450
    %v1452 = vpop.f32.mrb[0].mxu0
    %v1453 = vadd.f32 0.0, %v1452
    %1454 = vmatprep.mubr.f32.mxu0 0.0
    %1455 = vmatmul.mubr.f32.gmra.mrb[0].mxu0 %v752
    %v1456 = vpop.f32.mrb[0].mxu0
    %v1457 = vadd.f32 0.0, %v1456
    %v1458 = vpop.f32.mrb[0].mxu0
    %v1459 = vadd.f32 0.0, %v1458
    %1460 = vmatprep.mubr.f32.mxu0 0.0
    %1461 = vmatmul.mubr.f32.gmra.mrb[0].mxu0 %v755
    %v1462 = vpop.f32.mrb[0].mxu0
    %v1463 = vadd.f32 0.0, %v1462
    %v1464 = vpop.f32.mrb[0].mxu0
    %v1465 = vadd.f32 0.0, %v1464
    %1466 = vmatprep.mubr.f32.mxu0 0.0
    %1467 = vmatmul.mubr.f32.gmra.mrb[0].mxu0 %v758
    %v1468 = vpop.f32.mrb[0].mxu0
    %v1469 = vadd.f32 0.0, %v1468
    %v1470 = vpop.f32.mrb[0].mxu0
    %v1471 = vadd.f32 0.0, %v1470
    %1472 = vmatprep.mubr.f32.mxu0 0.0
    %1473 = vmatmul.mubr.f32.gmra.mrb[0].mxu0 %v761
    %v1474 = vpop.f32.mrb[0].mxu0
    %v1475 = vadd.f32 0.0, %v1474
    %v1476 = vpop.f32.mrb[0].mxu0
    %v1477 = vadd.f32 0.0, %v1476
    %1478 = vmatprep.mubr.f32.mxu0 0.0
    %1479 = vmatmul.mubr.f32.gmra.mrb[0].mxu0 %v764
    %v1480 = vpop.f32.mrb[0].mxu0
    %v1481 = vadd.f32 0.0, %v1480
    %v1482 = vpop.f32.mrb[0].mxu0
    %v1483 = vadd.f32 0.0, %v1482
    %1484 = vmatprep.mubr.f32.mxu0 0.0
    %1485 = vmatmul.mubr.f32.gmra.mrb[0].mxu0 %v767
    %v1486 = vpop.f32.mrb[0].mxu0
    %v1487 = vadd.f32 0.0, %v1486
    %v1488 = vpop.f32.mrb[0].mxu0
    %v1489 = vadd.f32 0.0, %v1488
    %1490 = vmatprep.mubr.f32.mxu0 0.0
    %1491 = vmatmul.mubr.f32.gmra.mrb[0].mxu0 %v770
    %v1492 = vpop.f32.mrb[0].mxu0
    %v1493 = vadd.f32 0.0, %v1492
    %v1494 = vpop.f32.mrb[0].mxu0
    %v1495 = vadd.f32 0.0, %v1494
    %1496 = vmatprep.mubr.f32.mxu0 0.0
    %1497 = vmatmul.mubr.f32.gmra.mrb[0].mxu0 %v773
    %v1498 = vpop.f32.mrb[0].mxu0
    %v1499 = vadd.f32 0.0, %v1498
    %v1500 = vpop.f32.mrb[0].mxu0
    %v1501 = vadd.f32 0.0, %v1500
    %1502 = vmatprep.mubr.f32.mxu0 0.0
    %1503 = vmatmul.mubr.f32.gmra.mrb[0].mxu0 %v776
    %v1504 = vpop.f32.mrb[0].mxu0
    %v1505 = vadd.f32 0.0, %v1504
    %v1506 = vpop.f32.mrb[0].mxu0
    %v1507 = vadd.f32 0.0, %v1506
    %1508 = vmatprep.mubr.f32.mxu0 0.0
    %1509 = vmatmul.mubr.f32.gmra.mrb[0].mxu0 %v779
    %v1510 = vpop.f32.mrb[0].mxu0
    %v1511 = vadd.f32 0.0, %v1510
    %v1512 = vpop.f32.mrb[0].mxu0
    %v1513 = vadd.f32 0.0, %v1512
    %1514 = vmatprep.mubr.f32.mxu0 0.0
    %1515 = vmatmul.mubr.f32.gmra.mrb[0].mxu0 %v782
    %v1516 = vpop.f32.mrb[0].mxu0
    %v1517 = vadd.f32 0.0, %v1516
    %v1518 = vpop.f32.mrb[0].mxu0
    %v1519 = vadd.f32 0.0, %v1518
    %1520 = vmatprep.mubr.f32.mxu0 0.0
    %1521 = vmatmul.mubr.f32.gmra.mrb[0].mxu0 %v785
    %v1522 = vpop.f32.mrb[0].mxu0
    %v1523 = vadd.f32 0.0, %v1522
    %v1524 = vpop.f32.mrb[0].mxu0
    %v1525 = vadd.f32 0.0, %v1524
    %1526 = vmatprep.mubr.f32.mxu0 0.0
    %1527 = vmatmul.mubr.f32.gmra.mrb[0].mxu0 %v788
    %v1528 = vpop.f32.mrb[0].mxu0
    %v1529 = vadd.f32 0.0, %v1528
    %v1530 = vpop.f32.mrb[0].mxu0
    %v1531 = vadd.f32 0.0, %v1530
    %1532 = vmatprep.mubr.f32.mxu0 0.0
    %1533 = vmatmul.mubr.f32.gmra.mrb[0].mxu0 %v791
    %v1534 = vpop.f32.mrb[0].mxu0
    %v1535 = vadd.f32 0.0, %v1534
    %v1536 = vpop.f32.mrb[0].mxu0
    %v1537 = vadd.f32 0.0, %v1536
    %1538 = vmatprep.mubr.f32.mxu0 0.0
    %1539 = vmatmul.mubr.f32.gmra.mrb[0].mxu0 %v794
    %v1540 = vpop.f32.mrb[0].mxu0
    %v1541 = vadd.f32 0.0, %v1540
    %v1542 = vpop.f32.mrb[0].mxu0
    %v1543 = vadd.f32 0.0, %v1542
    %1544 = vmatprep.mubr.f32.mxu0 0.0
    %1545 = vmatmul.mubr.f32.gmra.mrb[0].mxu0 %v797
    %v1546 = vpop.f32.mrb[0].mxu0
    %v1547 = vadd.f32 0.0, %v1546
    %v1548 = vpop.f32.mrb[0].mxu0
    %v1549 = vadd.f32 0.0, %v1548
    %1550 = vmatprep.mubr.f32.mxu0 0.0
    %1551 = vmatmul.mubr.f32.gmra.mrb[0].mxu0 %v800
    %v1552 = vpop.f32.mrb[0].mxu0
    %v1553 = vadd.f32 0.0, %v1552
    %v1554 = vpop.f32.mrb[0].mxu0
    %v1555 = vadd.f32 0.0, %v1554
    %1556 = vmatprep.mubr.f32.mxu0 0.0
    %1557 = vmatmul.mubr.f32.gmra.mrb[0].mxu0 %v803
    %v1558 = vpop.f32.mrb[0].mxu0
    %v1559 = vadd.f32 0.0, %v1558
    %v1560 = vpop.f32.mrb[0].mxu0
    %v1561 = vadd.f32 0.0, %v1560
    %1562 = vmatprep.mubr.f32.mxu0 0.0
    %1563 = vmatmul.mubr.f32.gmra.mrb[0].mxu0 %v806
    %v1564 = vpop.f32.mrb[0].mxu0
    %v1565 = vadd.f32 0.0, %v1564
    %v1566 = vpop.f32.mrb[0].mxu0
    %v1567 = vadd.f32 0.0, %v1566
    %1568 = vmatprep.mubr.f32.mxu0 0.0
    %1569 = vmatmul.mubr.f32.gmra.mrb[0].mxu0 %v809
    %v1570 = vpop.f32.mrb[0].mxu0
    %v1571 = vadd.f32 0.0, %v1570
    %v1572 = vpop.f32.mrb[0].mxu0
    %v1573 = vadd.f32 0.0, %v1572
    %1574 = vmatprep.mubr.f32.mxu0 0.0
    %1575 = vmatmul.mubr.f32.gmra.mrb[0].mxu0 %v812
    %v1576 = vpop.f32.mrb[0].mxu0
    %v1577 = vadd.f32 0.0, %v1576
    %v1578 = vpop.f32.mrb[0].mxu0
    %v1579 = vadd.f32 0.0, %v1578
    %1580 = vmatprep.mubr.f32.mxu0 0.0
    %1581 = vmatmul.mubr.f32.gmra.mrb[0].mxu0 %v815
    %v1582 = vpop.f32.mrb[0].mxu0
    %v1583 = vadd.f32 0.0, %v1582
    %v1584 = vpop.f32.mrb[0].mxu0
    %v1585 = vadd.f32 0.0, %v1584
    %1586 = vmatprep.mubr.f32.mxu0 0.0
    %1587 = vmatmul.mubr.f32.gmra.mrb[0].mxu0 %v818
    %v1588 = vpop.f32.mrb[0].mxu0
    %v1589 = vadd.f32 0.0, %v1588
    %v1590 = vpop.f32.mrb[0].mxu0
    %v1591 = vadd.f32 0.0, %v1590
    %1592 = vmatprep.mubr.f32.mxu0 0.0
    %1593 = vmatmul.mubr.f32.gmra.mrb[0].mxu0 %v821
    %v1594 = vpop.f32.mrb[0].mxu0
    %v1595 = vadd.f32 0.0, %v1594
    %v1596 = vpop.f32.mrb[0].mxu0
    %v1597 = vadd.f32 0.0, %v1596
    %1598 = vmatprep.mubr.f32.mxu0 0.0
    %1599 = vmatmul.mubr.f32.gmra.mrb[0].mxu0 %v824
    %v1600 = vpop.f32.mrb[0].mxu0
    %v1601 = vadd.f32 0.0, %v1600
    %v1602 = vpop.f32.mrb[0].mxu0
    %v1603 = vadd.f32 0.0, %v1602
    %1604 = vmatprep.mubr.f32.mxu0 0.0
    %1605 = vmatmul.mubr.f32.gmra.mrb[0].mxu0 %v827
    %v1606 = vpop.f32.mrb[0].mxu0
    %v1607 = vadd.f32 0.0, %v1606
    %v1608 = vpop.f32.mrb[0].mxu0
    %v1609 = vadd.f32 0.0, %v1608
    %1610 = vmatprep.mubr.f32.mxu0 0.0
    %1611 = vmatmul.mubr.f32.gmra.mrb[0].mxu0 %v830
    %v1612 = vpop.f32.mrb[0].mxu0
    %v1613 = vadd.f32 0.0, %v1612
    %v1614 = vpop.f32.mrb[0].mxu0
    %v1615 = vadd.f32 0.0, %v1614
    %1616 = vmatprep.mubr.f32.mxu0 0.0
    %1617 = vmatmul.mubr.f32.gmra.mrb[0].mxu0 %v833
    %v1618 = vpop.f32.mrb[0].mxu0
    %v1619 = vadd.f32 0.0, %v1618
    %v1620 = vpop.f32.mrb[0].mxu0
    %v1621 = vadd.f32 0.0, %v1620
    %1622 = vmatprep.mubr.f32.mxu0 0.0
    %1623 = vmatmul.mubr.f32.gmra.mrb[0].mxu0 %v836
    %v1624 = vpop.f32.mrb[0].mxu0
    %v1625 = vadd.f32 0.0, %v1624
    %v1626 = vpop.f32.mrb[0].mxu0
    %v1627 = vadd.f32 0.0, %v1626
    %1628 = vmatprep.mubr.f32.mxu0 0.0
    %1629 = vmatmul.mubr.f32.gmra.mrb[0].mxu0 %v839
    %v1630 = vpop.f32.mrb[0].mxu0
    %v1631 = vadd.f32 0.0, %v1630
    %v1632 = vpop.f32.mrb[0].mxu0
    %v1633 = vadd.f32 0.0, %v1632
    %1634 = vmatprep.mubr.f32.mxu0 0.0
    %1635 = vmatmul.mubr.f32.gmra.mrb[0].mxu0 %v842
    %v1636 = vpop.f32.mrb[0].mxu0
    %v1637 = vadd.f32 0.0, %v1636
    %v1638 = vpop.f32.mrb[0].mxu0
    %v1639 = vadd.f32 0.0, %v1638
    %1640 = vmatprep.mubr.f32.mxu0 0.0
    %1641 = vmatmul.mubr.f32.gmra.mrb[0].mxu0 %v845
    %v1642 = vpop.f32.mrb[0].mxu0
    %v1643 = vadd.f32 0.0, %v1642
    %v1644 = vpop.f32.mrb[0].mxu0
    %v1645 = vadd.f32 0.0, %v1644
    %1646 = vmatprep.mubr.f32.mxu0 0.0
    %1647 = vmatmul.mubr.f32.gmra.mrb[0].mxu0 %v848
    %v1648 = vpop.f32.mrb[0].mxu0
    %v1649 = vadd.f32 0.0, %v1648
    %v1650 = vpop.f32.mrb[0].mxu0
    %v1651 = vadd.f32 0.0, %v1650
    %1652 = vmatprep.mubr.f32.mxu0 0.0
    %1653 = vmatmul.mubr.f32.gmra.mrb[0].mxu0 %v851
    %v1654 = vpop.f32.mrb[0].mxu0
    %v1655 = vadd.f32 0.0, %v1654
    %v1656 = vpop.f32.mrb[0].mxu0
    %v1657 = vadd.f32 0.0, %v1656
    %1658 = vmatprep.mubr.f32.mxu0 0.0
    %1659 = vmatmul.mubr.f32.gmra.mrb[0].mxu0 %v854
    %v1660 = vpop.f32.mrb[0].mxu0
    %v1661 = vadd.f32 0.0, %v1660
    %v1662 = vpop.f32.mrb[0].mxu0
    %v1663 = vadd.f32 0.0, %v1662
    %1664 = vmatprep.mubr.f32.mxu0 0.0
    %1665 = vmatmul.mubr.f32.gmra.mrb[0].mxu0 %v857
    %v1666 = vpop.f32.mrb[0].mxu0
    %v1667 = vadd.f32 0.0, %v1666
    %v1668 = vpop.f32.mrb[0].mxu0
    %v1669 = vadd.f32 0.0, %v1668
    %1670 = vmatprep.mubr.f32.mxu0 0.0
    %1671 = vmatmul.mubr.f32.gmra.mrb[0].mxu0 %v860
    %v1672 = vpop.f32.mrb[0].mxu0
    %v1673 = vadd.f32 0.0, %v1672
    %v1674 = vpop.f32.mrb[0].mxu0
    %v1675 = vadd.f32 0.0, %v1674
    %1676 = vmatprep.mubr.f32.mxu0 0.0
    %1677 = vmatmul.mubr.f32.gmra.mrb[0].mxu0 %v863
    %v1678 = vpop.f32.mrb[0].mxu0
    %v1679 = vadd.f32 0.0, %v1678
    %v1680 = vpop.f32.mrb[0].mxu0
    %v1681 = vadd.f32 0.0, %v1680
    %1682 = vmatprep.mubr.f32.mxu0 0.0
    %1683 = vmatmul.mubr.f32.gmra.mrb[0].mxu0 %v866
    %v1684 = vpop.f32.mrb[0].mxu0
    %v1685 = vadd.f32 0.0, %v1684
    %v1686 = vpop.f32.mrb[0].mxu0
    %v1687 = vadd.f32 0.0, %v1686
    %1688 = vmatprep.mubr.f32.mxu0 0.0
    %1689 = vmatmul.mubr.f32.gmra.mrb[0].mxu0 %v869
    %v1690 = vpop.f32.mrb[0].mxu0
    %v1691 = vadd.f32 0.0, %v1690
    %v1692 = vpop.f32.mrb[0].mxu0
    %v1693 = vadd.f32 0.0, %v1692
    %1694 = vmatprep.mubr.f32.mxu0 0.0
    %1695 = vmatmul.mubr.f32.gmra.mrb[0].mxu0 %v872
    %v1696 = vpop.f32.mrb[0].mxu0
    %v1697 = vadd.f32 0.0, %v1696
    %v1698 = vpop.f32.mrb[0].mxu0
    %v1699 = vadd.f32 0.0, %v1698
    %1700 = vmatprep.mubr.f32.mxu0 0.0
    %1701 = vmatmul.mubr.f32.gmra.mrb[0].mxu0 %v875
    %v1702 = vpop.f32.mrb[0].mxu0
    %v1703 = vadd.f32 0.0, %v1702
    %v1704 = vpop.f32.mrb[0].mxu0
    %v1705 = vadd.f32 0.0, %v1704
    %1706 = vmatprep.mubr.f32.mxu0 0.0
    %1707 = vmatmul.mubr.f32.gmra.mrb[0].mxu0 %v878
    %v1708 = vpop.f32.mrb[0].mxu0
    %v1709 = vadd.f32 0.0, %v1708
    %v1710 = vpop.f32.mrb[0].mxu0
    %v1711 = vadd.f32 0.0, %v1710
    %1712 = vmatprep.mubr.f32.mxu0 0.0
    %1713 = vmatmul.mubr.f32.gmra.mrb[0].mxu0 %v881
    %v1714 = vpop.f32.mrb[0].mxu0
    %v1715 = vadd.f32 0.0, %v1714
    %v1716 = vpop.f32.mrb[0].mxu0
    %v1717 = vadd.f32 0.0, %v1716
    %1718 = vmatprep.mubr.f32.mxu0 0.0
    %1719 = vmatmul.mubr.f32.gmra.mrb[0].mxu0 %v884
    %v1720 = vpop.f32.mrb[0].mxu0
    %v1721 = vadd.f32 0.0, %v1720
    %v1722 = vpop.f32.mrb[0].mxu0
    %v1723 = vadd.f32 0.0, %v1722
    %1724 = vmatprep.mubr.f32.mxu0 0.0
    %1725 = vmatmul.mubr.f32.gmra.mrb[0].mxu0 %v887
    %v1726 = vpop.f32.mrb[0].mxu0
    %v1727 = vadd.f32 0.0, %v1726
    %v1728 = vpop.f32.mrb[0].mxu0
    %v1729 = vadd.f32 0.0, %v1728
    %1730 = vmatprep.mubr.f32.mxu0 0.0
    %1731 = vmatmul.mubr.f32.gmra.mrb[0].mxu0 %v890
    %v1732 = vpop.f32.mrb[0].mxu0
    %v1733 = vadd.f32 0.0, %v1732
    %v1734 = vpop.f32.mrb[0].mxu0
    %v1735 = vadd.f32 0.0, %v1734
    %1736 = vmatprep.mubr.f32.mxu0 0.0
    %1737 = vmatmul.mubr.f32.gmra.mrb[0].mxu0 %v893
    %v1738 = vpop.f32.mrb[0].mxu0
    %v1739 = vadd.f32 0.0, %v1738
    %v1740 = vpop.f32.mrb[0].mxu0
    %v1741 = vadd.f32 0.0, %v1740
    %1742 = vmatprep.mubr.f32.mxu0 0.0
    %1743 = vmatmul.mubr.f32.gmra.mrb[0].mxu0 %v896
    %v1744 = vpop.f32.mrb[0].mxu0
    %v1745 = vadd.f32 0.0, %v1744
    %v1746 = vpop.f32.mrb[0].mxu0
    %v1747 = vadd.f32 0.0, %v1746
    %1748 = vmatprep.mubr.f32.mxu0 0.0
    %1749 = vmatmul.mubr.f32.gmra.mrb[0].mxu0 %v899
    %v1750 = vpop.f32.mrb[0].mxu0
    %v1751 = vadd.f32 0.0, %v1750
    %v1752 = vpop.f32.mrb[0].mxu0
    %v1753 = vadd.f32 0.0, %v1752
    %1754 = vmatprep.mubr.f32.mxu0 0.0
    %1755 = vmatmul.mubr.f32.gmra.mrb[0].mxu0 %v902
    %v1756 = vpop.f32.mrb[0].mxu0
    %v1757 = vadd.f32 0.0, %v1756
    %v1758 = vpop.f32.mrb[0].mxu0
    %v1759 = vadd.f32 0.0, %v1758
    %1760 = vmatprep.mubr.f32.mxu0 0.0
    %1761 = vmatmul.mubr.f32.gmra.mrb[0].mxu0 %v905
    %v1762 = vpop.f32.mrb[0].mxu0
    %v1763 = vadd.f32 0.0, %v1762
    %v1764 = vpop.f32.mrb[0].mxu0
    %v1765 = vadd.f32 0.0, %v1764
    %1766 = vmatprep.mubr.f32.mxu0 0.0
    %1767 = vmatmul.mubr.f32.gmra.mrb[0].mxu0 %v908
    %v1768 = vpop.f32.mrb[0].mxu0
    %v1769 = vadd.f32 0.0, %v1768
    %v1770 = vpop.f32.mrb[0].mxu0
    %v1771 = vadd.f32 0.0, %v1770
    %1772 = vmatprep.mubr.f32.mxu0 0.0
    %1773 = vmatmul.mubr.f32.gmra.mrb[0].mxu0 %v911
    %v1774 = vpop.f32.mrb[0].mxu0
    %v1775 = vadd.f32 0.0, %v1774
    %v1776 = vpop.f32.mrb[0].mxu0
    %v1777 = vadd.f32 0.0, %v1776
    %1778 = vmatprep.mubr.f32.mxu0 0.0
    %1779 = vmatmul.mubr.f32.gmra.mrb[0].mxu0 %v914
    %v1780 = vpop.f32.mrb[0].mxu0
    %v1781 = vadd.f32 0.0, %v1780
    %v1782 = vpop.f32.mrb[0].mxu0
    %v1783 = vadd.f32 0.0, %v1782
    %1784 = vmatprep.mubr.f32.mxu0 0.0
    %1785 = vmatmul.mubr.f32.gmra.mrb[0].mxu0 %v917
    %v1786 = vpop.f32.mrb[0].mxu0
    %v1787 = vadd.f32 0.0, %v1786
    %v1788 = vpop.f32.mrb[0].mxu0
    %v1789 = vadd.f32 0.0, %v1788
    %1790 = vmatprep.mubr.f32.mxu0 0.0
    %1791 = vmatmul.mubr.f32.gmra.mrb[0].mxu0 %v920
    %v1792 = vpop.f32.mrb[0].mxu0
    %v1793 = vadd.f32 0.0, %v1792
    %v1794 = vpop.f32.mrb[0].mxu0
    %v1795 = vadd.f32 0.0, %v1794
    %1796 = vmatprep.mubr.f32.mxu0 0.0
    %1797 = vmatmul.mubr.f32.gmra.mrb[0].mxu0 %v923
    %v1798 = vpop.f32.mrb[0].mxu0
    %v1799 = vadd.f32 0.0, %v1798
    %v1800 = vpop.f32.mrb[0].mxu0
    %v1801 = vadd.f32 0.0, %v1800
    %1802 = vmatprep.mubr.f32.mxu0 0.0
    %1803 = vmatmul.mubr.f32.gmra.mrb[0].mxu0 %v926
    %v1804 = vpop.f32.mrb[0].mxu0
    %v1805 = vadd.f32 0.0, %v1804
    %v1806 = vpop.f32.mrb[0].mxu0
    %v1807 = vadd.f32 0.0, %v1806
    %1808 = vmatprep.mubr.f32.mxu0 0.0
    %1809 = vmatmul.mubr.f32.gmra.mrb[0].mxu0 %v929
    %v1810 = vpop.f32.mrb[0].mxu0
    %v1811 = vadd.f32 0.0, %v1810
    %v1812 = vpop.f32.mrb[0].mxu0
    %v1813 = vadd.f32 0.0, %v1812
    %1814 = vmatprep.mubr.f32.mxu0 0.0
    %1815 = vmatmul.mubr.f32.gmra.mrb[0].mxu0 %v932
    %v1816 = vpop.f32.mrb[0].mxu0
    %v1817 = vadd.f32 0.0, %v1816
    %v1818 = vpop.f32.mrb[0].mxu0
    %v1819 = vadd.f32 0.0, %v1818
    %1820 = vmatprep.mubr.f32.mxu0 0.0
    %1821 = vmatmul.mubr.f32.gmra.mrb[0].mxu0 %v935
    %v1822 = vpop.f32.mrb[0].mxu0
    %v1823 = vadd.f32 0.0, %v1822
    %v1824 = vpop.f32.mrb[0].mxu0
    %v1825 = vadd.f32 0.0, %v1824
    %1826 = vmatprep.mubr.f32.mxu0 0.0
    %1827 = vmatmul.mubr.f32.gmra.mrb[0].mxu0 %v938
    %v1828 = vpop.f32.mrb[0].mxu0
    %v1829 = vadd.f32 0.0, %v1828
    %v1830 = vpop.f32.mrb[0].mxu0
    %v1831 = vadd.f32 0.0, %v1830
    %1832 = vmatprep.mubr.f32.mxu0 0.0
    %1833 = vmatmul.mubr.f32.gmra.mrb[0].mxu0 %v941
    %v1834 = vpop.f32.mrb[0].mxu0
    %v1835 = vadd.f32 0.0, %v1834
    %v1836 = vpop.f32.mrb[0].mxu0
    %v1837 = vadd.f32 0.0, %v1836
    %1838 = vmatprep.mubr.f32.mxu0 0.0
    %1839 = vmatmul.mubr.f32.gmra.mrb[0].mxu0 %v944
    %v1840 = vpop.f32.mrb[0].mxu0
    %v1841 = vadd.f32 0.0, %v1840
    %v1842 = vpop.f32.mrb[0].mxu0
    %v1843 = vadd.f32 0.0, %v1842
    %1844 = vmatprep.mubr.f32.mxu0 0.0
    %1845 = vmatmul.mubr.f32.gmra.mrb[0].mxu0 %v947
    %v1846 = vpop.f32.mrb[0].mxu0
    %v1847 = vadd.f32 0.0, %v1846
    %v1848 = vpop.f32.mrb[0].mxu0
    %v1849 = vadd.f32 0.0, %v1848
    %1850 = vmatprep.mubr.f32.mxu0 0.0
    %1851 = vmatmul.mubr.f32.gmra.mrb[0].mxu0 %v950
    %v1852 = vpop.f32.mrb[0].mxu0
    %v1853 = vadd.f32 0.0, %v1852
    %v1854 = vpop.f32.mrb[0].mxu0
    %v1855 = vadd.f32 0.0, %v1854
    %1856 = vmatprep.mubr.f32.mxu0 0.0
    %1857 = vmatmul.mubr.f32.gmra.mrb[0].mxu0 %v953
    %v1858 = vpop.f32.mrb[0].mxu0
    %v1859 = vadd.f32 0.0, %v1858
    %v1860 = vpop.f32.mrb[0].mxu0
    %v1861 = vadd.f32 0.0, %v1860
    %1862 = vmatprep.mubr.f32.mxu0 0.0
    %1863 = vmatmul.mubr.f32.gmra.mrb[0].mxu0 %v956
    %v1864 = vpop.f32.mrb[0].mxu0
    %v1865 = vadd.f32 0.0, %v1864
    %v1866 = vpop.f32.mrb[0].mxu0
    %v1867 = vadd.f32 0.0, %v1866
    %1868 = vmatprep.mubr.f32.mxu0 0.0
    %1869 = vmatmul.mubr.f32.gmra.mrb[0].mxu0 %v959
    %v1870 = vpop.f32.mrb[0].mxu0
    %v1871 = vadd.f32 0.0, %v1870
    %v1872 = vpop.f32.mrb[0].mxu0
    %v1873 = vadd.f32 0.0, %v1872
    %1874 = vmatprep.mubr.f32.mxu0 0.0
    %1875 = vmatmul.mubr.f32.gmra.mrb[0].mxu0 %v962
    %v1876 = vpop.f32.mrb[0].mxu0
    %v1877 = vadd.f32 0.0, %v1876
    %v1878 = vpop.f32.mrb[0].mxu0
    %v1879 = vadd.f32 0.0, %v1878
    %1880 = vmatprep.mubr.f32.mxu0 0.0
    %1881 = vmatmul.mubr.f32.gmra.mrb[0].mxu0 %v965
    %v1882 = vpop.f32.mrb[0].mxu0
    %v1883 = vadd.f32 0.0, %v1882
    %v1884 = vpop.f32.mrb[0].mxu0
    %v1885 = vadd.f32 0.0, %v1884
    %1886 = vmatprep.mubr.f32.mxu0 0.0
    %1887 = vmatmul.mubr.f32.gmra.mrb[0].mxu0 %v968
    %v1888 = vpop.f32.mrb[0].mxu0
    %v1889 = vadd.f32 0.0, %v1888
    %v1890 = vpop.f32.mrb[0].mxu0
    %v1891 = vadd.f32 0.0, %v1890
    %1892 = vmatprep.mubr.f32.mxu0 0.0
    %1893 = vmatmul.mubr.f32.gmra.mrb[0].mxu0 %v971
    %v1894 = vpop.f32.mrb[0].mxu0
    %v1895 = vadd.f32 0.0, %v1894
    %v1896 = vpop.f32.mrb[0].mxu0
    %v1897 = vadd.f32 0.0, %v1896
    %1898 = vmatprep.mubr.f32.mxu0 0.0
    %1899 = vmatmul.mubr.f32.gmra.mrb[0].mxu0 %v974
    %v1900 = vpop.f32.mrb[0].mxu0
    %v1901 = vadd.f32 0.0, %v1900
    %v1902 = vpop.f32.mrb[0].mxu0
    %v1903 = vadd.f32 0.0, %v1902
    %1904 = vdwg.mxu0
    %1905 = vst [vmem:[#allocation3] sm:$0xff] %v1043
    %1906 = vst [vmem:[#allocation3 + $0x8] sm:$0xff] %v1045
    %1907 = vst [vmem:[#allocation3 + $0x10] sm:$0xff] %v1049
    %1908 = vst [vmem:[#allocation3 + $0x18] sm:$0xff] %v1051
    %1909 = vst [vmem:[#allocation3 + $0x20] sm:$0xff] %v1055
    %1910 = vst [vmem:[#allocation3 + $0x28] sm:$0xff] %v1057
    %1911 = vst [vmem:[#allocation3 + $0x30] sm:$0xff] %v1061
    %1912 = vst [vmem:[#allocation3 + $0x38] sm:$0xff] %v1063
    %1913 = vst [vmem:[#allocation3 + $0x40] sm:$0xff] %v1067
    %1914 = vst [vmem:[#allocation3 + $0x48] sm:$0xff] %v1069
    %1915 = vst [vmem:[#allocation3 + $0x50] sm:$0xff] %v1073
    %1916 = vst [vmem:[#allocation3 + $0x58] sm:$0xff] %v1075
    %1917 = vst [vmem:[#allocation3 + $0x60] sm:$0xff] %v1079
    %1918 = vst [vmem:[#allocation3 + $0x68] sm:$0xff] %v1081
    %1919 = vst [vmem:[#allocation3 + $0x70] sm:$0xff] %v1085
    %1920 = vst [vmem:[#allocation3 + $0x78] sm:$0xff] %v1087
    %1921 = vst [vmem:[#allocation3 + $0x80] sm:$0xff] %v1091
    %1922 = vst [vmem:[#allocation3 + $0x88] sm:$0xff] %v1093
    %1923 = vst [vmem:[#allocation3 + $0x90] sm:$0xff] %v1097
    %1924 = vst [vmem:[#allocation3 + $0x98] sm:$0xff] %v1099
    %1925 = vst [vmem:[#allocation3 + $0xa0] sm:$0xff] %v1103
    %1926 = vst [vmem:[#allocation3 + $0xa8] sm:$0xff] %v1105
    %1927 = vst [vmem:[#allocation3 + $0xb0] sm:$0xff] %v1109
    %1928 = vst [vmem:[#allocation3 + $0xb8] sm:$0xff] %v1111
    %1929 = vst [vmem:[#allocation3 + $0xc0] sm:$0xff] %v1115
    %1930 = vst [vmem:[#allocation3 + $0xc8] sm:$0xff] %v1117
    %1931 = vst [vmem:[#allocation3 + $0xd0] sm:$0xff] %v1121
    %1932 = vst [vmem:[#allocation3 + $0xd8] sm:$0xff] %v1123
    %1933 = vst [vmem:[#allocation3 + $0xe0] sm:$0xff] %v1127
    %1934 = vst [vmem:[#allocation3 + $0xe8] sm:$0xff] %v1129
    %1935 = vst [vmem:[#allocation3 + $0xf0] sm:$0xff] %v1133
    %1936 = vst [vmem:[#allocation3 + $0xf8] sm:$0xff] %v1135
    %1937 = vst [vmem:[#allocation3 + $0x100] sm:$0xff] %v1139
    %1938 = vst [vmem:[#allocation3 + $0x108] sm:$0xff] %v1141
    %1939 = vst [vmem:[#allocation3 + $0x110] sm:$0xff] %v1145
    %1940 = vst [vmem:[#allocation3 + $0x118] sm:$0xff] %v1147
    %1941 = vst [vmem:[#allocation3 + $0x120] sm:$0xff] %v1151
    %1942 = vst [vmem:[#allocation3 + $0x128] sm:$0xff] %v1153
    %1943 = vst [vmem:[#allocation3 + $0x130] sm:$0xff] %v1157
    %1944 = vst [vmem:[#allocation3 + $0x138] sm:$0xff] %v1159
    %1945 = vst [vmem:[#allocation3 + $0x140] sm:$0xff] %v1163
    %1946 = vst [vmem:[#allocation3 + $0x148] sm:$0xff] %v1165
    %1947 = vst [vmem:[#allocation3 + $0x150] sm:$0xff] %v1169
    %1948 = vst [vmem:[#allocation3 + $0x158] sm:$0xff] %v1171
    %1949 = vst [vmem:[#allocation3 + $0x160] sm:$0xff] %v1175
    %1950 = vst [vmem:[#allocation3 + $0x168] sm:$0xff] %v1177
    %1951 = vst [vmem:[#allocation3 + $0x170] sm:$0xff] %v1181
    %1952 = vst [vmem:[#allocation3 + $0x178] sm:$0xff] %v1183
    %1953 = vst [vmem:[#allocation3 + $0x180] sm:$0xff] %v1187
    %1954 = vst [vmem:[#allocation3 + $0x188] sm:$0xff] %v1189
    %1955 = vst [vmem:[#allocation3 + $0x190] sm:$0xff] %v1193
    %1956 = vst [vmem:[#allocation3 + $0x198] sm:$0xff] %v1195
    %1957 = vst [vmem:[#allocation3 + $0x1a0] sm:$0xff] %v1199
    %1958 = vst [vmem:[#allocation3 + $0x1a8] sm:$0xff] %v1201
    %1959 = vst [vmem:[#allocation3 + $0x1b0] sm:$0xff] %v1205
    %1960 = vst [vmem:[#allocation3 + $0x1b8] sm:$0xff] %v1207
    %1961 = vst [vmem:[#allocation3 + $0x1c0] sm:$0xff] %v1211
    %1962 = vst [vmem:[#allocation3 + $0x1c8] sm:$0xff] %v1213
    %1963 = vst [vmem:[#allocation3 + $0x1d0] sm:$0xff] %v1217
    %1964 = vst [vmem:[#allocation3 + $0x1d8] sm:$0xff] %v1219
    %1965 = vst [vmem:[#allocation3 + $0x1e0] sm:$0xff] %v1223
    %1966 = vst [vmem:[#allocation3 + $0x1e8] sm:$0xff] %v1225
    %1967 = vst [vmem:[#allocation3 + $0x1f0] sm:$0xff] %v1229
    %1968 = vst [vmem:[#allocation3 + $0x1f8] sm:$0xff] %v1231
    %1969 = vst [vmem:[#allocation3 + $0x200] sm:$0xff] %v1235
    %1970 = vst [vmem:[#allocation3 + $0x208] sm:$0xff] %v1237
    %1971 = vst [vmem:[#allocation3 + $0x210] sm:$0xff] %v1241
    %1972 = vst [vmem:[#allocation3 + $0x218] sm:$0xff] %v1243
    %1973 = vst [vmem:[#allocation3 + $0x220] sm:$0xff] %v1247
    %1974 = vst [vmem:[#allocation3 + $0x228] sm:$0xff] %v1249
    %1975 = vst [vmem:[#allocation3 + $0x230] sm:$0xff] %v1253
    %1976 = vst [vmem:[#allocation3 + $0x238] sm:$0xff] %v1255
    %1977 = vst [vmem:[#allocation3 + $0x240] sm:$0xff] %v1259
    %1978 = vst [vmem:[#allocation3 + $0x248] sm:$0xff] %v1261
    %1979 = vst [vmem:[#allocation3 + $0x250] sm:$0xff] %v1265
    %1980 = vst [vmem:[#allocation3 + $0x258] sm:$0xff] %v1267
    %1981 = vst [vmem:[#allocation3 + $0x260] sm:$0xff] %v1271
    %1982 = vst [vmem:[#allocation3 + $0x268] sm:$0xff] %v1273
    %1983 = vst [vmem:[#allocation3 + $0x270] sm:$0xff] %v1277
    %1984 = vst [vmem:[#allocation3 + $0x278] sm:$0xff] %v1279
    %1985 = vst [vmem:[#allocation3 + $0x280] sm:$0xff] %v1283
    %1986 = vst [vmem:[#allocation3 + $0x288] sm:$0xff] %v1285
    %1987 = vst [vmem:[#allocation3 + $0x290] sm:$0xff] %v1289
    %1988 = vst [vmem:[#allocation3 + $0x298] sm:$0xff] %v1291
    %1989 = vst [vmem:[#allocation3 + $0x2a0] sm:$0xff] %v1295
    %1990 = vst [vmem:[#allocation3 + $0x2a8] sm:$0xff] %v1297
    %1991 = vst [vmem:[#allocation3 + $0x2b0] sm:$0xff] %v1301
    %1992 = vst [vmem:[#allocation3 + $0x2b8] sm:$0xff] %v1303
    %1993 = vst [vmem:[#allocation3 + $0x2c0] sm:$0xff] %v1307
    %1994 = vst [vmem:[#allocation3 + $0x2c8] sm:$0xff] %v1309
    %1995 = vst [vmem:[#allocation3 + $0x2d0] sm:$0xff] %v1313
    %1996 = vst [vmem:[#allocation3 + $0x2d8] sm:$0xff] %v1315
    %1997 = vst [vmem:[#allocation3 + $0x2e0] sm:$0xff] %v1319
    %1998 = vst [vmem:[#allocation3 + $0x2e8] sm:$0xff] %v1321
    %1999 = vst [vmem:[#allocation3 + $0x2f0] sm:$0xff] %v1325
    %2000 = vst [vmem:[#allocation3 + $0x2f8] sm:$0xff] %v1327
    %2001 = vst [vmem:[#allocation3 + $0x300] sm:$0xff] %v1331
    %2002 = vst [vmem:[#allocation3 + $0x308] sm:$0xff] %v1333
    %2003 = vst [vmem:[#allocation3 + $0x310] sm:$0xff] %v1337
    %2004 = vst [vmem:[#allocation3 + $0x318] sm:$0xff] %v1339
    %2005 = vst [vmem:[#allocation3 + $0x320] sm:$0xff] %v1343
    %2006 = vst [vmem:[#allocation3 + $0x328] sm:$0xff] %v1345
    %2007 = vst [vmem:[#allocation3 + $0x330] sm:$0xff] %v1349
    %2008 = vst [vmem:[#allocation3 + $0x338] sm:$0xff] %v1351
    %2009 = vst [vmem:[#allocation3 + $0x340] sm:$0xff] %v1355
    %2010 = vst [vmem:[#allocation3 + $0x348] sm:$0xff] %v1357
    %2011 = vst [vmem:[#allocation3 + $0x350] sm:$0xff] %v1361
    %2012 = vst [vmem:[#allocation3 + $0x358] sm:$0xff] %v1363
    %2013 = vst [vmem:[#allocation3 + $0x360] sm:$0xff] %v1367
    %2014 = vst [vmem:[#allocation3 + $0x368] sm:$0xff] %v1369
    %2015 = vst [vmem:[#allocation3 + $0x370] sm:$0xff] %v1373
    %2016 = vst [vmem:[#allocation3 + $0x378] sm:$0xff] %v1375
    %2017 = vst [vmem:[#allocation3 + $0x380] sm:$0xff] %v1379
    %2018 = vst [vmem:[#allocation3 + $0x388] sm:$0xff] %v1381
    %2019 = vst [vmem:[#allocation3 + $0x390] sm:$0xff] %v1385
    %2020 = vst [vmem:[#allocation3 + $0x398] sm:$0xff] %v1387
    %2021 = vst [vmem:[#allocation3 + $0x3a0] sm:$0xff] %v1391
    %2022 = vst [vmem:[#allocation3 + $0x3a8] sm:$0xff] %v1393
    %2023 = vst [vmem:[#allocation3 + $0x3b0] sm:$0xff] %v1397
    %2024 = vst [vmem:[#allocation3 + $0x3b8] sm:$0xff] %v1399
    %2025 = vst [vmem:[#allocation3 + $0x3c0] sm:$0xff] %v1403
    %2026 = vst [vmem:[#allocation3 + $0x3c8] sm:$0xff] %v1405
    %2027 = vst [vmem:[#allocation3 + $0x3d0] sm:$0xff] %v1409
    %2028 = vst [vmem:[#allocation3 + $0x3d8] sm:$0xff] %v1411
    %2029 = vst [vmem:[#allocation3 + $0x3e0] sm:$0xff] %v1415
    %2030 = vst [vmem:[#allocation3 + $0x3e8] sm:$0xff] %v1417
    %2031 = vst [vmem:[#allocation3 + $0x3f0] sm:$0xff] %v1421
    %2032 = vst [vmem:[#allocation3 + $0x3f8] sm:$0xff] %v1423
    %2033 = vst [vmem:[#allocation3 + $0x400] sm:$0xff] %v1427
    %2034 = vst [vmem:[#allocation3 + $0x408] sm:$0xff] %v1429
    %2035 = vst [vmem:[#allocation3 + $0x410] sm:$0xff] %v1433
    %2036 = vst [vmem:[#allocation3 + $0x418] sm:$0xff] %v1435
    %2037 = vst [vmem:[#allocation3 + $0x420] sm:$0xff] %v1439
    %2038 = vst [vmem:[#allocation3 + $0x428] sm:$0xff] %v1441
    %2039 = vst [vmem:[#allocation3 + $0x430] sm:$0xff] %v1445
    %2040 = vst [vmem:[#allocation3 + $0x438] sm:$0xff] %v1447
    %2041 = vst [vmem:[#allocation3 + $0x440] sm:$0xff] %v1451
    %2042 = vst [vmem:[#allocation3 + $0x448] sm:$0xff] %v1453
    %2043 = vst [vmem:[#allocation3 + $0x450] sm:$0xff] %v1457
    %2044 = vst [vmem:[#allocation3 + $0x458] sm:$0xff] %v1459
    %2045 = vst [vmem:[#allocation3 + $0x460] sm:$0xff] %v1463
    %2046 = vst [vmem:[#allocation3 + $0x468] sm:$0xff] %v1465
    %2047 = vst [vmem:[#allocation3 + $0x470] sm:$0xff] %v1469
    %2048 = vst [vmem:[#allocation3 + $0x478] sm:$0xff] %v1471
    %2049 = vst [vmem:[#allocation3 + $0x480] sm:$0xff] %v1475
    %2050 = vst [vmem:[#allocation3 + $0x488] sm:$0xff] %v1477
    %2051 = vst [vmem:[#allocation3 + $0x490] sm:$0xff] %v1481
    %2052 = vst [vmem:[#allocation3 + $0x498] sm:$0xff] %v1483
    %2053 = vst [vmem:[#allocation3 + $0x4a0] sm:$0xff] %v1487
    %2054 = vst [vmem:[#allocation3 + $0x4a8] sm:$0xff] %v1489
    %2055 = vst [vmem:[#allocation3 + $0x4b0] sm:$0xff] %v1493
    %2056 = vst [vmem:[#allocation3 + $0x4b8] sm:$0xff] %v1495
    %2057 = vst [vmem:[#allocation3 + $0x4c0] sm:$0xff] %v1499
    %2058 = vst [vmem:[#allocation3 + $0x4c8] sm:$0xff] %v1501
    %2059 = vst [vmem:[#allocation3 + $0x4d0] sm:$0xff] %v1505
    %2060 = vst [vmem:[#allocation3 + $0x4d8] sm:$0xff] %v1507
    %2061 = vst [vmem:[#allocation3 + $0x4e0] sm:$0xff] %v1511
    %2062 = vst [vmem:[#allocation3 + $0x4e8] sm:$0xff] %v1513
    %2063 = vst [vmem:[#allocation3 + $0x4f0] sm:$0xff] %v1517
    %2064 = vst [vmem:[#allocation3 + $0x4f8] sm:$0xff] %v1519
    %2065 = vst [vmem:[#allocation3 + $0x500] sm:$0xff] %v1523
    %2066 = vst [vmem:[#allocation3 + $0x508] sm:$0xff] %v1525
    %2067 = vst [vmem:[#allocation3 + $0x510] sm:$0xff] %v1529
    %2068 = vst [vmem:[#allocation3 + $0x518] sm:$0xff] %v1531
    %2069 = vst [vmem:[#allocation3 + $0x520] sm:$0xff] %v1535
    %2070 = vst [vmem:[#allocation3 + $0x528] sm:$0xff] %v1537
    %2071 = vst [vmem:[#allocation3 + $0x530] sm:$0xff] %v1541
    %2072 = vst [vmem:[#allocation3 + $0x538] sm:$0xff] %v1543
    %2073 = vst [vmem:[#allocation3 + $0x540] sm:$0xff] %v1547
    %2074 = vst [vmem:[#allocation3 + $0x548] sm:$0xff] %v1549
    %2075 = vst [vmem:[#allocation3 + $0x550] sm:$0xff] %v1553
    %2076 = vst [vmem:[#allocation3 + $0x558] sm:$0xff] %v1555
    %2077 = vst [vmem:[#allocation3 + $0x560] sm:$0xff] %v1559
    %2078 = vst [vmem:[#allocation3 + $0x568] sm:$0xff] %v1561
    %2079 = vst [vmem:[#allocation3 + $0x570] sm:$0xff] %v1565
    %2080 = vst [vmem:[#allocation3 + $0x578] sm:$0xff] %v1567
    %2081 = vst [vmem:[#allocation3 + $0x580] sm:$0xff] %v1571
    %2082 = vst [vmem:[#allocation3 + $0x588] sm:$0xff] %v1573
    %2083 = vst [vmem:[#allocation3 + $0x590] sm:$0xff] %v1577
    %2084 = vst [vmem:[#allocation3 + $0x598] sm:$0xff] %v1579
    %2085 = vst [vmem:[#allocation3 + $0x5a0] sm:$0xff] %v1583
    %2086 = vst [vmem:[#allocation3 + $0x5a8] sm:$0xff] %v1585
    %2087 = vst [vmem:[#allocation3 + $0x5b0] sm:$0xff] %v1589
    %2088 = vst [vmem:[#allocation3 + $0x5b8] sm:$0xff] %v1591
    %2089 = vst [vmem:[#allocation3 + $0x5c0] sm:$0xff] %v1595
    %2090 = vst [vmem:[#allocation3 + $0x5c8] sm:$0xff] %v1597
    %2091 = vst [vmem:[#allocation3 + $0x5d0] sm:$0xff] %v1601
    %2092 = vst [vmem:[#allocation3 + $0x5d8] sm:$0xff] %v1603
    %2093 = vst [vmem:[#allocation3 + $0x5e0] sm:$0xff] %v1607
    %2094 = vst [vmem:[#allocation3 + $0x5e8] sm:$0xff] %v1609
    %2095 = vst [vmem:[#allocation3 + $0x5f0] sm:$0xff] %v1613
    %2096 = vst [vmem:[#allocation3 + $0x5f8] sm:$0xff] %v1615
    %2097 = vst [vmem:[#allocation3 + $0x600] sm:$0xff] %v1619
    %2098 = vst [vmem:[#allocation3 + $0x608] sm:$0xff] %v1621
    %2099 = vst [vmem:[#allocation3 + $0x610] sm:$0xff] %v1625
    %2100 = vst [vmem:[#allocation3 + $0x618] sm:$0xff] %v1627
    %2101 = vst [vmem:[#allocation3 + $0x620] sm:$0xff] %v1631
    %2102 = vst [vmem:[#allocation3 + $0x628] sm:$0xff] %v1633
    %2103 = vst [vmem:[#allocation3 + $0x630] sm:$0xff] %v1637
    %2104 = vst [vmem:[#allocation3 + $0x638] sm:$0xff] %v1639
    %2105 = vst [vmem:[#allocation3 + $0x640] sm:$0xff] %v1643
    %2106 = vst [vmem:[#allocation3 + $0x648] sm:$0xff] %v1645
    %2107 = vst [vmem:[#allocation3 + $0x650] sm:$0xff] %v1649
    %2108 = vst [vmem:[#allocation3 + $0x658] sm:$0xff] %v1651
    %2109 = vst [vmem:[#allocation3 + $0x660] sm:$0xff] %v1655
    %2110 = vst [vmem:[#allocation3 + $0x668] sm:$0xff] %v1657
    %2111 = vst [vmem:[#allocation3 + $0x670] sm:$0xff] %v1661
    %2112 = vst [vmem:[#allocation3 + $0x678] sm:$0xff] %v1663
    %2113 = vst [vmem:[#allocation3 + $0x680] sm:$0xff] %v1667
    %2114 = vst [vmem:[#allocation3 + $0x688] sm:$0xff] %v1669
    %2115 = vst [vmem:[#allocation3 + $0x690] sm:$0xff] %v1673
    %2116 = vst [vmem:[#allocation3 + $0x698] sm:$0xff] %v1675
    %2117 = vst [vmem:[#allocation3 + $0x6a0] sm:$0xff] %v1679
    %2118 = vst [vmem:[#allocation3 + $0x6a8] sm:$0xff] %v1681
    %2119 = vst [vmem:[#allocation3 + $0x6b0] sm:$0xff] %v1685
    %2120 = vst [vmem:[#allocation3 + $0x6b8] sm:$0xff] %v1687
    %2121 = vst [vmem:[#allocation3 + $0x6c0] sm:$0xff] %v1691
    %2122 = vst [vmem:[#allocation3 + $0x6c8] sm:$0xff] %v1693
    %2123 = vst [vmem:[#allocation3 + $0x6d0] sm:$0xff] %v1697
    %2124 = vst [vmem:[#allocation3 + $0x6d8] sm:$0xff] %v1699
    %2125 = vst [vmem:[#allocation3 + $0x6e0] sm:$0xff] %v1703
    %2126 = vst [vmem:[#allocation3 + $0x6e8] sm:$0xff] %v1705
    %2127 = vst [vmem:[#allocation3 + $0x6f0] sm:$0xff] %v1709
    %2128 = vst [vmem:[#allocation3 + $0x6f8] sm:$0xff] %v1711
    %2129 = vst [vmem:[#allocation3 + $0x700] sm:$0xff] %v1715
    %2130 = vst [vmem:[#allocation3 + $0x708] sm:$0xff] %v1717
    %2131 = vst [vmem:[#allocation3 + $0x710] sm:$0xff] %v1721
    %2132 = vst [vmem:[#allocation3 + $0x718] sm:$0xff] %v1723
    %2133 = vst [vmem:[#allocation3 + $0x720] sm:$0xff] %v1727
    %2134 = vst [vmem:[#allocation3 + $0x728] sm:$0xff] %v1729
    %2135 = vst [vmem:[#allocation3 + $0x730] sm:$0xff] %v1733
    %2136 = vst [vmem:[#allocation3 + $0x738] sm:$0xff] %v1735
    %2137 = vst [vmem:[#allocation3 + $0x740] sm:$0xff] %v1739
    %2138 = vst [vmem:[#allocation3 + $0x748] sm:$0xff] %v1741
    %2139 = vst [vmem:[#allocation3 + $0x750] sm:$0xff] %v1745
    %2140 = vst [vmem:[#allocation3 + $0x758] sm:$0xff] %v1747
    %2141 = vst [vmem:[#allocation3 + $0x760] sm:$0xff] %v1751
    %2142 = vst [vmem:[#allocation3 + $0x768] sm:$0xff] %v1753
    %2143 = vst [vmem:[#allocation3 + $0x770] sm:$0xff] %v1757
    %2144 = vst [vmem:[#allocation3 + $0x778] sm:$0xff] %v1759
    %2145 = vst [vmem:[#allocation3 + $0x780] sm:$0xff] %v1763
    %2146 = vst [vmem:[#allocation3 + $0x788] sm:$0xff] %v1765
    %2147 = vst [vmem:[#allocation3 + $0x790] sm:$0xff] %v1769
    %2148 = vst [vmem:[#allocation3 + $0x798] sm:$0xff] %v1771
    %2149 = vst [vmem:[#allocation3 + $0x7a0] sm:$0xff] %v1775
    %2150 = vst [vmem:[#allocation3 + $0x7a8] sm:$0xff] %v1777
    %2151 = vst [vmem:[#allocation3 + $0x7b0] sm:$0xff] %v1781
    %2152 = vst [vmem:[#allocation3 + $0x7b8] sm:$0xff] %v1783
    %2153 = vst [vmem:[#allocation3 + $0x7c0] sm:$0xff] %v1787
    %2154 = vst [vmem:[#allocation3 + $0x7c8] sm:$0xff] %v1789
    %2155 = vst [vmem:[#allocation3 + $0x7d0] sm:$0xff] %v1793
    %2156 = vst [vmem:[#allocation3 + $0x7d8] sm:$0xff] %v1795
    %2157 = vst [vmem:[#allocation3 + $0x7e0] sm:$0xff] %v1799
    %2158 = vst [vmem:[#allocation3 + $0x7e8] sm:$0xff] %v1801
    %2159 = vst [vmem:[#allocation3 + $0x7f0] sm:$0xff] %v1805
    %2160 = vst [vmem:[#allocation3 + $0x7f8] sm:$0xff] %v1807
    %2161 = vst [vmem:[#allocation3 + $0x800] sm:$0xff] %v1811
    %2162 = vst [vmem:[#allocation3 + $0x808] sm:$0xff] %v1813
    %2163 = vst [vmem:[#allocation3 + $0x810] sm:$0xff] %v1817
    %2164 = vst [vmem:[#allocation3 + $0x818] sm:$0xff] %v1819
    %2165 = vst [vmem:[#allocation3 + $0x820] sm:$0xff] %v1823
    %2166 = vst [vmem:[#allocation3 + $0x828] sm:$0xff] %v1825
    %2167 = vst [vmem:[#allocation3 + $0x830] sm:$0xff] %v1829
    %2168 = vst [vmem:[#allocation3 + $0x838] sm:$0xff] %v1831
    %2169 = vst [vmem:[#allocation3 + $0x840] sm:$0xff] %v1835
    %2170 = vst [vmem:[#allocation3 + $0x848] sm:$0xff] %v1837
    %2171 = vst [vmem:[#allocation3 + $0x850] sm:$0xff] %v1841
    %2172 = vst [vmem:[#allocation3 + $0x858] sm:$0xff] %v1843
    %2173 = vst [vmem:[#allocation3 + $0x860] sm:$0xff] %v1847
    %2174 = vst [vmem:[#allocation3 + $0x868] sm:$0xff] %v1849
    %2175 = vst [vmem:[#allocation3 + $0x870] sm:$0xff] %v1853
    %2176 = vst [vmem:[#allocation3 + $0x878] sm:$0xff] %v1855
    %2177 = vst [vmem:[#allocation3 + $0x880] sm:$0xff] %v1859
    %2178 = vst [vmem:[#allocation3 + $0x888] sm:$0xff] %v1861
    %2179 = vst [vmem:[#allocation3 + $0x890] sm:$0xff] %v1865
    %2180 = vst [vmem:[#allocation3 + $0x898] sm:$0xff] %v1867
    %2181 = vst [vmem:[#allocation3 + $0x8a0] sm:$0xff] %v1871
    %2182 = vst [vmem:[#allocation3 + $0x8a8] sm:$0xff] %v1873
    %2183 = vst [vmem:[#allocation3 + $0x8b0] sm:$0xff] %v1877
    %2184 = vst [vmem:[#allocation3 + $0x8b8] sm:$0xff] %v1879
    %2185 = vst [vmem:[#allocation3 + $0x8c0] sm:$0xff] %v1883
    %2186 = vst [vmem:[#allocation3 + $0x8c8] sm:$0xff] %v1885
    %2187 = vst [vmem:[#allocation3 + $0x8d0] sm:$0xff] %v1889
    %2188 = vst [vmem:[#allocation3 + $0x8d8] sm:$0xff] %v1891
    %2189 = vst [vmem:[#allocation3 + $0x8e0] sm:$0xff] %v1895
    %2190 = vst [vmem:[#allocation3 + $0x8e8] sm:$0xff] %v1897
    %2191 = vst [vmem:[#allocation3 + $0x8f0] sm:$0xff] %v1901
    %2192 = vst [vmem:[#allocation3 + $0x8f8] sm:$0xff] %v1903
    %v2193 = vld [vmem:[#allocation3] sm:$0xff]
    %v2194 = vld [vmem:[#allocation3 + $0x10] sm:$0xff]
    %v2195 = vld [vmem:[#allocation3 + $0x20] sm:$0xff]
    %v2196 = vld [vmem:[#allocation3 + $0x30] sm:$0xff]
    %v2197 = vld [vmem:[#allocation3 + $0x40] sm:$0xff]
    %v2198 = vld [vmem:[#allocation3 + $0x50] sm:$0xff]
    %v2199 = vld [vmem:[#allocation3 + $0x60] sm:$0xff]
    %v2200 = vld [vmem:[#allocation3 + $0x70] sm:$0xff]
    %v2201 = vld [vmem:[#allocation3 + $0x80] sm:$0xff]
    %v2202 = vld [vmem:[#allocation3 + $0x90] sm:$0xff]
    %v2203 = vld [vmem:[#allocation3 + $0xa0] sm:$0xff]
    %v2204 = vld [vmem:[#allocation3 + $0xb0] sm:$0xff]
    %v2205 = vld [vmem:[#allocation3 + $0x8] sm:$0xff]
    %v2206 = vld [vmem:[#allocation3 + $0x18] sm:$0xff]
    %v2207 = vld [vmem:[#allocation3 + $0x28] sm:$0xff]
    %v2208 = vld [vmem:[#allocation3 + $0x38] sm:$0xff]
    %v2209 = vld [vmem:[#allocation3 + $0x48] sm:$0xff]
    %v2210 = vld [vmem:[#allocation3 + $0x58] sm:$0xff]
    %v2211 = vld [vmem:[#allocation3 + $0x68] sm:$0xff]
    %v2212 = vld [vmem:[#allocation3 + $0x78] sm:$0xff]
    %v2213 = vld [vmem:[#allocation3 + $0x88] sm:$0xff]
    %v2214 = vld [vmem:[#allocation3 + $0x98] sm:$0xff]
    %v2215 = vld [vmem:[#allocation3 + $0xa8] sm:$0xff]
    %v2216 = vld [vmem:[#allocation3 + $0xb8] sm:$0xff]
    %v2217 = vld [vmem:[#allocation3 + $0xc0] sm:$0xff]
    %v2218 = vld [vmem:[#allocation3 + $0xd0] sm:$0xff]
    %v2219 = vld [vmem:[#allocation3 + $0xe0] sm:$0xff]
    %v2220 = vld [vmem:[#allocation3 + $0xf0] sm:$0xff]
    %v2221 = vld [vmem:[#allocation3 + $0x100] sm:$0xff]
    %v2222 = vld [vmem:[#allocation3 + $0x110] sm:$0xff]
    %v2223 = vld [vmem:[#allocation3 + $0x120] sm:$0xff]
    %v2224 = vld [vmem:[#allocation3 + $0x130] sm:$0xff]
    %v2225 = vld [vmem:[#allocation3 + $0x140] sm:$0xff]
    %v2226 = vld [vmem:[#allocation3 + $0x150] sm:$0xff]
    %v2227 = vld [vmem:[#allocation3 + $0x160] sm:$0xff]
    %v2228 = vld [vmem:[#allocation3 + $0x170] sm:$0xff]
    %v2229 = vld [vmem:[#allocation3 + $0xc8] sm:$0xff]
    %v2230 = vld [vmem:[#allocation3 + $0xd8] sm:$0xff]
    %v2231 = vld [vmem:[#allocation3 + $0xe8] sm:$0xff]
    %v2232 = vld [vmem:[#allocation3 + $0xf8] sm:$0xff]
    %v2233 = vld [vmem:[#allocation3 + $0x108] sm:$0xff]
    %v2234 = vld [vmem:[#allocation3 + $0x118] sm:$0xff]
    %v2235 = vld [vmem:[#allocation3 + $0x128] sm:$0xff]
    %v2236 = vld [vmem:[#allocation3 + $0x138] sm:$0xff]
    %v2237 = vld [vmem:[#allocation3 + $0x148] sm:$0xff]
    %v2238 = vld [vmem:[#allocation3 + $0x158] sm:$0xff]
    %v2239 = vld [vmem:[#allocation3 + $0x168] sm:$0xff]
    %v2240 = vld [vmem:[#allocation3 + $0x178] sm:$0xff]
    %v2241 = vld [vmem:[#allocation3 + $0x180] sm:$0xff]
    %v2242 = vld [vmem:[#allocation3 + $0x190] sm:$0xff]
    %v2243 = vld [vmem:[#allocation3 + $0x1a0] sm:$0xff]
    %v2244 = vld [vmem:[#allocation3 + $0x1b0] sm:$0xff]
    %v2245 = vld [vmem:[#allocation3 + $0x1c0] sm:$0xff]
    %v2246 = vld [vmem:[#allocation3 + $0x1d0] sm:$0xff]
    %v2247 = vld [vmem:[#allocation3 + $0x1e0] sm:$0xff]
    %v2248 = vld [vmem:[#allocation3 + $0x1f0] sm:$0xff]
    %v2249 = vld [vmem:[#allocation3 + $0x200] sm:$0xff]
    %v2250 = vld [vmem:[#allocation3 + $0x210] sm:$0xff]
    %v2251 = vld [vmem:[#allocation3 + $0x220] sm:$0xff]
    %v2252 = vld [vmem:[#allocation3 + $0x230] sm:$0xff]
    %v2253 = vld [vmem:[#allocation3 + $0x188] sm:$0xff]
    %v2254 = vld [vmem:[#allocation3 + $0x198] sm:$0xff]
    %v2255 = vld [vmem:[#allocation3 + $0x1a8] sm:$0xff]
    %v2256 = vld [vmem:[#allocation3 + $0x1b8] sm:$0xff]
    %v2257 = vld [vmem:[#allocation3 + $0x1c8] sm:$0xff]
    %v2258 = vld [vmem:[#allocation3 + $0x1d8] sm:$0xff]
    %v2259 = vld [vmem:[#allocation3 + $0x1e8] sm:$0xff]
    %v2260 = vld [vmem:[#allocation3 + $0x1f8] sm:$0xff]
    %v2261 = vld [vmem:[#allocation3 + $0x208] sm:$0xff]
    %v2262 = vld [vmem:[#allocation3 + $0x218] sm:$0xff]
    %v2263 = vld [vmem:[#allocation3 + $0x228] sm:$0xff]
    %v2264 = vld [vmem:[#allocation3 + $0x238] sm:$0xff]
    %v2265 = vld [vmem:[#allocation3 + $0x240] sm:$0xff]
    %v2266 = vld [vmem:[#allocation3 + $0x250] sm:$0xff]
    %v2267 = vld [vmem:[#allocation3 + $0x260] sm:$0xff]
    %v2268 = vld [vmem:[#allocation3 + $0x270] sm:$0xff]
    %v2269 = vld [vmem:[#allocation3 + $0x280] sm:$0xff]
    %v2270 = vld [vmem:[#allocation3 + $0x290] sm:$0xff]
    %v2271 = vld [vmem:[#allocation3 + $0x2a0] sm:$0xff]
    %v2272 = vld [vmem:[#allocation3 + $0x2b0] sm:$0xff]
    %v2273 = vld [vmem:[#allocation3 + $0x2c0] sm:$0xff]
    %v2274 = vld [vmem:[#allocation3 + $0x2d0] sm:$0xff]
    %v2275 = vld [vmem:[#allocation3 + $0x2e0] sm:$0xff]
    %v2276 = vld [vmem:[#allocation3 + $0x2f0] sm:$0xff]
    %v2277 = vld [vmem:[#allocation3 + $0x248] sm:$0xff]
    %v2278 = vld [vmem:[#allocation3 + $0x258] sm:$0xff]
    %v2279 = vld [vmem:[#allocation3 + $0x268] sm:$0xff]
    %v2280 = vld [vmem:[#allocation3 + $0x278] sm:$0xff]
    %v2281 = vld [vmem:[#allocation3 + $0x288] sm:$0xff]
    %v2282 = vld [vmem:[#allocation3 + $0x298] sm:$0xff]
    %v2283 = vld [vmem:[#allocation3 + $0x2a8] sm:$0xff]
    %v2284 = vld [vmem:[#allocation3 + $0x2b8] sm:$0xff]
    %v2285 = vld [vmem:[#allocation3 + $0x2c8] sm:$0xff]
    %v2286 = vld [vmem:[#allocation3 + $0x2d8] sm:$0xff]
    %v2287 = vld [vmem:[#allocation3 + $0x2e8] sm:$0xff]
    %v2288 = vld [vmem:[#allocation3 + $0x2f8] sm:$0xff]
    %v2289 = vld [vmem:[#allocation3 + $0x300] sm:$0xff]
    %v2290 = vld [vmem:[#allocation3 + $0x310] sm:$0xff]
    %v2291 = vld [vmem:[#allocation3 + $0x320] sm:$0xff]
    %v2292 = vld [vmem:[#allocation3 + $0x330] sm:$0xff]
    %v2293 = vld [vmem:[#allocation3 + $0x340] sm:$0xff]
    %v2294 = vld [vmem:[#allocation3 + $0x350] sm:$0xff]
    %v2295 = vld [vmem:[#allocation3 + $0x360] sm:$0xff]
    %v2296 = vld [vmem:[#allocation3 + $0x370] sm:$0xff]
    %v2297 = vld [vmem:[#allocation3 + $0x380] sm:$0xff]
    %v2298 = vld [vmem:[#allocation3 + $0x390] sm:$0xff]
    %v2299 = vld [vmem:[#allocation3 + $0x3a0] sm:$0xff]
    %v2300 = vld [vmem:[#allocation3 + $0x3b0] sm:$0xff]
    %v2301 = vld [vmem:[#allocation3 + $0x308] sm:$0xff]
    %v2302 = vld [vmem:[#allocation3 + $0x318] sm:$0xff]
    %v2303 = vld [vmem:[#allocation3 + $0x328] sm:$0xff]
    %v2304 = vld [vmem:[#allocation3 + $0x338] sm:$0xff]
    %v2305 = vld [vmem:[#allocation3 + $0x348] sm:$0xff]
    %v2306 = vld [vmem:[#allocation3 + $0x358] sm:$0xff]
    %v2307 = vld [vmem:[#allocation3 + $0x368] sm:$0xff]
    %v2308 = vld [vmem:[#allocation3 + $0x378] sm:$0xff]
    %v2309 = vld [vmem:[#allocation3 + $0x388] sm:$0xff]
    %v2310 = vld [vmem:[#allocation3 + $0x398] sm:$0xff]
    %v2311 = vld [vmem:[#allocation3 + $0x3a8] sm:$0xff]
    %v2312 = vld [vmem:[#allocation3 + $0x3b8] sm:$0xff]
    %v2313 = vld [vmem:[#allocation3 + $0x3c0] sm:$0xff]
    %v2314 = vld [vmem:[#allocation3 + $0x3d0] sm:$0xff]
    %v2315 = vld [vmem:[#allocation3 + $0x3e0] sm:$0xff]
    %v2316 = vld [vmem:[#allocation3 + $0x3f0] sm:$0xff]
    %v2317 = vld [vmem:[#allocation3 + $0x400] sm:$0xff]
    %v2318 = vld [vmem:[#allocation3 + $0x410] sm:$0xff]
    %v2319 = vld [vmem:[#allocation3 + $0x420] sm:$0xff]
    %v2320 = vld [vmem:[#allocation3 + $0x430] sm:$0xff]
    %v2321 = vld [vmem:[#allocation3 + $0x440] sm:$0xff]
    %v2322 = vld [vmem:[#allocation3 + $0x450] sm:$0xff]
    %v2323 = vld [vmem:[#allocation3 + $0x460] sm:$0xff]
    %v2324 = vld [vmem:[#allocation3 + $0x470] sm:$0xff]
    %v2325 = vld [vmem:[#allocation3 + $0x3c8] sm:$0xff]
    %v2326 = vld [vmem:[#allocation3 + $0x3d8] sm:$0xff]
    %v2327 = vld [vmem:[#allocation3 + $0x3e8] sm:$0xff]
    %v2328 = vld [vmem:[#allocation3 + $0x3f8] sm:$0xff]
    %v2329 = vld [vmem:[#allocation3 + $0x408] sm:$0xff]
    %v2330 = vld [vmem:[#allocation3 + $0x418] sm:$0xff]
    %v2331 = vld [vmem:[#allocation3 + $0x428] sm:$0xff]
    %v2332 = vld [vmem:[#allocation3 + $0x438] sm:$0xff]
    %v2333 = vld [vmem:[#allocation3 + $0x448] sm:$0xff]
    %v2334 = vld [vmem:[#allocation3 + $0x458] sm:$0xff]
    %v2335 = vld [vmem:[#allocation3 + $0x468] sm:$0xff]
    %v2336 = vld [vmem:[#allocation3 + $0x478] sm:$0xff]
    %v2337 = vmul.f32 %v2193, %v2217
    %v2338 = vmul.f32 %v2194, %v2218
    %v2339 = vmul.f32 %v2195, %v2219
    %v2340 = vmul.f32 %v2196, %v2220
    %v2341 = vmul.f32 %v2197, %v2221
    %v2342 = vmul.f32 %v2198, %v2222
    %v2343 = vmul.f32 %v2199, %v2223
    %v2344 = vmul.f32 %v2200, %v2224
    %v2345 = vmul.f32 %v2201, %v2225
    %v2346 = vmul.f32 %v2202, %v2226
    %v2347 = vmul.f32 %v2203, %v2227
    %v2348 = vmul.f32 %v2204, %v2228
    %v2349 = vmul.f32 %v2205, %v2229
    %v2350 = vmul.f32 %v2206, %v2230
    %v2351 = vmul.f32 %v2207, %v2231
    %v2352 = vmul.f32 %v2208, %v2232
    %v2353 = vmul.f32 %v2209, %v2233
    %v2354 = vmul.f32 %v2210, %v2234
    %v2355 = vmul.f32 %v2211, %v2235
    %v2356 = vmul.f32 %v2212, %v2236
    %v2357 = vmul.f32 %v2213, %v2237
    %v2358 = vmul.f32 %v2214, %v2238
    %v2359 = vmul.f32 %v2215, %v2239
    %v2360 = vmul.f32 %v2216, %v2240
    %v2361 = vsub.f32 %v2337, %v2349
    %v2362 = vsub.f32 %v2338, %v2350
    %v2363 = vsub.f32 %v2339, %v2351
    %v2364 = vsub.f32 %v2340, %v2352
    %v2365 = vsub.f32 %v2341, %v2353
    %v2366 = vsub.f32 %v2342, %v2354
    %v2367 = vsub.f32 %v2343, %v2355
    %v2368 = vsub.f32 %v2344, %v2356
    %v2369 = vsub.f32 %v2345, %v2357
    %v2370 = vsub.f32 %v2346, %v2358
    %v2371 = vsub.f32 %v2347, %v2359
    %v2372 = vsub.f32 %v2348, %v2360
    %v2373 = vmul.f32 %v2193, %v2229
    %v2374 = vmul.f32 %v2194, %v2230
    %v2375 = vmul.f32 %v2195, %v2231
    %v2376 = vmul.f32 %v2196, %v2232
    %v2377 = vmul.f32 %v2197, %v2233
    %v2378 = vmul.f32 %v2198, %v2234
    %v2379 = vmul.f32 %v2199, %v2235
    %v2380 = vmul.f32 %v2200, %v2236
    %v2381 = vmul.f32 %v2201, %v2237
    %v2382 = vmul.f32 %v2202, %v2238
    %v2383 = vmul.f32 %v2203, %v2239
    %v2384 = vmul.f32 %v2204, %v2240
    %v2385 = vmul.f32 %v2205, %v2217
    %v2386 = vmul.f32 %v2206, %v2218
    %v2387 = vmul.f32 %v2207, %v2219
    %v2388 = vmul.f32 %v2208, %v2220
    %v2389 = vmul.f32 %v2209, %v2221
    %v2390 = vmul.f32 %v2210, %v2222
    %v2391 = vmul.f32 %v2211, %v2223
    %v2392 = vmul.f32 %v2212, %v2224
    %v2393 = vmul.f32 %v2213, %v2225
    %v2394 = vmul.f32 %v2214, %v2226
    %v2395 = vmul.f32 %v2215, %v2227
    %v2396 = vmul.f32 %v2216, %v2228
    %v2397 = vadd.f32 %v2373, %v2385
    %v2398 = vadd.f32 %v2374, %v2386
    %v2399 = vadd.f32 %v2375, %v2387
    %v2400 = vadd.f32 %v2376, %v2388
    %v2401 = vadd.f32 %v2377, %v2389
    %v2402 = vadd.f32 %v2378, %v2390
    %v2403 = vadd.f32 %v2379, %v2391
    %v2404 = vadd.f32 %v2380, %v2392
    %v2405 = vadd.f32 %v2381, %v2393
    %v2406 = vadd.f32 %v2382, %v2394
    %v2407 = vadd.f32 %v2383, %v2395
    %v2408 = vadd.f32 %v2384, %v2396
    %v2409 = vmul.f32 %v2241, %v2265
    %v2410 = vmul.f32 %v2242, %v2266
    %v2411 = vmul.f32 %v2243, %v2267
    %v2412 = vmul.f32 %v2244, %v2268
    %v2413 = vmul.f32 %v2245, %v2269
    %v2414 = vmul.f32 %v2246, %v2270
    %v2415 = vmul.f32 %v2247, %v2271
    %v2416 = vmul.f32 %v2248, %v2272
    %v2417 = vmul.f32 %v2249, %v2273
    %v2418 = vmul.f32 %v2250, %v2274
    %v2419 = vmul.f32 %v2251, %v2275
    %v2420 = vmul.f32 %v2252, %v2276
    %v2421 = vmul.f32 %v2253, %v2277
    %v2422 = vmul.f32 %v2254, %v2278
    %v2423 = vmul.f32 %v2255, %v2279
    %v2424 = vmul.f32 %v2256, %v2280
    %v2425 = vmul.f32 %v2257, %v2281
    %v2426 = vmul.f32 %v2258, %v2282
    %v2427 = vmul.f32 %v2259, %v2283
    %v2428 = vmul.f32 %v2260, %v2284
    %v2429 = vmul.f32 %v2261, %v2285
    %v2430 = vmul.f32 %v2262, %v2286
    %v2431 = vmul.f32 %v2263, %v2287
    %v2432 = vmul.f32 %v2264, %v2288
    %v2433 = vsub.f32 %v2409, %v2421
    %v2434 = vsub.f32 %v2410, %v2422
    %v2435 = vsub.f32 %v2411, %v2423
    %v2436 = vsub.f32 %v2412, %v2424
    %v2437 = vsub.f32 %v2413, %v2425
    %v2438 = vsub.f32 %v2414, %v2426
    %v2439 = vsub.f32 %v2415, %v2427
    %v2440 = vsub.f32 %v2416, %v2428
    %v2441 = vsub.f32 %v2417, %v2429
    %v2442 = vsub.f32 %v2418, %v2430
    %v2443 = vsub.f32 %v2419, %v2431
    %v2444 = vsub.f32 %v2420, %v2432
    %v2445 = vmul.f32 %v2241, %v2277
    %v2446 = vmul.f32 %v2242, %v2278
    %v2447 = vmul.f32 %v2243, %v2279
    %v2448 = vmul.f32 %v2244, %v2280
    %v2449 = vmul.f32 %v2245, %v2281
    %v2450 = vmul.f32 %v2246, %v2282
    %v2451 = vmul.f32 %v2247, %v2283
    %v2452 = vmul.f32 %v2248, %v2284
    %v2453 = vmul.f32 %v2249, %v2285
    %v2454 = vmul.f32 %v2250, %v2286
    %v2455 = vmul.f32 %v2251, %v2287
    %v2456 = vmul.f32 %v2252, %v2288
    %v2457 = vmul.f32 %v2253, %v2265
    %v2458 = vmul.f32 %v2254, %v2266
    %v2459 = vmul.f32 %v2255, %v2267
    %v2460 = vmul.f32 %v2256, %v2268
    %v2461 = vmul.f32 %v2257, %v2269
    %v2462 = vmul.f32 %v2258, %v2270
    %v2463 = vmul.f32 %v2259, %v2271
    %v2464 = vmul.f32 %v2260, %v2272
    %v2465 = vmul.f32 %v2261, %v2273
    %v2466 = vmul.f32 %v2262, %v2274
    %v2467 = vmul.f32 %v2263, %v2275
    %v2468 = vmul.f32 %v2264, %v2276
    %v2469 = vadd.f32 %v2445, %v2457
    %v2470 = vadd.f32 %v2446, %v2458
    %v2471 = vadd.f32 %v2447, %v2459
    %v2472 = vadd.f32 %v2448, %v2460
    %v2473 = vadd.f32 %v2449, %v2461
    %v2474 = vadd.f32 %v2450, %v2462
    %v2475 = vadd.f32 %v2451, %v2463
    %v2476 = vadd.f32 %v2452, %v2464
    %v2477 = vadd.f32 %v2453, %v2465
    %v2478 = vadd.f32 %v2454, %v2466
    %v2479 = vadd.f32 %v2455, %v2467
    %v2480 = vadd.f32 %v2456, %v2468
    %v2481 = vmul.f32 %v2289, %v2313
    %v2482 = vmul.f32 %v2290, %v2314
    %v2483 = vmul.f32 %v2291, %v2315
    %v2484 = vmul.f32 %v2292, %v2316
    %v2485 = vmul.f32 %v2293, %v2317
    %v2486 = vmul.f32 %v2294, %v2318
    %v2487 = vmul.f32 %v2295, %v2319
    %v2488 = vmul.f32 %v2296, %v2320
    %v2489 = vmul.f32 %v2297, %v2321
    %v2490 = vmul.f32 %v2298, %v2322
    %v2491 = vmul.f32 %v2299, %v2323
    %v2492 = vmul.f32 %v2300, %v2324
    %v2493 = vmul.f32 %v2301, %v2325
    %v2494 = vmul.f32 %v2302, %v2326
    %v2495 = vmul.f32 %v2303, %v2327
    %v2496 = vmul.f32 %v2304, %v2328
    %v2497 = vmul.f32 %v2305, %v2329
    %v2498 = vmul.f32 %v2306, %v2330
    %v2499 = vmul.f32 %v2307, %v2331
    %v2500 = vmul.f32 %v2308, %v2332
    %v2501 = vmul.f32 %v2309, %v2333
    %v2502 = vmul.f32 %v2310, %v2334
    %v2503 = vmul.f32 %v2311, %v2335
    %v2504 = vmul.f32 %v2312, %v2336
    %v2505 = vsub.f32 %v2481, %v2493
    %v2506 = vsub.f32 %v2482, %v2494
    %v2507 = vsub.f32 %v2483, %v2495
    %v2508 = vsub.f32 %v2484, %v2496
    %v2509 = vsub.f32 %v2485, %v2497
    %v2510 = vsub.f32 %v2486, %v2498
    %v2511 = vsub.f32 %v2487, %v2499
    %v2512 = vsub.f32 %v2488, %v2500
    %v2513 = vsub.f32 %v2489, %v2501
    %v2514 = vsub.f32 %v2490, %v2502
    %v2515 = vsub.f32 %v2491, %v2503
    %v2516 = vsub.f32 %v2492, %v2504
    %v2517 = vmul.f32 %v2289, %v2325
    %v2518 = vmul.f32 %v2290, %v2326
    %v2519 = vmul.f32 %v2291, %v2327
    %v2520 = vmul.f32 %v2292, %v2328
    %v2521 = vmul.f32 %v2293, %v2329
    %v2522 = vmul.f32 %v2294, %v2330
    %v2523 = vmul.f32 %v2295, %v2331
    %v2524 = vmul.f32 %v2296, %v2332
    %v2525 = vmul.f32 %v2297, %v2333
    %v2526 = vmul.f32 %v2298, %v2334
    %v2527 = vmul.f32 %v2299, %v2335
    %v2528 = vmul.f32 %v2300, %v2336
    %v2529 = vmul.f32 %v2301, %v2313
    %v2530 = vmul.f32 %v2302, %v2314
    %v2531 = vmul.f32 %v2303, %v2315
    %v2532 = vmul.f32 %v2304, %v2316
    %v2533 = vmul.f32 %v2305, %v2317
    %v2534 = vmul.f32 %v2306, %v2318
    %v2535 = vmul.f32 %v2307, %v2319
    %v2536 = vmul.f32 %v2308, %v2320
    %v2537 = vmul.f32 %v2309, %v2321
    %v2538 = vmul.f32 %v2310, %v2322
    %v2539 = vmul.f32 %v2311, %v2323
    %v2540 = vmul.f32 %v2312, %v2324
    %v2541 = vadd.f32 %v2517, %v2529
    %v2542 = vadd.f32 %v2518, %v2530
    %v2543 = vadd.f32 %v2519, %v2531
    %v2544 = vadd.f32 %v2520, %v2532
    %v2545 = vadd.f32 %v2521, %v2533
    %v2546 = vadd.f32 %v2522, %v2534
    %v2547 = vadd.f32 %v2523, %v2535
    %v2548 = vadd.f32 %v2524, %v2536
    %v2549 = vadd.f32 %v2525, %v2537
    %v2550 = vadd.f32 %v2526, %v2538
    %v2551 = vadd.f32 %v2527, %v2539
    %v2552 = vadd.f32 %v2528, %v2540
    %v2553 = vmul.f32 %v2361, %v2433
    %v2554 = vmul.f32 %v2362, %v2434
    %v2555 = vmul.f32 %v2363, %v2435
    %v2556 = vmul.f32 %v2364, %v2436
    %v2557 = vmul.f32 %v2365, %v2437
    %v2558 = vmul.f32 %v2366, %v2438
    %v2559 = vmul.f32 %v2367, %v2439
    %v2560 = vmul.f32 %v2368, %v2440
    %v2561 = vmul.f32 %v2369, %v2441
    %v2562 = vmul.f32 %v2370, %v2442
    %v2563 = vmul.f32 %v2371, %v2443
    %v2564 = vmul.f32 %v2372, %v2444
    %v2565 = vmul.f32 %v2397, %v2469
    %v2566 = vmul.f32 %v2398, %v2470
    %v2567 = vmul.f32 %v2399, %v2471
    %v2568 = vmul.f32 %v2400, %v2472
    %v2569 = vmul.f32 %v2401, %v2473
    %v2570 = vmul.f32 %v2402, %v2474
    %v2571 = vmul.f32 %v2403, %v2475
    %v2572 = vmul.f32 %v2404, %v2476
    %v2573 = vmul.f32 %v2405, %v2477
    %v2574 = vmul.f32 %v2406, %v2478
    %v2575 = vmul.f32 %v2407, %v2479
    %v2576 = vmul.f32 %v2408, %v2480
    %v2577 = vsub.f32 %v2553, %v2565
    %v2578 = vsub.f32 %v2554, %v2566
    %v2579 = vsub.f32 %v2555, %v2567
    %v2580 = vsub.f32 %v2556, %v2568
    %v2581 = vsub.f32 %v2557, %v2569
    %v2582 = vsub.f32 %v2558, %v2570
    %v2583 = vsub.f32 %v2559, %v2571
    %v2584 = vsub.f32 %v2560, %v2572
    %v2585 = vsub.f32 %v2561, %v2573
    %v2586 = vsub.f32 %v2562, %v2574
    %v2587 = vsub.f32 %v2563, %v2575
    %v2588 = vsub.f32 %v2564, %v2576
    %v2589 = vmul.f32 %v2361, %v2469
    %v2590 = vmul.f32 %v2362, %v2470
    %v2591 = vmul.f32 %v2363, %v2471
    %v2592 = vmul.f32 %v2364, %v2472
    %v2593 = vmul.f32 %v2365, %v2473
    %v2594 = vmul.f32 %v2366, %v2474
    %v2595 = vmul.f32 %v2367, %v2475
    %v2596 = vmul.f32 %v2368, %v2476
    %v2597 = vmul.f32 %v2369, %v2477
    %v2598 = vmul.f32 %v2370, %v2478
    %v2599 = vmul.f32 %v2371, %v2479
    %v2600 = vmul.f32 %v2372, %v2480
    %v2601 = vmul.f32 %v2397, %v2433
    %v2602 = vmul.f32 %v2398, %v2434
    %v2603 = vmul.f32 %v2399, %v2435
    %v2604 = vmul.f32 %v2400, %v2436
    %v2605 = vmul.f32 %v2401, %v2437
    %v2606 = vmul.f32 %v2402, %v2438
    %v2607 = vmul.f32 %v2403, %v2439
    %v2608 = vmul.f32 %v2404, %v2440
    %v2609 = vmul.f32 %v2405, %v2441
    %v2610 = vmul.f32 %v2406, %v2442
    %v2611 = vmul.f32 %v2407, %v2443
    %v2612 = vmul.f32 %v2408, %v2444
    %v2613 = vadd.f32 %v2589, %v2601
    %v2614 = vadd.f32 %v2590, %v2602
    %v2615 = vadd.f32 %v2591, %v2603
    %v2616 = vadd.f32 %v2592, %v2604
    %v2617 = vadd.f32 %v2593, %v2605
    %v2618 = vadd.f32 %v2594, %v2606
    %v2619 = vadd.f32 %v2595, %v2607
    %v2620 = vadd.f32 %v2596, %v2608
    %v2621 = vadd.f32 %v2597, %v2609
    %v2622 = vadd.f32 %v2598, %v2610
    %v2623 = vadd.f32 %v2599, %v2611
    %v2624 = vadd.f32 %v2600, %v2612
    %v2625 = vmul.f32 %v2577, %v2505
    %v2626 = vmul.f32 %v2578, %v2506
    %v2627 = vmul.f32 %v2579, %v2507
    %v2628 = vmul.f32 %v2580, %v2508
    %v2629 = vmul.f32 %v2581, %v2509
    %v2630 = vmul.f32 %v2582, %v2510
    %v2631 = vmul.f32 %v2583, %v2511
    %v2632 = vmul.f32 %v2584, %v2512
    %v2633 = vmul.f32 %v2585, %v2513
    %v2634 = vmul.f32 %v2586, %v2514
    %v2635 = vmul.f32 %v2587, %v2515
    %v2636 = vmul.f32 %v2588, %v2516
    %v2637 = vmul.f32 %v2613, %v2541
    %v2638 = vmul.f32 %v2614, %v2542
    %v2639 = vmul.f32 %v2615, %v2543
    %v2640 = vmul.f32 %v2616, %v2544
    %v2641 = vmul.f32 %v2617, %v2545
    %v2642 = vmul.f32 %v2618, %v2546
    %v2643 = vmul.f32 %v2619, %v2547
    %v2644 = vmul.f32 %v2620, %v2548
    %v2645 = vmul.f32 %v2621, %v2549
    %v2646 = vmul.f32 %v2622, %v2550
    %v2647 = vmul.f32 %v2623, %v2551
    %v2648 = vmul.f32 %v2624, %v2552
    %v2649 = vsub.f32 %v2625, %v2637
    %v2650 = vsub.f32 %v2626, %v2638
    %v2651 = vsub.f32 %v2627, %v2639
    %v2652 = vsub.f32 %v2628, %v2640
    %v2653 = vsub.f32 %v2629, %v2641
    %v2654 = vsub.f32 %v2630, %v2642
    %v2655 = vsub.f32 %v2631, %v2643
    %v2656 = vsub.f32 %v2632, %v2644
    %v2657 = vsub.f32 %v2633, %v2645
    %v2658 = vsub.f32 %v2634, %v2646
    %v2659 = vsub.f32 %v2635, %v2647
    %v2660 = vsub.f32 %v2636, %v2648
    %v2661 = vmul.f32 %v2577, %v2541
    %v2662 = vmul.f32 %v2578, %v2542
    %v2663 = vmul.f32 %v2579, %v2543
    %v2664 = vmul.f32 %v2580, %v2544
    %v2665 = vmul.f32 %v2581, %v2545
    %v2666 = vmul.f32 %v2582, %v2546
    %v2667 = vmul.f32 %v2583, %v2547
    %v2668 = vmul.f32 %v2584, %v2548
    %v2669 = vmul.f32 %v2585, %v2549
    %v2670 = vmul.f32 %v2586, %v2550
    %v2671 = vmul.f32 %v2587, %v2551
    %v2672 = vmul.f32 %v2588, %v2552
    %v2673 = vmul.f32 %v2613, %v2505
    %v2674 = vmul.f32 %v2614, %v2506
    %v2675 = vmul.f32 %v2615, %v2507
    %v2676 = vmul.f32 %v2616, %v2508
    %v2677 = vmul.f32 %v2617, %v2509
    %v2678 = vmul.f32 %v2618, %v2510
    %v2679 = vmul.f32 %v2619, %v2511
    %v2680 = vmul.f32 %v2620, %v2512
    %v2681 = vmul.f32 %v2621, %v2513
    %v2682 = vmul.f32 %v2622, %v2514
    %v2683 = vmul.f32 %v2623, %v2515
    %v2684 = vmul.f32 %v2624, %v2516
    %v2685 = vadd.f32 %v2661, %v2673
    %v2686 = vadd.f32 %v2662, %v2674
    %v2687 = vadd.f32 %v2663, %v2675
    %v2688 = vadd.f32 %v2664, %v2676
    %v2689 = vadd.f32 %v2665, %v2677
    %v2690 = vadd.f32 %v2666, %v2678
    %v2691 = vadd.f32 %v2667, %v2679
    %v2692 = vadd.f32 %v2668, %v2680
    %v2693 = vadd.f32 %v2669, %v2681
    %v2694 = vadd.f32 %v2670, %v2682
    %v2695 = vadd.f32 %v2671, %v2683
    %v2696 = vadd.f32 %v2672, %v2684
    %v2697 = vld [vmem:[#allocation3 + $0x480] sm:$0xff]
    %v2698 = vld [vmem:[#allocation3 + $0x490] sm:$0xff]
    %v2699 = vld [vmem:[#allocation3 + $0x4a0] sm:$0xff]
    %v2700 = vld [vmem:[#allocation3 + $0x4b0] sm:$0xff]
    %v2701 = vld [vmem:[#allocation3 + $0x4c0] sm:$0xff]
    %v2702 = vld [vmem:[#allocation3 + $0x4d0] sm:$0xff]
    %v2703 = vld [vmem:[#allocation3 + $0x4e0] sm:$0xff]
    %v2704 = vld [vmem:[#allocation3 + $0x4f0] sm:$0xff]
    %v2705 = vld [vmem:[#allocation3 + $0x500] sm:$0xff]
    %v2706 = vld [vmem:[#allocation3 + $0x510] sm:$0xff]
    %v2707 = vld [vmem:[#allocation3 + $0x520] sm:$0xff]
    %v2708 = vld [vmem:[#allocation3 + $0x530] sm:$0xff]
    %v2709 = vld [vmem:[#allocation3 + $0x488] sm:$0xff]
    %v2710 = vld [vmem:[#allocation3 + $0x498] sm:$0xff]
    %v2711 = vld [vmem:[#allocation3 + $0x4a8] sm:$0xff]
    %v2712 = vld [vmem:[#allocation3 + $0x4b8] sm:$0xff]
    %v2713 = vld [vmem:[#allocation3 + $0x4c8] sm:$0xff]
    %v2714 = vld [vmem:[#allocation3 + $0x4d8] sm:$0xff]
    %v2715 = vld [vmem:[#allocation3 + $0x4e8] sm:$0xff]
    %v2716 = vld [vmem:[#allocation3 + $0x4f8] sm:$0xff]
    %v2717 = vld [vmem:[#allocation3 + $0x508] sm:$0xff]
    %v2718 = vld [vmem:[#allocation3 + $0x518] sm:$0xff]
    %v2719 = vld [vmem:[#allocation3 + $0x528] sm:$0xff]
    %v2720 = vld [vmem:[#allocation3 + $0x538] sm:$0xff]
    %v2721 = vld [vmem:[#allocation3 + $0x540] sm:$0xff]
    %v2722 = vld [vmem:[#allocation3 + $0x550] sm:$0xff]
    %v2723 = vld [vmem:[#allocation3 + $0x560] sm:$0xff]
    %v2724 = vld [vmem:[#allocation3 + $0x570] sm:$0xff]
    %v2725 = vld [vmem:[#allocation3 + $0x580] sm:$0xff]
    %v2726 = vld [vmem:[#allocation3 + $0x590] sm:$0xff]
    %v2727 = vld [vmem:[#allocation3 + $0x5a0] sm:$0xff]
    %v2728 = vld [vmem:[#allocation3 + $0x5b0] sm:$0xff]
    %v2729 = vld [vmem:[#allocation3 + $0x5c0] sm:$0xff]
    %v2730 = vld [vmem:[#allocation3 + $0x5d0] sm:$0xff]
    %v2731 = vld [vmem:[#allocation3 + $0x5e0] sm:$0xff]
    %v2732 = vld [vmem:[#allocation3 + $0x5f0] sm:$0xff]
    %v2733 = vld [vmem:[#allocation3 + $0x548] sm:$0xff]
    %v2734 = vld [vmem:[#allocation3 + $0x558] sm:$0xff]
    %v2735 = vld [vmem:[#allocation3 + $0x568] sm:$0xff]
    %v2736 = vld [vmem:[#allocation3 + $0x578] sm:$0xff]
    %v2737 = vld [vmem:[#allocation3 + $0x588] sm:$0xff]
    %v2738 = vld [vmem:[#allocation3 + $0x598] sm:$0xff]
    %v2739 = vld [vmem:[#allocation3 + $0x5a8] sm:$0xff]
    %v2740 = vld [vmem:[#allocation3 + $0x5b8] sm:$0xff]
    %v2741 = vld [vmem:[#allocation3 + $0x5c8] sm:$0xff]
    %v2742 = vld [vmem:[#allocation3 + $0x5d8] sm:$0xff]
    %v2743 = vld [vmem:[#allocation3 + $0x5e8] sm:$0xff]
    %v2744 = vld [vmem:[#allocation3 + $0x5f8] sm:$0xff]
    %v2745 = vld [vmem:[#allocation3 + $0x600] sm:$0xff]
    %v2746 = vld [vmem:[#allocation3 + $0x610] sm:$0xff]
    %v2747 = vld [vmem:[#allocation3 + $0x620] sm:$0xff]
    %v2748 = vld [vmem:[#allocation3 + $0x630] sm:$0xff]
    %v2749 = vld [vmem:[#allocation3 + $0x640] sm:$0xff]
    %v2750 = vld [vmem:[#allocation3 + $0x650] sm:$0xff]
    %v2751 = vld [vmem:[#allocation3 + $0x660] sm:$0xff]
    %v2752 = vld [vmem:[#allocation3 + $0x670] sm:$0xff]
    %v2753 = vld [vmem:[#allocation3 + $0x680] sm:$0xff]
    %v2754 = vld [vmem:[#allocation3 + $0x690] sm:$0xff]
    %v2755 = vld [vmem:[#allocation3 + $0x6a0] sm:$0xff]
    %v2756 = vld [vmem:[#allocation3 + $0x6b0] sm:$0xff]
    %v2757 = vld [vmem:[#allocation3 + $0x608] sm:$0xff]
    %v2758 = vld [vmem:[#allocation3 + $0x618] sm:$0xff]
    %v2759 = vld [vmem:[#allocation3 + $0x628] sm:$0xff]
    %v2760 = vld [vmem:[#allocation3 + $0x638] sm:$0xff]
    %v2761 = vld [vmem:[#allocation3 + $0x648] sm:$0xff]
    %v2762 = vld [vmem:[#allocation3 + $0x658] sm:$0xff]
    %v2763 = vld [vmem:[#allocation3 + $0x668] sm:$0xff]
    %v2764 = vld [vmem:[#allocation3 + $0x678] sm:$0xff]
    %v2765 = vld [vmem:[#allocation3 + $0x688] sm:$0xff]
    %v2766 = vld [vmem:[#allocation3 + $0x698] sm:$0xff]
    %v2767 = vld [vmem:[#allocation3 + $0x6a8] sm:$0xff]
    %v2768 = vld [vmem:[#allocation3 + $0x6b8] sm:$0xff]
    %v2769 = vld [vmem:[#allocation3 + $0x6c0] sm:$0xff]
    %v2770 = vld [vmem:[#allocation3 + $0x6d0] sm:$0xff]
    %v2771 = vld [vmem:[#allocation3 + $0x6e0] sm:$0xff]
    %v2772 = vld [vmem:[#allocation3 + $0x6f0] sm:$0xff]
    %v2773 = vld [vmem:[#allocation3 + $0x700] sm:$0xff]
    %v2774 = vld [vmem:[#allocation3 + $0x710] sm:$0xff]
    %v2775 = vld [vmem:[#allocation3 + $0x720] sm:$0xff]
    %v2776 = vld [vmem:[#allocation3 + $0x730] sm:$0xff]
    %v2777 = vld [vmem:[#allocation3 + $0x740] sm:$0xff]
    %v2778 = vld [vmem:[#allocation3 + $0x750] sm:$0xff]
    %v2779 = vld [vmem:[#allocation3 + $0x760] sm:$0xff]
    %v2780 = vld [vmem:[#allocation3 + $0x770] sm:$0xff]
    %v2781 = vld [vmem:[#allocation3 + $0x6c8] sm:$0xff]
    %v2782 = vld [vmem:[#allocation3 + $0x6d8] sm:$0xff]
    %v2783 = vld [vmem:[#allocation3 + $0x6e8] sm:$0xff]
    %v2784 = vld [vmem:[#allocation3 + $0x6f8] sm:$0xff]
    %v2785 = vld [vmem:[#allocation3 + $0x708] sm:$0xff]
    %v2786 = vld [vmem:[#allocation3 + $0x718] sm:$0xff]
    %v2787 = vld [vmem:[#allocation3 + $0x728] sm:$0xff]
    %v2788 = vld [vmem:[#allocation3 + $0x738] sm:$0xff]
    %v2789 = vld [vmem:[#allocation3 + $0x748] sm:$0xff]
    %v2790 = vld [vmem:[#allocation3 + $0x758] sm:$0xff]
    %v2791 = vld [vmem:[#allocation3 + $0x768] sm:$0xff]
    %v2792 = vld [vmem:[#allocation3 + $0x778] sm:$0xff]
    %v2793 = vld [vmem:[#allocation3 + $0x780] sm:$0xff]
    %v2794 = vld [vmem:[#allocation3 + $0x790] sm:$0xff]
    %v2795 = vld [vmem:[#allocation3 + $0x7a0] sm:$0xff]
    %v2796 = vld [vmem:[#allocation3 + $0x7b0] sm:$0xff]
    %v2797 = vld [vmem:[#allocation3 + $0x7c0] sm:$0xff]
    %v2798 = vld [vmem:[#allocation3 + $0x7d0] sm:$0xff]
    %v2799 = vld [vmem:[#allocation3 + $0x7e0] sm:$0xff]
    %v2800 = vld [vmem:[#allocation3 + $0x7f0] sm:$0xff]
    %v2801 = vld [vmem:[#allocation3 + $0x800] sm:$0xff]
    %v2802 = vld [vmem:[#allocation3 + $0x810] sm:$0xff]
    %v2803 = vld [vmem:[#allocation3 + $0x820] sm:$0xff]
    %v2804 = vld [vmem:[#allocation3 + $0x830] sm:$0xff]
    %v2805 = vld [vmem:[#allocation3 + $0x788] sm:$0xff]
    %v2806 = vld [vmem:[#allocation3 + $0x798] sm:$0xff]
    %v2807 = vld [vmem:[#allocation3 + $0x7a8] sm:$0xff]
    %v2808 = vld [vmem:[#allocation3 + $0x7b8] sm:$0xff]
    %v2809 = vld [vmem:[#allocation3 + $0x7c8] sm:$0xff]
    %v2810 = vld [vmem:[#allocation3 + $0x7d8] sm:$0xff]
    %v2811 = vld [vmem:[#allocation3 + $0x7e8] sm:$0xff]
    %v2812 = vld [vmem:[#allocation3 + $0x7f8] sm:$0xff]
    %v2813 = vld [vmem:[#allocation3 + $0x808] sm:$0xff]
    %v2814 = vld [vmem:[#allocation3 + $0x818] sm:$0xff]
    %v2815 = vld [vmem:[#allocation3 + $0x828] sm:$0xff]
    %v2816 = vld [vmem:[#allocation3 + $0x838] sm:$0xff]
    %v2817 = vld [vmem:[#allocation3 + $0x840] sm:$0xff]
    %v2818 = vld [vmem:[#allocation3 + $0x850] sm:$0xff]
    %v2819 = vld [vmem:[#allocation3 + $0x860] sm:$0xff]
    %v2820 = vld [vmem:[#allocation3 + $0x870] sm:$0xff]
    %v2821 = vld [vmem:[#allocation3 + $0x880] sm:$0xff]
    %v2822 = vld [vmem:[#allocation3 + $0x890] sm:$0xff]
    %v2823 = vld [vmem:[#allocation3 + $0x8a0] sm:$0xff]
    %v2824 = vld [vmem:[#allocation3 + $0x8b0] sm:$0xff]
    %v2825 = vld [vmem:[#allocation3 + $0x8c0] sm:$0xff]
    %v2826 = vld [vmem:[#allocation3 + $0x8d0] sm:$0xff]
    %v2827 = vld [vmem:[#allocation3 + $0x8e0] sm:$0xff]
    %v2828 = vld [vmem:[#allocation3 + $0x8f0] sm:$0xff]
    %v2829 = vld [vmem:[#allocation3 + $0x848] sm:$0xff]
    %v2830 = vld [vmem:[#allocation3 + $0x858] sm:$0xff]
    %v2831 = vld [vmem:[#allocation3 + $0x868] sm:$0xff]
    %v2832 = vld [vmem:[#allocation3 + $0x878] sm:$0xff]
    %v2833 = vld [vmem:[#allocation3 + $0x888] sm:$0xff]
    %v2834 = vld [vmem:[#allocation3 + $0x898] sm:$0xff]
    %v2835 = vld [vmem:[#allocation3 + $0x8a8] sm:$0xff]
    %v2836 = vld [vmem:[#allocation3 + $0x8b8] sm:$0xff]
    %v2837 = vld [vmem:[#allocation3 + $0x8c8] sm:$0xff]
    %v2838 = vld [vmem:[#allocation3 + $0x8d8] sm:$0xff]
    %v2839 = vld [vmem:[#allocation3 + $0x8e8] sm:$0xff]
    %v2840 = vld [vmem:[#allocation3 + $0x8f8] sm:$0xff]
    %v2841 = vmul.f32 %v2697, %v2721
    %v2842 = vmul.f32 %v2698, %v2722
    %v2843 = vmul.f32 %v2699, %v2723
    %v2844 = vmul.f32 %v2700, %v2724
    %v2845 = vmul.f32 %v2701, %v2725
    %v2846 = vmul.f32 %v2702, %v2726
    %v2847 = vmul.f32 %v2703, %v2727
    %v2848 = vmul.f32 %v2704, %v2728
    %v2849 = vmul.f32 %v2705, %v2729
    %v2850 = vmul.f32 %v2706, %v2730
    %v2851 = vmul.f32 %v2707, %v2731
    %v2852 = vmul.f32 %v2708, %v2732
    %v2853 = vmul.f32 %v2709, %v2733
    %v2854 = vmul.f32 %v2710, %v2734
    %v2855 = vmul.f32 %v2711, %v2735
    %v2856 = vmul.f32 %v2712, %v2736
    %v2857 = vmul.f32 %v2713, %v2737
    %v2858 = vmul.f32 %v2714, %v2738
    %v2859 = vmul.f32 %v2715, %v2739
    %v2860 = vmul.f32 %v2716, %v2740
    %v2861 = vmul.f32 %v2717, %v2741
    %v2862 = vmul.f32 %v2718, %v2742
    %v2863 = vmul.f32 %v2719, %v2743
    %v2864 = vmul.f32 %v2720, %v2744
    %v2865 = vsub.f32 %v2841, %v2853
    %v2866 = vsub.f32 %v2842, %v2854
    %v2867 = vsub.f32 %v2843, %v2855
    %v2868 = vsub.f32 %v2844, %v2856
    %v2869 = vsub.f32 %v2845, %v2857
    %v2870 = vsub.f32 %v2846, %v2858
    %v2871 = vsub.f32 %v2847, %v2859
    %v2872 = vsub.f32 %v2848, %v2860
    %v2873 = vsub.f32 %v2849, %v2861
    %v2874 = vsub.f32 %v2850, %v2862
    %v2875 = vsub.f32 %v2851, %v2863
    %v2876 = vsub.f32 %v2852, %v2864
    %v2877 = vmul.f32 %v2697, %v2733
    %v2878 = vmul.f32 %v2698, %v2734
    %v2879 = vmul.f32 %v2699, %v2735
    %v2880 = vmul.f32 %v2700, %v2736
    %v2881 = vmul.f32 %v2701, %v2737
    %v2882 = vmul.f32 %v2702, %v2738
    %v2883 = vmul.f32 %v2703, %v2739
    %v2884 = vmul.f32 %v2704, %v2740
    %v2885 = vmul.f32 %v2705, %v2741
    %v2886 = vmul.f32 %v2706, %v2742
    %v2887 = vmul.f32 %v2707, %v2743
    %v2888 = vmul.f32 %v2708, %v2744
    %v2889 = vmul.f32 %v2709, %v2721
    %v2890 = vmul.f32 %v2710, %v2722
    %v2891 = vmul.f32 %v2711, %v2723
    %v2892 = vmul.f32 %v2712, %v2724
    %v2893 = vmul.f32 %v2713, %v2725
    %v2894 = vmul.f32 %v2714, %v2726
    %v2895 = vmul.f32 %v2715, %v2727
    %v2896 = vmul.f32 %v2716, %v2728
    %v2897 = vmul.f32 %v2717, %v2729
    %v2898 = vmul.f32 %v2718, %v2730
    %v2899 = vmul.f32 %v2719, %v2731
    %v2900 = vmul.f32 %v2720, %v2732
    %v2901 = vadd.f32 %v2877, %v2889
    %v2902 = vadd.f32 %v2878, %v2890
    %v2903 = vadd.f32 %v2879, %v2891
    %v2904 = vadd.f32 %v2880, %v2892
    %v2905 = vadd.f32 %v2881, %v2893
    %v2906 = vadd.f32 %v2882, %v2894
    %v2907 = vadd.f32 %v2883, %v2895
    %v2908 = vadd.f32 %v2884, %v2896
    %v2909 = vadd.f32 %v2885, %v2897
    %v2910 = vadd.f32 %v2886, %v2898
    %v2911 = vadd.f32 %v2887, %v2899
    %v2912 = vadd.f32 %v2888, %v2900
    %v2913 = vmul.f32 %v2745, %v2769
    %v2914 = vmul.f32 %v2746, %v2770
    %v2915 = vmul.f32 %v2747, %v2771
    %v2916 = vmul.f32 %v2748, %v2772
    %v2917 = vmul.f32 %v2749, %v2773
    %v2918 = vmul.f32 %v2750, %v2774
    %v2919 = vmul.f32 %v2751, %v2775
    %v2920 = vmul.f32 %v2752, %v2776
    %v2921 = vmul.f32 %v2753, %v2777
    %v2922 = vmul.f32 %v2754, %v2778
    %v2923 = vmul.f32 %v2755, %v2779
    %v2924 = vmul.f32 %v2756, %v2780
    %v2925 = vmul.f32 %v2757, %v2781
    %v2926 = vmul.f32 %v2758, %v2782
    %v2927 = vmul.f32 %v2759, %v2783
    %v2928 = vmul.f32 %v2760, %v2784
    %v2929 = vmul.f32 %v2761, %v2785
    %v2930 = vmul.f32 %v2762, %v2786
    %v2931 = vmul.f32 %v2763, %v2787
    %v2932 = vmul.f32 %v2764, %v2788
    %v2933 = vmul.f32 %v2765, %v2789
    %v2934 = vmul.f32 %v2766, %v2790
    %v2935 = vmul.f32 %v2767, %v2791
    %v2936 = vmul.f32 %v2768, %v2792
    %v2937 = vsub.f32 %v2913, %v2925
    %v2938 = vsub.f32 %v2914, %v2926
    %v2939 = vsub.f32 %v2915, %v2927
    %v2940 = vsub.f32 %v2916, %v2928
    %v2941 = vsub.f32 %v2917, %v2929
    %v2942 = vsub.f32 %v2918, %v2930
    %v2943 = vsub.f32 %v2919, %v2931
    %v2944 = vsub.f32 %v2920, %v2932
    %v2945 = vsub.f32 %v2921, %v2933
    %v2946 = vsub.f32 %v2922, %v2934
    %v2947 = vsub.f32 %v2923, %v2935
    %v2948 = vsub.f32 %v2924, %v2936
    %v2949 = vmul.f32 %v2745, %v2781
    %v2950 = vmul.f32 %v2746, %v2782
    %v2951 = vmul.f32 %v2747, %v2783
    %v2952 = vmul.f32 %v2748, %v2784
    %v2953 = vmul.f32 %v2749, %v2785
    %v2954 = vmul.f32 %v2750, %v2786
    %v2955 = vmul.f32 %v2751, %v2787
    %v2956 = vmul.f32 %v2752, %v2788
    %v2957 = vmul.f32 %v2753, %v2789
    %v2958 = vmul.f32 %v2754, %v2790
    %v2959 = vmul.f32 %v2755, %v2791
    %v2960 = vmul.f32 %v2756, %v2792
    %v2961 = vmul.f32 %v2757, %v2769
    %v2962 = vmul.f32 %v2758, %v2770
    %v2963 = vmul.f32 %v2759, %v2771
    %v2964 = vmul.f32 %v2760, %v2772
    %v2965 = vmul.f32 %v2761, %v2773
    %v2966 = vmul.f32 %v2762, %v2774
    %v2967 = vmul.f32 %v2763, %v2775
    %v2968 = vmul.f32 %v2764, %v2776
    %v2969 = vmul.f32 %v2765, %v2777
    %v2970 = vmul.f32 %v2766, %v2778
    %v2971 = vmul.f32 %v2767, %v2779
    %v2972 = vmul.f32 %v2768, %v2780
    %v2973 = vadd.f32 %v2949, %v2961
    %v2974 = vadd.f32 %v2950, %v2962
    %v2975 = vadd.f32 %v2951, %v2963
    %v2976 = vadd.f32 %v2952, %v2964
    %v2977 = vadd.f32 %v2953, %v2965
    %v2978 = vadd.f32 %v2954, %v2966
    %v2979 = vadd.f32 %v2955, %v2967
    %v2980 = vadd.f32 %v2956, %v2968
    %v2981 = vadd.f32 %v2957, %v2969
    %v2982 = vadd.f32 %v2958, %v2970
    %v2983 = vadd.f32 %v2959, %v2971
    %v2984 = vadd.f32 %v2960, %v2972
    %v2985 = vmul.f32 %v2793, %v2817
    %v2986 = vmul.f32 %v2794, %v2818
    %v2987 = vmul.f32 %v2795, %v2819
    %v2988 = vmul.f32 %v2796, %v2820
    %v2989 = vmul.f32 %v2797, %v2821
    %v2990 = vmul.f32 %v2798, %v2822
    %v2991 = vmul.f32 %v2799, %v2823
    %v2992 = vmul.f32 %v2800, %v2824
    %v2993 = vmul.f32 %v2801, %v2825
    %v2994 = vmul.f32 %v2802, %v2826
    %v2995 = vmul.f32 %v2803, %v2827
    %v2996 = vmul.f32 %v2804, %v2828
    %v2997 = vmul.f32 %v2805, %v2829
    %v2998 = vmul.f32 %v2806, %v2830
    %v2999 = vmul.f32 %v2807, %v2831
    %v3000 = vmul.f32 %v2808, %v2832
    %v3001 = vmul.f32 %v2809, %v2833
    %v3002 = vmul.f32 %v2810, %v2834
    %v3003 = vmul.f32 %v2811, %v2835
    %v3004 = vmul.f32 %v2812, %v2836
    %v3005 = vmul.f32 %v2813, %v2837
    %v3006 = vmul.f32 %v2814, %v2838
    %v3007 = vmul.f32 %v2815, %v2839
    %v3008 = vmul.f32 %v2816, %v2840
    %v3009 = vsub.f32 %v2985, %v2997
    %v3010 = vsub.f32 %v2986, %v2998
    %v3011 = vsub.f32 %v2987, %v2999
    %v3012 = vsub.f32 %v2988, %v3000
    %v3013 = vsub.f32 %v2989, %v3001
    %v3014 = vsub.f32 %v2990, %v3002
    %v3015 = vsub.f32 %v2991, %v3003
    %v3016 = vsub.f32 %v2992, %v3004
    %v3017 = vsub.f32 %v2993, %v3005
    %v3018 = vsub.f32 %v2994, %v3006
    %v3019 = vsub.f32 %v2995, %v3007
    %v3020 = vsub.f32 %v2996, %v3008
    %v3021 = vmul.f32 %v2793, %v2829
    %v3022 = vmul.f32 %v2794, %v2830
    %v3023 = vmul.f32 %v2795, %v2831
    %v3024 = vmul.f32 %v2796, %v2832
    %v3025 = vmul.f32 %v2797, %v2833
    %v3026 = vmul.f32 %v2798, %v2834
    %v3027 = vmul.f32 %v2799, %v2835
    %v3028 = vmul.f32 %v2800, %v2836
    %v3029 = vmul.f32 %v2801, %v2837
    %v3030 = vmul.f32 %v2802, %v2838
    %v3031 = vmul.f32 %v2803, %v2839
    %v3032 = vmul.f32 %v2804, %v2840
    %v3033 = vmul.f32 %v2805, %v2817
    %v3034 = vmul.f32 %v2806, %v2818
    %v3035 = vmul.f32 %v2807, %v2819
    %v3036 = vmul.f32 %v2808, %v2820
    %v3037 = vmul.f32 %v2809, %v2821
    %v3038 = vmul.f32 %v2810, %v2822
    %v3039 = vmul.f32 %v2811, %v2823
    %v3040 = vmul.f32 %v2812, %v2824
    %v3041 = vmul.f32 %v2813, %v2825
    %v3042 = vmul.f32 %v2814, %v2826
    %v3043 = vmul.f32 %v2815, %v2827
    %v3044 = vmul.f32 %v2816, %v2828
    %v3045 = vadd.f32 %v3021, %v3033
    %v3046 = vadd.f32 %v3022, %v3034
    %v3047 = vadd.f32 %v3023, %v3035
    %v3048 = vadd.f32 %v3024, %v3036
    %v3049 = vadd.f32 %v3025, %v3037
    %v3050 = vadd.f32 %v3026, %v3038
    %v3051 = vadd.f32 %v3027, %v3039
    %v3052 = vadd.f32 %v3028, %v3040
    %v3053 = vadd.f32 %v3029, %v3041
    %v3054 = vadd.f32 %v3030, %v3042
    %v3055 = vadd.f32 %v3031, %v3043
    %v3056 = vadd.f32 %v3032, %v3044
    %v3057 = vmul.f32 %v2865, %v2937
    %v3058 = vmul.f32 %v2866, %v2938
    %v3059 = vmul.f32 %v2867, %v2939
    %v3060 = vmul.f32 %v2868, %v2940
    %v3061 = vmul.f32 %v2869, %v2941
    %v3062 = vmul.f32 %v2870, %v2942
    %v3063 = vmul.f32 %v2871, %v2943
    %v3064 = vmul.f32 %v2872, %v2944
    %v3065 = vmul.f32 %v2873, %v2945
    %v3066 = vmul.f32 %v2874, %v2946
    %v3067 = vmul.f32 %v2875, %v2947
    %v3068 = vmul.f32 %v2876, %v2948
    %v3069 = vmul.f32 %v2901, %v2973
    %v3070 = vmul.f32 %v2902, %v2974
    %v3071 = vmul.f32 %v2903, %v2975
    %v3072 = vmul.f32 %v2904, %v2976
    %v3073 = vmul.f32 %v2905, %v2977
    %v3074 = vmul.f32 %v2906, %v2978
    %v3075 = vmul.f32 %v2907, %v2979
    %v3076 = vmul.f32 %v2908, %v2980
    %v3077 = vmul.f32 %v2909, %v2981
    %v3078 = vmul.f32 %v2910, %v2982
    %v3079 = vmul.f32 %v2911, %v2983
    %v3080 = vmul.f32 %v2912, %v2984
    %v3081 = vsub.f32 %v3057, %v3069
    %v3082 = vsub.f32 %v3058, %v3070
    %v3083 = vsub.f32 %v3059, %v3071
    %v3084 = vsub.f32 %v3060, %v3072
    %v3085 = vsub.f32 %v3061, %v3073
    %v3086 = vsub.f32 %v3062, %v3074
    %v3087 = vsub.f32 %v3063, %v3075
    %v3088 = vsub.f32 %v3064, %v3076
    %v3089 = vsub.f32 %v3065, %v3077
    %v3090 = vsub.f32 %v3066, %v3078
    %v3091 = vsub.f32 %v3067, %v3079
    %v3092 = vsub.f32 %v3068, %v3080
    %v3093 = vmul.f32 %v2865, %v2973
    %v3094 = vmul.f32 %v2866, %v2974
    %v3095 = vmul.f32 %v2867, %v2975
    %v3096 = vmul.f32 %v2868, %v2976
    %v3097 = vmul.f32 %v2869, %v2977
    %v3098 = vmul.f32 %v2870, %v2978
    %v3099 = vmul.f32 %v2871, %v2979
    %v3100 = vmul.f32 %v2872, %v2980
    %v3101 = vmul.f32 %v2873, %v2981
    %v3102 = vmul.f32 %v2874, %v2982
    %v3103 = vmul.f32 %v2875, %v2983
    %v3104 = vmul.f32 %v2876, %v2984
    %v3105 = vmul.f32 %v2901, %v2937
    %v3106 = vmul.f32 %v2902, %v2938
    %v3107 = vmul.f32 %v2903, %v2939
    %v3108 = vmul.f32 %v2904, %v2940
    %v3109 = vmul.f32 %v2905, %v2941
    %v3110 = vmul.f32 %v2906, %v2942
    %v3111 = vmul.f32 %v2907, %v2943
    %v3112 = vmul.f32 %v2908, %v2944
    %v3113 = vmul.f32 %v2909, %v2945
    %v3114 = vmul.f32 %v2910, %v2946
    %v3115 = vmul.f32 %v2911, %v2947
    %v3116 = vmul.f32 %v2912, %v2948
    %v3117 = vadd.f32 %v3093, %v3105
    %v3118 = vadd.f32 %v3094, %v3106
    %v3119 = vadd.f32 %v3095, %v3107
    %v3120 = vadd.f32 %v3096, %v3108
    %v3121 = vadd.f32 %v3097, %v3109
    %v3122 = vadd.f32 %v3098, %v3110
    %v3123 = vadd.f32 %v3099, %v3111
    %v3124 = vadd.f32 %v3100, %v3112
    %v3125 = vadd.f32 %v3101, %v3113
    %v3126 = vadd.f32 %v3102, %v3114
    %v3127 = vadd.f32 %v3103, %v3115
    %v3128 = vadd.f32 %v3104, %v3116
    %v3129 = vmul.f32 %v3081, %v3009
    %v3130 = vmul.f32 %v3082, %v3010
    %v3131 = vmul.f32 %v3083, %v3011
    %v3132 = vmul.f32 %v3084, %v3012
    %v3133 = vmul.f32 %v3085, %v3013
    %v3134 = vmul.f32 %v3086, %v3014
    %v3135 = vmul.f32 %v3087, %v3015
    %v3136 = vmul.f32 %v3088, %v3016
    %v3137 = vmul.f32 %v3089, %v3017
    %v3138 = vmul.f32 %v3090, %v3018
    %v3139 = vmul.f32 %v3091, %v3019
    %v3140 = vmul.f32 %v3092, %v3020
    %v3141 = vmul.f32 %v3117, %v3045
    %v3142 = vmul.f32 %v3118, %v3046
    %v3143 = vmul.f32 %v3119, %v3047
    %v3144 = vmul.f32 %v3120, %v3048
    %v3145 = vmul.f32 %v3121, %v3049
    %v3146 = vmul.f32 %v3122, %v3050
    %v3147 = vmul.f32 %v3123, %v3051
    %v3148 = vmul.f32 %v3124, %v3052
    %v3149 = vmul.f32 %v3125, %v3053
    %v3150 = vmul.f32 %v3126, %v3054
    %v3151 = vmul.f32 %v3127, %v3055
    %v3152 = vmul.f32 %v3128, %v3056
    %v3153 = vsub.f32 %v3129, %v3141
    %v3154 = vsub.f32 %v3130, %v3142
    %v3155 = vsub.f32 %v3131, %v3143
    %v3156 = vsub.f32 %v3132, %v3144
    %v3157 = vsub.f32 %v3133, %v3145
    %v3158 = vsub.f32 %v3134, %v3146
    %v3159 = vsub.f32 %v3135, %v3147
    %v3160 = vsub.f32 %v3136, %v3148
    %v3161 = vsub.f32 %v3137, %v3149
    %v3162 = vsub.f32 %v3138, %v3150
    %v3163 = vsub.f32 %v3139, %v3151
    %v3164 = vsub.f32 %v3140, %v3152
    %v3165 = vmul.f32 %v3081, %v3045
    %v3166 = vmul.f32 %v3082, %v3046
    %v3167 = vmul.f32 %v3083, %v3047
    %v3168 = vmul.f32 %v3084, %v3048
    %v3169 = vmul.f32 %v3085, %v3049
    %v3170 = vmul.f32 %v3086, %v3050
    %v3171 = vmul.f32 %v3087, %v3051
    %v3172 = vmul.f32 %v3088, %v3052
    %v3173 = vmul.f32 %v3089, %v3053
    %v3174 = vmul.f32 %v3090, %v3054
    %v3175 = vmul.f32 %v3091, %v3055
    %v3176 = vmul.f32 %v3092, %v3056
    %v3177 = vmul.f32 %v3117, %v3009
    %v3178 = vmul.f32 %v3118, %v3010
    %v3179 = vmul.f32 %v3119, %v3011
    %v3180 = vmul.f32 %v3120, %v3012
    %v3181 = vmul.f32 %v3121, %v3013
    %v3182 = vmul.f32 %v3122, %v3014
    %v3183 = vmul.f32 %v3123, %v3015
    %v3184 = vmul.f32 %v3124, %v3016
    %v3185 = vmul.f32 %v3125, %v3017
    %v3186 = vmul.f32 %v3126, %v3018
    %v3187 = vmul.f32 %v3127, %v3019
    %v3188 = vmul.f32 %v3128, %v3020
    %v3189 = vadd.f32 %v3165, %v3177
    %v3190 = vadd.f32 %v3166, %v3178
    %v3191 = vadd.f32 %v3167, %v3179
    %v3192 = vadd.f32 %v3168, %v3180
    %v3193 = vadd.f32 %v3169, %v3181
    %v3194 = vadd.f32 %v3170, %v3182
    %v3195 = vadd.f32 %v3171, %v3183
    %v3196 = vadd.f32 %v3172, %v3184
    %v3197 = vadd.f32 %v3173, %v3185
    %v3198 = vadd.f32 %v3174, %v3186
    %v3199 = vadd.f32 %v3175, %v3187
    %v3200 = vadd.f32 %v3176, %v3188
    %v3201 = vmul.f32 %v2649, %v3153
    %v3202 = vmul.f32 %v2650, %v3154
    %v3203 = vmul.f32 %v2651, %v3155
    %v3204 = vmul.f32 %v2652, %v3156
    %v3205 = vmul.f32 %v2653, %v3157
    %v3206 = vmul.f32 %v2654, %v3158
    %v3207 = vmul.f32 %v2655, %v3159
    %v3208 = vmul.f32 %v2656, %v3160
    %v3209 = vmul.f32 %v2657, %v3161
    %v3210 = vmul.f32 %v2658, %v3162
    %v3211 = vmul.f32 %v2659, %v3163
    %v3212 = vmul.f32 %v2660, %v3164
    %v3213 = vmul.f32 %v2685, %v3189
    %v3214 = vmul.f32 %v2686, %v3190
    %v3215 = vmul.f32 %v2687, %v3191
    %v3216 = vmul.f32 %v2688, %v3192
    %v3217 = vmul.f32 %v2689, %v3193
    %v3218 = vmul.f32 %v2690, %v3194
    %v3219 = vmul.f32 %v2691, %v3195
    %v3220 = vmul.f32 %v2692, %v3196
    %v3221 = vmul.f32 %v2693, %v3197
    %v3222 = vmul.f32 %v2694, %v3198
    %v3223 = vmul.f32 %v2695, %v3199
    %v3224 = vmul.f32 %v2696, %v3200
    %v3225 = vadd.f32 %v3201, %v3213
    %v3226 = vadd.f32 %v3202, %v3214
    %v3227 = vadd.f32 %v3203, %v3215
    %v3228 = vadd.f32 %v3204, %v3216
    %v3229 = vadd.f32 %v3205, %v3217
    %v3230 = vadd.f32 %v3206, %v3218
    %v3231 = vadd.f32 %v3207, %v3219
    %v3232 = vadd.f32 %v3208, %v3220
    %v3233 = vadd.f32 %v3209, %v3221
    %v3234 = vadd.f32 %v3210, %v3222
    %v3235 = vadd.f32 %v3211, %v3223
    %v3236 = vadd.f32 %v3212, %v3224
    %v3237 = vmul.f32 %v2685, %v3153
    %v3238 = vmul.f32 %v2686, %v3154
    %v3239 = vmul.f32 %v2687, %v3155
    %v3240 = vmul.f32 %v2688, %v3156
    %v3241 = vmul.f32 %v2689, %v3157
    %v3242 = vmul.f32 %v2690, %v3158
    %v3243 = vmul.f32 %v2691, %v3159
    %v3244 = vmul.f32 %v2692, %v3160
    %v3245 = vmul.f32 %v2693, %v3161
    %v3246 = vmul.f32 %v2694, %v3162
    %v3247 = vmul.f32 %v2695, %v3163
    %v3248 = vmul.f32 %v2696, %v3164
    %v3249 = vmul.f32 %v2649, %v3189
    %v3250 = vmul.f32 %v2650, %v3190
    %v3251 = vmul.f32 %v2651, %v3191
    %v3252 = vmul.f32 %v2652, %v3192
    %v3253 = vmul.f32 %v2653, %v3193
    %v3254 = vmul.f32 %v2654, %v3194
    %v3255 = vmul.f32 %v2655, %v3195
    %v3256 = vmul.f32 %v2656, %v3196
    %v3257 = vmul.f32 %v2657, %v3197
    %v3258 = vmul.f32 %v2658, %v3198
    %v3259 = vmul.f32 %v2659, %v3199
    %v3260 = vmul.f32 %v2660, %v3200
    %v3261 = vsub.f32 %v3237, %v3249
    %v3262 = vsub.f32 %v3238, %v3250
    %v3263 = vsub.f32 %v3239, %v3251
    %v3264 = vsub.f32 %v3240, %v3252
    %v3265 = vsub.f32 %v3241, %v3253
    %v3266 = vsub.f32 %v3242, %v3254
    %v3267 = vsub.f32 %v3243, %v3255
    %v3268 = vsub.f32 %v3244, %v3256
    %v3269 = vsub.f32 %v3245, %v3257
    %v3270 = vsub.f32 %v3246, %v3258
    %v3271 = vsub.f32 %v3247, %v3259
    %v3272 = vsub.f32 %v3248, %v3260
    %v3273 = vld [vmem:[%s3] sm:$0xff]
    %v3274 = vld [vmem:[%s3 + $0x8] sm:$0xff]
    %v3275 = vld [vmem:[%s3 + $0x10] sm:$0xff]
    %v3276 = vld [vmem:[%s3 + $0x18] sm:$0xff]
    %v3277 = vld [vmem:[%s3 + $0x20] sm:$0xff]
    %v3278 = vld [vmem:[%s3 + $0x28] sm:$0xff]
    %v3279 = vld [vmem:[%s3 + $0x30] sm:$0xff]
    %v3280 = vld [vmem:[%s3 + $0x38] sm:$0xff]
    %v3281 = vld [vmem:[%s3 + $0x40] sm:$0xff]
    %v3282 = vld [vmem:[%s3 + $0x48] sm:$0xff]
    %v3283 = vld [vmem:[%s3 + $0x50] sm:$0xff]
    %v3284 = vld [vmem:[%s3 + $0x58] sm:$0xff]
    %v3285 = vld [vmem:[%s3 + $0x60] sm:$0xff]
    %v3286 = vld [vmem:[%s3 + $0x68] sm:$0xff]
    %v3287 = vld [vmem:[%s3 + $0x70] sm:$0xff]
    %v3288 = vld [vmem:[%s3 + $0x78] sm:$0xff]
    %v3289 = vld [vmem:[%s3 + $0x80] sm:$0xff]
    %v3290 = vld [vmem:[%s3 + $0x88] sm:$0xff]
    %v3291 = vld [vmem:[%s3 + $0x90] sm:$0xff]
    %v3292 = vld [vmem:[%s3 + $0x98] sm:$0xff]
    %v3293 = vld [vmem:[%s3 + $0xa0] sm:$0xff]
    %v3294 = vld [vmem:[%s3 + $0xa8] sm:$0xff]
    %v3295 = vld [vmem:[%s3 + $0xb0] sm:$0xff]
    %v3296 = vld [vmem:[%s3 + $0xb8] sm:$0xff]
    %v3297 = vld [vmem:[%s3 + $0xc0] sm:$0xff]
    %v3298 = vld [vmem:[%s3 + $0xc8] sm:$0xff]
    %v3299 = vld [vmem:[%s3 + $0xd0] sm:$0xff]
    %v3300 = vld [vmem:[%s3 + $0xd8] sm:$0xff]
    %v3301 = vld [vmem:[%s3 + $0xe0] sm:$0xff]
    %v3302 = vld [vmem:[%s3 + $0xe8] sm:$0xff]
    %v3303 = vld [vmem:[%s3 + $0xf0] sm:$0xff]
    %v3304 = vld [vmem:[%s3 + $0xf8] sm:$0xff]
    %3305 = vmatprep.subr.mxu0 0.0
    %3306 = vmatpush1.msra.mxu0 %v3273
    %3307 = vmatprep.subr.mxu0 0.0
    %3308 = vmatpush1.msra.mxu0 %v3274
    %3309 = vmatprep.subr.mxu0 0.0
    %3310 = vmatpush1.msra.mxu0 %v3275
    %3311 = vmatprep.subr.mxu0 0.0
    %3312 = vmatpush1.msra.mxu0 %v3276
    %3313 = vmatprep.subr.mxu0 0.0
    %3314 = vmatpush1.msra.mxu0 %v3277
    %3315 = vmatprep.subr.mxu0 0.0
    %3316 = vmatpush1.msra.mxu0 %v3278
    %3317 = vmatprep.subr.mxu0 0.0
    %3318 = vmatpush1.msra.mxu0 %v3279
    %3319 = vmatprep.subr.mxu0 0.0
    %3320 = vmatpush1.msra.mxu0 %v3280
    %3321 = vmatprep.subr.mxu0 0.0
    %3322 = vmatpush1.msra.mxu0 %v3281
    %3323 = vmatprep.subr.mxu0 0.0
    %3324 = vmatpush1.msra.mxu0 %v3282
    %3325 = vmatprep.subr.mxu0 0.0
    %3326 = vmatpush1.msra.mxu0 %v3283
    %3327 = vmatprep.subr.mxu0 0.0
    %3328 = vmatpush1.msra.mxu0 %v3284
    %3329 = vmatprep.subr.mxu0 0.0
    %3330 = vmatpush1.msra.mxu0 %v3285
    %3331 = vmatprep.subr.mxu0 0.0
    %3332 = vmatpush1.msra.mxu0 %v3286
    %3333 = vmatprep.subr.mxu0 0.0
    %3334 = vmatpush1.msra.mxu0 %v3287
    %3335 = vmatprep.subr.mxu0 0.0
    %3336 = vmatpush1.msra.mxu0 %v3288
    %3337 = vmatprep.subr.mxu0 0.0
    %3338 = vmatpush1.msra.mxu0 %v3289
    %3339 = vmatprep.subr.mxu0 0.0
    %3340 = vmatpush1.msra.mxu0 %v3290
    %3341 = vmatprep.subr.mxu0 0.0
    %3342 = vmatpush1.msra.mxu0 %v3291
    %3343 = vmatprep.subr.mxu0 0.0
    %3344 = vmatpush1.msra.mxu0 %v3292
    %3345 = vmatprep.subr.mxu0 0.0
    %3346 = vmatpush1.msra.mxu0 %v3293
    %3347 = vmatprep.subr.mxu0 0.0
    %3348 = vmatpush1.msra.mxu0 %v3294
    %3349 = vmatprep.subr.mxu0 0.0
    %3350 = vmatpush1.msra.mxu0 %v3295
    %3351 = vmatprep.subr.mxu0 0.0
    %3352 = vmatpush1.msra.mxu0 %v3296
    %3353 = vmatprep.subr.mxu0 0.0
    %3354 = vmatpush1.msra.mxu0 %v3297
    %3355 = vmatprep.subr.mxu0 0.0
    %3356 = vmatpush1.msra.mxu0 %v3298
    %3357 = vmatprep.subr.mxu0 0.0
    %3358 = vmatpush1.msra.mxu0 %v3299
    %3359 = vmatprep.subr.mxu0 0.0
    %3360 = vmatpush1.msra.mxu0 %v3300
    %3361 = vmatprep.subr.mxu0 0.0
    %3362 = vmatpush1.msra.mxu0 %v3301
    %3363 = vmatprep.subr.mxu0 0.0
    %3364 = vmatpush1.msra.mxu0 %v3302
    %3365 = vmatprep.subr.mxu0 0.0
    %3366 = vmatpush1.msra.mxu0 %v3303
    %3367 = vmatprep.subr.mxu0 0.0
    %3368 = vmatpush1.msra.mxu0 %v3304
    %3369 = vmatprep.mubr.f32.mxu0 %v3261
    %3370 = vmatmul.mubr.f32.gmra.mrb[0].mxu0 %v3225
    %v3371 = vpop.f32.mrb[0].mxu0
    %v3372 = vadd.f32 0.0, %v3371
    %v3373 = vpop.f32.mrb[0].mxu0
    %3374 = vmatprep.mubr.f32.mxu0 %v3262
    %3375 = vmatmul.mubr.f32.gmra.mrb[0].mxu0 %v3226
    %v3376 = vpop.f32.mrb[0].mxu0
    %v3377 = vadd.f32 0.0, %v3376
    %v3378 = vpop.f32.mrb[0].mxu0
    %3379 = vmatprep.mubr.f32.mxu0 %v3263
    %3380 = vmatmul.mubr.f32.gmra.mrb[0].mxu0 %v3227
    %v3381 = vpop.f32.mrb[0].mxu0
    %v3382 = vadd.f32 0.0, %v3381
    %v3383 = vpop.f32.mrb[0].mxu0
    %3384 = vmatprep.mubr.f32.mxu0 %v3264
    %3385 = vmatmul.mubr.f32.gmra.mrb[0].mxu0 %v3228
    %v3386 = vpop.f32.mrb[0].mxu0
    %v3387 = vadd.f32 0.0, %v3386
    %v3388 = vpop.f32.mrb[0].mxu0
    %3389 = vmatprep.mubr.f32.mxu0 %v3265
    %3390 = vmatmul.mubr.f32.gmra.mrb[0].mxu0 %v3229
    %v3391 = vpop.f32.mrb[0].mxu0
    %v3392 = vadd.f32 0.0, %v3391
    %v3393 = vpop.f32.mrb[0].mxu0
    %3394 = vmatprep.mubr.f32.mxu0 %v3266
    %3395 = vmatmul.mubr.f32.gmra.mrb[0].mxu0 %v3230
    %v3396 = vpop.f32.mrb[0].mxu0
    %v3397 = vadd.f32 0.0, %v3396
    %v3398 = vpop.f32.mrb[0].mxu0
    %3399 = vmatprep.mubr.f32.mxu0 %v3267
    %3400 = vmatmul.mubr.f32.gmra.mrb[0].mxu0 %v3231
    %v3401 = vpop.f32.mrb[0].mxu0
    %v3402 = vadd.f32 0.0, %v3401
    %v3403 = vpop.f32.mrb[0].mxu0
    %3404 = vmatprep.mubr.f32.mxu0 %v3268
    %3405 = vmatmul.mubr.f32.gmra.mrb[0].mxu0 %v3232
    %v3406 = vpop.f32.mrb[0].mxu0
    %v3407 = vadd.f32 0.0, %v3406
    %v3408 = vpop.f32.mrb[0].mxu0
    %3409 = vmatprep.mubr.f32.mxu0 %v3269
    %3410 = vmatmul.mubr.f32.gmra.mrb[0].mxu0 %v3233
    %v3411 = vpop.f32.mrb[0].mxu0
    %v3412 = vadd.f32 0.0, %v3411
    %v3413 = vpop.f32.mrb[0].mxu0
    %3414 = vmatprep.mubr.f32.mxu0 %v3270
    %3415 = vmatmul.mubr.f32.gmra.mrb[0].mxu0 %v3234
    %v3416 = vpop.f32.mrb[0].mxu0
    %v3417 = vadd.f32 0.0, %v3416
    %v3418 = vpop.f32.mrb[0].mxu0
    %3419 = vmatprep.mubr.f32.mxu0 %v3271
    %3420 = vmatmul.mubr.f32.gmra.mrb[0].mxu0 %v3235
    %v3421 = vpop.f32.mrb[0].mxu0
    %v3422 = vadd.f32 0.0, %v3421
    %v3423 = vpop.f32.mrb[0].mxu0
    %3424 = vmatprep.mubr.f32.mxu0 %v3272
    %3425 = vmatmul.mubr.f32.gmra.mrb[0].mxu0 %v3236
    %v3426 = vpop.f32.mrb[0].mxu0
    %v3427 = vadd.f32 0.0, %v3426
    %v3428 = vpop.f32.mrb[0].mxu0
    %3429 = vdwg.mxu0
    %3430 = vst [vmem:[#allocation6] sm:$0xff] %v3372
    %3431 = vst [vmem:[#allocation6 + $0x8] sm:$0xff] %v3377
    %3432 = vst [vmem:[#allocation6 + $0x10] sm:$0xff] %v3382
    %3433 = vst [vmem:[#allocation6 + $0x18] sm:$0xff] %v3387
    %3434 = vst [vmem:[#allocation6 + $0x20] sm:$0xff] %v3392
    %3435 = vst [vmem:[#allocation6 + $0x28] sm:$0xff] %v3397
    %3436 = vst [vmem:[#allocation6 + $0x30] sm:$0xff] %v3402
    %3437 = vst [vmem:[#allocation6 + $0x38] sm:$0xff] %v3407
    %3438 = vst [vmem:[#allocation6 + $0x40] sm:$0xff] %v3412
    %3439 = vst [vmem:[#allocation6 + $0x48] sm:$0xff] %v3417
    %3440 = vst [vmem:[#allocation6 + $0x50] sm:$0xff] %v3422
    %3441 = vst [vmem:[#allocation6 + $0x58] sm:$0xff] %v3427
    // Predicated region
    $region18: #{tpu_custom_call.1} parent=1 // pred_check
      _
    $region19: #{tpu_custom_call.1} parent=1 // pred_check_branch
      %3443 = sbr.rel (0) target = $region21
    $region20: #{tpu_custom_call.1} parent=1 // pred_region
      %s3445 = ssub.s32 1536, 1536
      %3446 = vsyncadd [#allocation5], %s3445
      %s3447 = sshll.u32 [#allocation4], 4
      %s3448 = int_to_ptr.vmem [resolvable:$true] %s3447
      %3453 = dma.vmem_to_hbm [thread:$0]  %s3448, 1536, %s4, [#allocation5], 128, 128, 8
    $region21: #{tpu_custom_call.1} parent=1 // pred_fallthru
      _
    // Predicated region
    $region22: #{tpu_custom_call.1} parent=1 // pred_check
      _
    $region23: #{tpu_custom_call.1} parent=1 // pred_check_branch
      %3455 = sbr.rel (0) target = $region25
    $region24: #{tpu_custom_call.1} parent=1 // pred_region
      %s3457 = ssub.s32 1536, 1536
      %3458 = vsyncadd [#allocation7], %s3457
      %s3459 = sshll.u32 [#allocation6], 4
      %s3460 = int_to_ptr.vmem [resolvable:$true] %s3459
      %3465 = dma.vmem_to_hbm [thread:$0]  %s3460, 1536, %s5, [#allocation7], 128, 128, 8
    $region25: #{tpu_custom_call.1} parent=1 // pred_fallthru
      _
    // Predicated region
    $region26: #{tpu_custom_call.1} parent=1 // pred_check
      _
    $region27: #{tpu_custom_call.1} parent=1 // pred_check_branch
      %3467 = sbr.rel (0) target = $region29
    $region28: #{tpu_custom_call.1} parent=1 // pred_region
      %3468 = dma.done [#allocation5], 1536
    $region29: #{tpu_custom_call.1} parent=1 // pred_fallthru
      _
    // Predicated region
    $region30: #{tpu_custom_call.1} parent=1 // pred_check
      _
    $region31: #{tpu_custom_call.1} parent=1 // pred_check_branch
      %3470 = sbr.rel (0) target = $region33
    $region32: #{tpu_custom_call.1} parent=1 // pred_region
      %3471 = dma.done [#allocation7], 1536
    $region33: #{tpu_custom_call.1} parent=1 // pred_fallthru
      _
    %3472 = vsyncpa [#allocation5], 1
    %3473 = vsyncpa [#allocation7], 1

</llo_original>
